<compile_context>
chip_gen: v7x
topology: tpu7x:2x2x1
jax: 0.10.0
libtpu: 0.0.40
codegen_flags: <defaults>
</compile_context>

<pallas_src>
import functools

import jax
import jax.numpy as jnp
from jax import lax
from jax.experimental import pallas as pl
from jax.experimental.pallas import tpu as pltpu


def aetransgat_kernel(
    x_ref, ea_ref, s_ref, tt_ref, p_ref,
    w_lin_ref, w_e1_ref, b_e1_ref, w_e2_ref, b_e2_ref, att_ref,
    w_skip_ref, w_c1_ref, b_c1_ref, w_c2_ref, b_c2_ref,
    node_out_ref, rep_out_ref, logit_out_ref,
    xt_ref, aggr_ref, denom_ref, m_ref,
    *, e_real,
):
    f32 = jnp.float32
    te = ea_ref.shape[0]
    e_blk = pl.program_id(0)

    # ---- init (first edge block): project nodes once, zero the accumulators ----
    @pl.when(e_blk == 0)
    def _init():
        xt_ref[...] = jnp.dot(x_ref[...], w_lin_ref[...],
                              preferred_element_type=f32)
        aggr_ref[...] = jnp.zeros_like(aggr_ref)
        denom_ref[...] = jnp.zeros_like(denom_ref)
        m_ref[...] = jnp.full((1, 1), -1e30, f32)

    # ---- per-edge-block work ---------------------------------------------------
    # edge_encoder: Linear -> ReLU -> Linear                       [tE, HD]
    ea = ea_ref[...]
    e_h = jnp.dot(ea, w_e1_ref[...], preferred_element_type=f32) + b_e1_ref[...]
    e_h = jnp.maximum(e_h, 0.0)
    e_trans = jnp.dot(e_h, w_e2_ref[...], preferred_element_type=f32) + b_e2_ref[...]

    # message(): x_j = x_trans[src] + edge_attr_trans              [tE, HD]
    s_blk = s_ref[...].astype(f32)                 # bf16 one-hot -> f32 (exact 0/1)
    x_j = jnp.dot(s_blk, xt_ref[...], preferred_element_type=f32) + e_trans

    # alpha = leaky_relu((x_j * att).sum(-1), 0.2)                 [tE, 1]
    # TODO(synk): for very large E, fold `att` in as an extra matmul column of
    # w_lin / w_e2 to drop this VPU multiply + XLU cross-lane reduce.
    alpha = jnp.sum(x_j * att_ref[...], axis=-1, keepdims=True)
    alpha = jnp.where(alpha >= 0.0, alpha, 0.2 * alpha)

    # mask padded edges (their S row / Tt column are all-zero anyway).
    eid = lax.broadcasted_iota(jnp.int32, (te, 1), 0) + e_blk * te
    alpha = jnp.where(eid < e_real, alpha, jnp.float32(-1e30))

    # Online (global-max) softmax accumulation, scattered per target node.
    m_prev = m_ref[...]                                              # [1, 1]
    m_new = jnp.maximum(m_prev, jnp.max(alpha, axis=0, keepdims=True))
    rescale = jnp.exp(m_prev - m_new)                                # [1, 1]
    p = jnp.exp(alpha - m_new)                                       # [tE, 1]
    tt_blk = tt_ref[...].astype(f32)                                 # [N, tE]
    denom_ref[...] = rescale * denom_ref[...] + jnp.dot(
        tt_blk, p, preferred_element_type=f32)                       # [N, 1]
    aggr_ref[...] = rescale * aggr_ref[...] + jnp.dot(
        tt_blk, x_j * p, preferred_element_type=f32)                 # [N, HD]
    m_ref[...] = m_new
    # TODO(synk): F.dropout(p=0.1) on attention weights omitted (eval-mode semantics).

    # ---- finalize (last edge block): normalise, skip, pool, classify -----------
    @pl.when(e_blk == pl.num_programs(0) - 1)
    def _finalize():
        inv = pl.reciprocal(denom_ref[...] + 1e-16, approx=True)     # EUP slot
        skip = jnp.dot(x_ref[...], w_skip_ref[...], preferred_element_type=f32)
        node = aggr_ref[...] * inv + skip                            # [N, HD]
        node_out_ref[...] = node

        rep = jnp.dot(p_ref[...], node, preferred_element_type=f32)  # [G, HD]
        rep_out_ref[...] = rep

        h = jnp.dot(rep, w_c1_ref[...], preferred_element_type=f32) + b_c1_ref[...]
        h = jnp.maximum(h, 0.0)
        logit_out_ref[...] = (
            jnp.dot(h, w_c2_ref[...], preferred_element_type=f32) + b_c2_ref[...])


def aetransgat_forward(x, edge_index, edge_attr, batch, params, num_graphs,
                       *, edge_block=128):
    """Host prep (self loops, one-hot gather/scatter matrices, edge padding)
    followed by a single edge-tiled Pallas call."""
    n, fin = x.shape
    fe = edge_attr.shape[1]

    # remove_self_loops + add_self_loops(fill_value=0.0)   (concrete, host side)
    non_self = edge_index[0] != edge_index[1]
    src = edge_index[0][non_self]
    dst = edge_index[1][non_self]
    ea = edge_attr[non_self]
    loop_idx = jnp.arange(n, dtype=edge_index.dtype)
    src = jnp.concatenate([src, loop_idx])
    dst = jnp.concatenate([dst, loop_idx])
    ea = jnp.concatenate([ea, jnp.zeros((n, fe), edge_attr.dtype)])
    e_real = int(src.shape[0])

    # pad edge count to a multiple of the tile; padded edges use index -1 so their
    # one-hot rows/cols are zero, and the kernel masks their scores to -1e30.
    e_pad = -e_real % edge_block
    if e_pad:
        src = jnp.concatenate([src, jnp.full((e_pad,), -1, src.dtype)])
        dst = jnp.concatenate([dst, jnp.full((e_pad,), -1, dst.dtype)])
        ea = jnp.concatenate([ea, jnp.zeros((e_pad, fe), ea.dtype)])
    e_tot = e_real + e_pad
    n_blocks = e_tot // edge_block

    # bf16 one-hots (0/1 exact) -> half the HBM traffic of the dominant operands.
    # TODO(synk): for production-size graphs replace the dense S gather with
    # scalar-prefetch index gathering (PrefetchScalarGridSpec + per-edge src ids).
    s_mat = jax.nn.one_hot(src, n, dtype=jnp.bfloat16)         # [Ep, N]
    tt_mat = jax.nn.one_hot(dst, n, dtype=jnp.bfloat16).T      # [N, Ep]
    b_mat = jax.nn.one_hot(batch, num_graphs, dtype=jnp.float32)
    counts = jnp.maximum(b_mat.sum(axis=0), 1.0)
    p_mat = (b_mat / counts[None, :]).T                        # [G, N]  (keeps 1/count in f32)

    hd = params["w_lin"].shape[1]
    c = params["w_c2"].shape[1]
    g = num_graphs

    const = lambda e: (0, 0)
    in_specs = [
        pl.BlockSpec((n, fin), const),                          # x
        pl.BlockSpec((edge_block, fe), lambda e: (e, 0)),       # ea     (streamed)
        pl.BlockSpec((edge_block, n), lambda e: (e, 0)),        # S      (streamed)
        pl.BlockSpec((n, edge_block), lambda e: (0, e)),        # Tt     (streamed)
        pl.BlockSpec((g, n), const),                            # P
        pl.BlockSpec((fin, hd), const),                         # w_lin
        pl.BlockSpec((fe, hd), const),                          # w_e1
        pl.BlockSpec((1, hd), const),                           # b_e1
        pl.BlockSpec((hd, hd), const),                          # w_e2
        pl.BlockSpec((1, hd), const),                           # b_e2
        pl.BlockSpec((1, hd), const),                           # att
        pl.BlockSpec((fin, hd), const),                         # w_skip
        pl.BlockSpec((hd, hd), const),                          # w_c1
        pl.BlockSpec((1, hd), const),                           # b_c1
        pl.BlockSpec((hd, c), const),                           # w_c2
        pl.BlockSpec((1, c), const),                            # b_c2
    ]
    out_specs = (
        pl.BlockSpec((n, hd), const),                           # node embeddings
        pl.BlockSpec((g, hd), const),                           # graph reps
        pl.BlockSpec((g, c), const),                            # logits
    )
    grid_spec = pltpu.PrefetchScalarGridSpec(
        num_scalar_prefetch=0,
        grid=(n_blocks,),                                       # edge-block reduction axis
        in_specs=in_specs,
        out_specs=out_specs,
        scratch_shapes=[
            pltpu.VMEM((n, hd), jnp.float32),   # x_trans (computed once, reused per block)
            pltpu.VMEM((n, hd), jnp.float32),   # unnormalised per-node aggregation
            pltpu.VMEM((n, 1), jnp.float32),    # per-node softmax denominator
            pltpu.VMEM((1, 1), jnp.float32),    # running global max
        ],
    )

    flops = 2 * (
        2 * n * fin * hd                        # lin + skip
        + e_tot * (fe + hd) * hd                # edge encoder
        + e_tot * n * hd                        # gather  S @ x_trans
        + n * e_tot * (hd + 1)                  # scatter aggr + denom
        + g * n * hd + g * hd * hd + g * hd * c)
    bytes_accessed = int(
        x.size * 4 + ea.size * 4 + s_mat.size * 2 + tt_mat.size * 2 + p_mat.size * 4
        + sum(int(v.size) * 4 for v in params.values())
        + (n * hd + g * hd + g * c) * 4)
    cost = pl.CostEstimate(flops=int(flops),
                           transcendentals=int(2 * e_tot + n),
                           bytes_accessed=bytes_accessed)

    kernel = functools.partial(aetransgat_kernel, e_real=e_real)
    # TODO(synk): for v7x megacore, add a leading "parallel" grid axis over node-row
    # blocks and split the pooling/classifier epilogue into its own tiny kernel.
    return pl.pallas_call(
        kernel,
        grid_spec=grid_spec,
        out_shape=(
            jax.ShapeDtypeStruct((n, hd), jnp.float32),
            jax.ShapeDtypeStruct((g, hd), jnp.float32),
            jax.ShapeDtypeStruct((g, c), jnp.float32),
        ),
        compiler_params=pltpu.CompilerParams(
            dimension_semantics=("arbitrary",),
            vmem_limit_bytes=32 * 1024 * 1024,
        ),
        cost_estimate=cost,
    )(x, ea, s_mat, tt_mat, p_mat,
      params["w_lin"], params["w_e1"], params["b_e1"],
      params["w_e2"], params["b_e2"], params["att"],
      params["w_skip"], params["w_c1"], params["b_c1"],
      params["w_c2"], params["b_c2"])


def reference_forward(x, edge_index, edge_attr, batch, params, num_graphs):
    """Pure-JAX reference for correctness checking."""
    n = x.shape[0]
    non_self = edge_index[0] != edge_index[1]
    loop_idx = jnp.arange(n, dtype=edge_index.dtype)
    src = jnp.concatenate([edge_index[0][non_self], loop_idx])
    dst = jnp.concatenate([edge_index[1][non_self], loop_idx])
    ea = jnp.concatenate(
        [edge_attr[non_self], jnp.zeros((n, edge_attr.shape[1]), edge_attr.dtype)])
    x_trans = x @ params["w_lin"]
    e_h = jnp.maximum(ea @ params["w_e1"] + params["b_e1"], 0.0)
    e_trans = e_h @ params["w_e2"] + params["b_e2"]
    x_j = x_trans[src] + e_trans
    alpha = jnp.sum(x_j * params["att"], axis=-1, keepdims=True)
    alpha = jnp.where(alpha >= 0.0, alpha, 0.2 * alpha)
    alpha = alpha - jnp.max(alpha, axis=0, keepdims=True)
    exp_a = jnp.exp(alpha)
    denom_node = jax.ops.segment_sum(exp_a, dst, num_segments=n)
    attn = exp_a / (denom_node[dst] + 1e-16)
    aggr = jax.ops.segment_sum(x_j * attn, dst, num_segments=n)
    node = aggr + x @ params["w_skip"]
    b_mat = jax.nn.one_hot(batch, num_graphs, dtype=jnp.float32)
    rep = (b_mat.T @ node) / jnp.maximum(b_mat.sum(axis=0), 1.0)[:, None]
    h = jnp.maximum(rep @ params["w_c1"] + params["b_c1"], 0.0)
    logits = h @ params["w_c2"] + params["b_c2"]
    return node, rep, logits


def make_params(key, fin, fe, hidden, out_channels, heads=1):
    hd = heads * hidden  # heads = 1 -> out_dim == hidden_channels
    ks = jax.random.split(key, 8)

    def xavier(k, shape):
        fan_in, fan_out = shape[0], shape[1]
        lim = (6.0 / (fan_in + fan_out)) ** 0.5
        return jax.random.uniform(k, shape, jnp.float32, -lim, lim)

    return {
        "w_lin": xavier(ks[0], (fin, hd)),
        "w_e1": xavier(ks[1], (fe, hd)),
        "b_e1": jnp.zeros((1, hd), jnp.float32),
        "w_e2": xavier(ks[2], (hd, hd)),
        "b_e2": jnp.zeros((1, hd), jnp.float32),
        "att": jax.random.normal(ks[3], (1, hd), jnp.float32) * (2.0 / (1 + hd)) ** 0.5,
        "w_skip": xavier(ks[4], (fin, hd)),
        "w_c1": xavier(ks[5], (hd, hidden)),
        "b_c1": jnp.zeros((1, hidden), jnp.float32),
        "w_c2": xavier(ks[6], (hidden, out_channels)),
        "b_c2": jnp.zeros((1, out_channels), jnp.float32),
    }


if __name__ == "__main__":
    key = jax.random.PRNGKey(0)
    k_x, k_e, k_s, k_d, k_g, k_p = jax.random.split(key, 6)

    # hidden_channels padded to a lane-dense 128 (perf review: avoid HD=32).
    N, FIN, FE, HIDDEN, OUT_C, G = 64, 16, 8, 128, 4, 4
    NPG = N // G
    E_RAW = 256

    x = jax.random.normal(k_x, (N, FIN), jnp.float32)
    batch = jnp.repeat(jnp.arange(G, dtype=jnp.int32), NPG)

    # random intra-graph directed edges (random self loops occur and get stripped)
    gid = jax.random.randint(k_g, (E_RAW,), 0, G, dtype=jnp.int32)
    src = gid * NPG + jax.random.randint(k_s, (E_RAW,), 0, NPG, dtype=jnp.int32)
    dst = gid * NPG + jax.random.randint(k_d, (E_RAW,), 0, NPG, dtype=jnp.int32)
    edge_index = jnp.stack([src, dst])
    edge_attr = jax.random.normal(k_e, (E_RAW, FE), jnp.float32)

    params = make_params(k_p, FIN, FE, HIDDEN, OUT_C)

    node_out, graph_reps, logits = aetransgat_forward(
        x, edge_index, edge_attr, batch, params, G)
    jax.block_until_ready((node_out, graph_reps, logits))

    ref_node, ref_rep, ref_logits = reference_forward(
        x, edge_index, edge_attr, batch, params, G)
    # Tolerance loosened vs f32-exact: the post-scatter normalisation uses the
    # approximate EUP reciprocal (~1e-4..1e-3 relative).
    assert jnp.allclose(node_out, ref_node, atol=1e-2, rtol=1e-2), "node mismatch"
    assert jnp.allclose(graph_reps, ref_rep, atol=1e-2, rtol=1e-2), "rep mismatch"
    assert jnp.allclose(logits, ref_logits, atol=1e-2, rtol=1e-2), "logit mismatch"

    print("KERNEL_OK")
</pallas_src>

<mosaic_0001>
module attributes {stable_mosaic.version = 11 : i64} {
  func.func @aetransgat_kernel(%arg0: i32, %arg1: memref<64x16xf32, #tpu.memory_space<vmem>>, %arg2: memref<128x8xf32, #tpu.memory_space<vmem>>, %arg3: memref<128x64xbf16, #tpu.memory_space<vmem>>, %arg4: memref<64x128xbf16, #tpu.memory_space<vmem>>, %arg5: memref<4x64xf32, #tpu.memory_space<vmem>>, %arg6: memref<16x128xf32, #tpu.memory_space<vmem>>, %arg7: memref<8x128xf32, #tpu.memory_space<vmem>>, %arg8: memref<1x128xf32, #tpu.memory_space<vmem>>, %arg9: memref<128x128xf32, #tpu.memory_space<vmem>>, %arg10: memref<1x128xf32, #tpu.memory_space<vmem>>, %arg11: memref<1x128xf32, #tpu.memory_space<vmem>>, %arg12: memref<16x128xf32, #tpu.memory_space<vmem>>, %arg13: memref<128x128xf32, #tpu.memory_space<vmem>>, %arg14: memref<1x128xf32, #tpu.memory_space<vmem>>, %arg15: memref<128x4xf32, #tpu.memory_space<vmem>>, %arg16: memref<1x4xf32, #tpu.memory_space<vmem>>, %arg17: memref<64x128xf32, #tpu.memory_space<vmem>>, %arg18: memref<4x128xf32, #tpu.memory_space<vmem>>, %arg19: memref<4x4xf32, #tpu.memory_space<vmem>>, %arg20: memref<64x128xf32, #tpu.memory_space<vmem>>, %arg21: memref<64x128xf32, #tpu.memory_space<vmem>>, %arg22: memref<64x1xf32, #tpu.memory_space<vmem>>, %arg23: memref<1x1xf32, #tpu.memory_space<vmem>>) attributes {dimension_semantics = [#tpu.dimension_semantics<arbitrary>], iteration_bounds = array<i64: 3>, scalar_prefetch = 0 : i64, scratch_operands = 4 : i64, tpu.core_type = #tpu.core_type<tc>, window_params = [{pipeline_mode = #tpu.pipeline_mode<synchronous>, transform_indices = @transform_0, window_bounds = array<i64: 64, 16>}, {transform_indices = @transform_1, window_bounds = array<i64: 128, 8>}, {transform_indices = @transform_2, window_bounds = array<i64: 128, 64>}, {transform_indices = @transform_3, window_bounds = array<i64: 64, 128>}, {pipeline_mode = #tpu.pipeline_mode<synchronous>, transform_indices = @transform_4, window_bounds = array<i64: 4, 64>}, {pipeline_mode = #tpu.pipeline_mode<synchronous>, transform_indices = @transform_5, window_bounds = array<i64: 16, 128>}, {pipeline_mode = #tpu.pipeline_mode<synchronous>, transform_indices = @transform_6, window_bounds = array<i64: 8, 128>}, {pipeline_mode = #tpu.pipeline_mode<synchronous>, transform_indices = @transform_7, window_bounds = array<i64: 1, 128>}, {pipeline_mode = #tpu.pipeline_mode<synchronous>, transform_indices = @transform_8, window_bounds = array<i64: 128, 128>}, {pipeline_mode = #tpu.pipeline_mode<synchronous>, transform_indices = @transform_9, window_bounds = array<i64: 1, 128>}, {pipeline_mode = #tpu.pipeline_mode<synchronous>, transform_indices = @transform_10, window_bounds = array<i64: 1, 128>}, {pipeline_mode = #tpu.pipeline_mode<synchronous>, transform_indices = @transform_11, window_bounds = array<i64: 16, 128>}, {pipeline_mode = #tpu.pipeline_mode<synchronous>, transform_indices = @transform_12, window_bounds = array<i64: 128, 128>}, {pipeline_mode = #tpu.pipeline_mode<synchronous>, transform_indices = @transform_13, window_bounds = array<i64: 1, 128>}, {pipeline_mode = #tpu.pipeline_mode<synchronous>, transform_indices = @transform_14, window_bounds = array<i64: 128, 4>}, {pipeline_mode = #tpu.pipeline_mode<synchronous>, transform_indices = @transform_15, window_bounds = array<i64: 1, 4>}, {pipeline_mode = #tpu.pipeline_mode<synchronous>, transform_indices = @transform_16, window_bounds = array<i64: 64, 128>}, {pipeline_mode = #tpu.pipeline_mode<synchronous>, transform_indices = @transform_17, window_bounds = array<i64: 4, 128>}, {pipeline_mode = #tpu.pipeline_mode<synchronous>, transform_indices = @transform_18, window_bounds = array<i64: 4, 4>}]} {
    %c0_i32 = arith.constant 0 : i32
    %0 = arith.cmpi eq, %arg0, %c0_i32 : i32
    %1 = arith.extui %0 : i1 to i32
    %c0_i32_0 = arith.constant 0 : i32
    %2 = arith.cmpi ne, %1, %c0_i32_0 : i32
    scf.if %2 {
      %c0_41 = arith.constant 0 : index
      %c0_42 = arith.constant 0 : index
      %68 = vector.load %arg1[%c0_41, %c0_42] : memref<64x16xf32, #tpu.memory_space<vmem>>, vector<64x16xf32>
      %c0_43 = arith.constant 0 : index
      %c0_44 = arith.constant 0 : index
      %69 = vector.load %arg6[%c0_43, %c0_44] : memref<16x128xf32, #tpu.memory_space<vmem>>, vector<16x128xf32>
      %cst_45 = arith.constant dense<0.000000e+00> : vector<64x128xf32>
      %70 = tpu.matmul %68, %69, %cst_45 {dimension_numbers = #tpu.dot_dimension_numbers<[1], [0], [0], [1], [0, 0, 1, 1], [], []>} : vector<64x16xf32>, vector<16x128xf32>, vector<64x128xf32> -> vector<64x128xf32>
      %c0_46 = arith.constant 0 : index
      %c0_47 = arith.constant 0 : index
      %71 = vector.load %arg20[%c0_46, %c0_47] : memref<64x128xf32, #tpu.memory_space<vmem>>, vector<64x128xf32>
      tpu.vector_store %arg20[%c0_46, %c0_47], %70 {strides = array<i32>} : memref<64x128xf32, #tpu.memory_space<vmem>>, vector<64x128xf32>,
      %cst_48 = arith.constant 0.000000e+00 : f32
      %72 = vector.broadcast %cst_48 : f32 to vector<64x128xf32>
      %c0_49 = arith.constant 0 : index
      %c0_50 = arith.constant 0 : index
      %73 = vector.load %arg21[%c0_49, %c0_50] : memref<64x128xf32, #tpu.memory_space<vmem>>, vector<64x128xf32>
      tpu.vector_store %arg21[%c0_49, %c0_50], %72 {strides = array<i32>} : memref<64x128xf32, #tpu.memory_space<vmem>>, vector<64x128xf32>,
      %cst_51 = arith.constant 0.000000e+00 : f32
      %74 = vector.broadcast %cst_51 : f32 to vector<64x1xf32>
      %c0_52 = arith.constant 0 : index
      %c0_53 = arith.constant 0 : index
      %75 = vector.load %arg22[%c0_52, %c0_53] : memref<64x1xf32, #tpu.memory_space<vmem>>, vector<64x1xf32>
      tpu.vector_store %arg22[%c0_52, %c0_53], %74 {strides = array<i32>} : memref<64x1xf32, #tpu.memory_space<vmem>>, vector<64x1xf32>,
      %cst_54 = arith.constant -1.000000e+30 : f32
      %76 = vector.broadcast %cst_54 : f32 to vector<1x1xf32>
      %c0_55 = arith.constant 0 : index
      %c0_56 = arith.constant 0 : index
      %77 = vector.load %arg23[%c0_55, %c0_56] : memref<1x1xf32, #tpu.memory_space<vmem>>, vector<1x1xf32>
      tpu.vector_store %arg23[%c0_55, %c0_56], %76 {strides = array<i32>} : memref<1x1xf32, #tpu.memory_space<vmem>>, vector<1x1xf32>,
    } else {
    }
    %c0 = arith.constant 0 : index
    %c0_1 = arith.constant 0 : index
    %3 = vector.load %arg2[%c0, %c0_1] : memref<128x8xf32, #tpu.memory_space<vmem>>, vector<128x8xf32>
    %c0_2 = arith.constant 0 : index
    %c0_3 = arith.constant 0 : index
    %4 = vector.load %arg7[%c0_2, %c0_3] : memref<8x128xf32, #tpu.memory_space<vmem>>, vector<8x128xf32>
    %cst = arith.constant dense<0.000000e+00> : vector<128x128xf32>
    %5 = tpu.matmul %3, %4, %cst {dimension_numbers = #tpu.dot_dimension_numbers<[1], [0], [0], [1], [0, 0, 1, 1], [], []>} : vector<128x8xf32>, vector<8x128xf32>, vector<128x128xf32> -> vector<128x128xf32>
    %c0_4 = arith.constant 0 : index
    %c0_5 = arith.constant 0 : index
    %6 = vector.load %arg8[%c0_4, %c0_5] : memref<1x128xf32, #tpu.memory_space<vmem>>, vector<1x128xf32>
    %7 = vector.broadcast %6 : vector<1x128xf32> to vector<128x128xf32>
    %8 = arith.addf %5, %7 : vector<128x128xf32>
    %cst_6 = arith.constant 0.000000e+00 : f32
    %9 = vector.broadcast %cst_6 : f32 to vector<128x128xf32>
    %10 = arith.maximumf %8, %9 : vector<128x128xf32>
    %c0_7 = arith.constant 0 : index
    %c0_8 = arith.constant 0 : index
    %11 = vector.load %arg9[%c0_7, %c0_8] : memref<128x128xf32, #tpu.memory_space<vmem>>, vector<128x128xf32>
    %cst_9 = arith.constant dense<0.000000e+00> : vector<128x128xf32>
    %12 = tpu.matmul %10, %11, %cst_9 {dimension_numbers = #tpu.dot_dimension_numbers<[1], [0], [0], [1], [0, 0, 1, 1], [], []>} : vector<128x128xf32>, vector<128x128xf32>, vector<128x128xf32> -> vector<128x128xf32>
    %c0_10 = arith.constant 0 : index
    %c0_11 = arith.constant 0 : index
    %13 = vector.load %arg10[%c0_10, %c0_11] : memref<1x128xf32, #tpu.memory_space<vmem>>, vector<1x128xf32>
    %14 = vector.broadcast %13 : vector<1x128xf32> to vector<128x128xf32>
    %15 = arith.addf %12, %14 : vector<128x128xf32>
    %c0_12 = arith.constant 0 : index
    %c0_13 = arith.constant 0 : index
    %16 = vector.load %arg3[%c0_12, %c0_13] : memref<128x64xbf16, #tpu.memory_space<vmem>>, vector<128x64xbf16>
    %17 = arith.extf %16 : vector<128x64xbf16> to vector<128x64xf32>
    %c0_14 = arith.constant 0 : index
    %c0_15 = arith.constant 0 : index
    %18 = vector.load %arg20[%c0_14, %c0_15] : memref<64x128xf32, #tpu.memory_space<vmem>>, vector<64x128xf32>
    %cst_16 = arith.constant dense<0.000000e+00> : vector<128x128xf32>
    %19 = tpu.matmul %17, %18, %cst_16 {dimension_numbers = #tpu.dot_dimension_numbers<[1], [0], [0], [1], [0, 0, 1, 1], [], []>} : vector<128x64xf32>, vector<64x128xf32>, vector<128x128xf32> -> vector<128x128xf32>
    %20 = arith.addf %19, %15 : vector<128x128xf32>
    %c0_17 = arith.constant 0 : index
    %c0_18 = arith.constant 0 : index
    %21 = vector.load %arg11[%c0_17, %c0_18] : memref<1x128xf32, #tpu.memory_space<vmem>>, vector<1x128xf32>
    %22 = vector.broadcast %21 : vector<1x128xf32> to vector<128x128xf32>
    %23 = arith.mulf %20, %22 : vector<128x128xf32>
    %cst_19 = arith.constant dense<0.000000e+00> : vector<128xf32>
    %24 = vector.multi_reduction <add>, %23, %cst_19 [1] : vector<128x128xf32> to vector<128xf32>
    %25 = vector.shape_cast %24 : vector<128xf32> to vector<128x1xf32>
    %cst_20 = arith.constant 0.000000e+00 : f32
    %26 = vector.broadcast %cst_20 : f32 to vector<128x1xf32>
    %27 = arith.cmpf oge, %25, %26 : vector<128x1xf32>
    %cst_21 = arith.constant 2.000000e-01 : f32
    %28 = vector.broadcast %cst_21 : f32 to vector<128x1xf32>
    %29 = arith.mulf %28, %25 : vector<128x1xf32>
    %30 = arith.select %27, %25, %29 : vector<128x1xi1>, vector<128x1xf32>
    %31 = tpu.iota {dimensions = array<i32: 0>} : vector<128x1xi32>
    %c128_i32 = arith.constant 128 : i32
    %32 = arith.muli %arg0, %c128_i32 : i32
    %33 = vector.broadcast %32 : i32 to vector<128x1xi32>
    %34 = arith.addi %31, %33 : vector<128x1xi32>
    %c303_i32 = arith.constant 303 : i32
    %35 = vector.broadcast %c303_i32 : i32 to vector<128x1xi32>
    %36 = arith.cmpi slt, %34, %35 : vector<128x1xi32>
    %cst_22 = arith.constant -1.000000e+30 : f32
    %37 = vector.broadcast %cst_22 : f32 to vector<128x1xf32>
    %38 = arith.select %36, %30, %37 : vector<128x1xi1>, vector<128x1xf32>
    %c0_23 = arith.constant 0 : index
    %c0_24 = arith.constant 0 : index
    %39 = vector.load %arg23[%c0_23, %c0_24] : memref<1x1xf32, #tpu.memory_space<vmem>>, vector<1x1xf32>
    %cst_25 = arith.constant dense<0xFF800000> : vector<1xf32>
    %40 = vector.multi_reduction <maximumf>, %38, %cst_25 [0] : vector<128x1xf32> to vector<1xf32>
    %41 = vector.shape_cast %40 : vector<1xf32> to vector<1x1xf32>
    %42 = arith.maximumf %39, %41 : vector<1x1xf32>
    %43 = arith.subf %39, %42 : vector<1x1xf32>
    %44 = math.exp %43 : vector<1x1xf32>
    %45 = vector.broadcast %42 : vector<1x1xf32> to vector<128x1xf32>
    %46 = arith.subf %38, %45 : vector<128x1xf32>
    %47 = math.exp %46 : vector<128x1xf32>
    %c0_26 = arith.constant 0 : index
    %c0_27 = arith.constant 0 : index
    %48 = vector.load %arg4[%c0_26, %c0_27] : memref<64x128xbf16, #tpu.memory_space<vmem>>, vector<64x128xbf16>
    %49 = arith.extf %48 : vector<64x128xbf16> to vector<64x128xf32>
    %c0_28 = arith.constant 0 : index
    %c0_29 = arith.constant 0 : index
    %50 = vector.load %arg22[%c0_28, %c0_29] : memref<64x1xf32, #tpu.memory_space<vmem>>, vector<64x1xf32>
    %51 = vector.broadcast %44 : vector<1x1xf32> to vector<64x1xf32>
    %52 = arith.mulf %51, %50 : vector<64x1xf32>
    %cst_30 = arith.constant dense<0.000000e+00> : vector<64x1xf32>
    %53 = tpu.matmul %49, %47, %cst_30 {dimension_numbers = #tpu.dot_dimension_numbers<[1], [0], [0], [1], [0, 0, 1, 1], [], []>} : vector<64x128xf32>, vector<128x1xf32>, vector<64x1xf32> -> vector<64x1xf32>
    %54 = arith.addf %52, %53 : vector<64x1xf32>
    %c0_31 = arith.constant 0 : index
    %c0_32 = arith.constant 0 : index
    %55 = vector.load %arg22[%c0_31, %c0_32] : memref<64x1xf32, #tpu.memory_space<vmem>>, vector<64x1xf32>
    tpu.vector_store %arg22[%c0_31, %c0_32], %54 {strides = array<i32>} : memref<64x1xf32, #tpu.memory_space<vmem>>, vector<64x1xf32>,
    %c0_33 = arith.constant 0 : index
    %c0_34 = arith.constant 0 : index
    %56 = vector.load %arg21[%c0_33, %c0_34] : memref<64x128xf32, #tpu.memory_space<vmem>>, vector<64x128xf32>
    %57 = vector.broadcast %44 : vector<1x1xf32> to vector<64x128xf32>
    %58 = arith.mulf %57, %56 : vector<64x128xf32>
    %59 = vector.broadcast %47 : vector<128x1xf32> to vector<128x128xf32>
    %60 = arith.mulf %20, %59 : vector<128x128xf32>
    %cst_35 = arith.constant dense<0.000000e+00> : vector<64x128xf32>
    %61 = tpu.matmul %49, %60, %cst_35 {dimension_numbers = #tpu.dot_dimension_numbers<[1], [0], [0], [1], [0, 0, 1, 1], [], []>} : vector<64x128xf32>, vector<128x128xf32>, vector<64x128xf32> -> vector<64x128xf32>
    %62 = arith.addf %58, %61 : vector<64x128xf32>
    %c0_36 = arith.constant 0 : index
    %c0_37 = arith.constant 0 : index
    %63 = vector.load %arg21[%c0_36, %c0_37] : memref<64x128xf32, #tpu.memory_space<vmem>>, vector<64x128xf32>
    tpu.vector_store %arg21[%c0_36, %c0_37], %62 {strides = array<i32>} : memref<64x128xf32, #tpu.memory_space<vmem>>, vector<64x128xf32>,
    %c0_38 = arith.constant 0 : index
    %c0_39 = arith.constant 0 : index
    %64 = vector.load %arg23[%c0_38, %c0_39] : memref<1x1xf32, #tpu.memory_space<vmem>>, vector<1x1xf32>
    tpu.vector_store %arg23[%c0_38, %c0_39], %42 {strides = array<i32>} : memref<1x1xf32, #tpu.memory_space<vmem>>, vector<1x1xf32>,
    %c2_i32 = arith.constant 2 : i32
    %65 = arith.cmpi eq, %arg0, %c2_i32 : i32
    %66 = arith.extui %65 : i1 to i32
    %c0_i32_40 = arith.constant 0 : i32
    %67 = arith.cmpi ne, %66, %c0_i32_40 : i32
    scf.if %67 {
      %c0_41 = arith.constant 0 : index
      %c0_42 = arith.constant 0 : index
      %68 = vector.load %arg22[%c0_41, %c0_42] : memref<64x1xf32, #tpu.memory_space<vmem>>, vector<64x1xf32>
      %cst_43 = arith.constant 1.000000e-16 : f32
      %69 = vector.broadcast %cst_43 : f32 to vector<64x1xf32>
      %70 = arith.addf %68, %69 : vector<64x1xf32>
      %71 = tpu.reciprocal %70 {approx = true} : vector<64x1xf32> -> vector<64x1xf32>
      %c0_44 = arith.constant 0 : index
      %c0_45 = arith.constant 0 : index
      %72 = vector.load %arg1[%c0_44, %c0_45] : memref<64x16xf32, #tpu.memory_space<vmem>>, vector<64x16xf32>
      %c0_46 = arith.constant 0 : index
      %c0_47 = arith.constant 0 : index
      %73 = vector.load %arg12[%c0_46, %c0_47] : memref<16x128xf32, #tpu.memory_space<vmem>>, vector<16x128xf32>
      %cst_48 = arith.constant dense<0.000000e+00> : vector<64x128xf32>
      %74 = tpu.matmul %72, %73, %cst_48 {dimension_numbers = #tpu.dot_dimension_numbers<[1], [0], [0], [1], [0, 0, 1, 1], [], []>} : vector<64x16xf32>, vector<16x128xf32>, vector<64x128xf32> -> vector<64x128xf32>
      %c0_49 = arith.constant 0 : index
      %c0_50 = arith.constant 0 : index
      %75 = vector.load %arg21[%c0_49, %c0_50] : memref<64x128xf32, #tpu.memory_space<vmem>>, vector<64x128xf32>
      %76 = vector.broadcast %71 : vector<64x1xf32> to vector<64x128xf32>
      %77 = arith.mulf %75, %76 : vector<64x128xf32>
      %78 = arith.addf %77, %74 : vector<64x128xf32>
      %c0_51 = arith.constant 0 : index
      %c0_52 = arith.constant 0 : index
      %79 = vector.load %arg17[%c0_51, %c0_52] : memref<64x128xf32, #tpu.memory_space<vmem>>, vector<64x128xf32>
      tpu.vector_store %arg17[%c0_51, %c0_52], %78 {strides = array<i32>} : memref<64x128xf32, #tpu.memory_space<vmem>>, vector<64x128xf32>,
      %c0_53 = arith.constant 0 : index
      %c0_54 = arith.constant 0 : index
      %80 = vector.load %arg5[%c0_53, %c0_54] : memref<4x64xf32, #tpu.memory_space<vmem>>, vector<4x64xf32>
      %cst_55 = arith.constant dense<0.000000e+00> : vector<4x128xf32>
      %81 = tpu.matmul %80, %78, %cst_55 {dimension_numbers = #tpu.dot_dimension_numbers<[1], [0], [0], [1], [0, 0, 1, 1], [], []>} : vector<4x64xf32>, vector<64x128xf32>, vector<4x128xf32> -> vector<4x128xf32>
      %c0_56 = arith.constant 0 : index
      %c0_57 = arith.constant 0 : index
      %82 = vector.load %arg18[%c0_56, %c0_57] : memref<4x128xf32, #tpu.memory_space<vmem>>, vector<4x128xf32>
      tpu.vector_store %arg18[%c0_56, %c0_57], %81 {strides = array<i32>} : memref<4x128xf32, #tpu.memory_space<vmem>>, vector<4x128xf32>,
      %c0_58 = arith.constant 0 : index
      %c0_59 = arith.constant 0 : index
      %83 = vector.load %arg13[%c0_58, %c0_59] : memref<128x128xf32, #tpu.memory_space<vmem>>, vector<128x128xf32>
      %cst_60 = arith.constant dense<0.000000e+00> : vector<4x128xf32>
      %84 = tpu.matmul %81, %83, %cst_60 {dimension_numbers = #tpu.dot_dimension_numbers<[1], [0], [0], [1], [0, 0, 1, 1], [], []>} : vector<4x128xf32>, vector<128x128xf32>, vector<4x128xf32> -> vector<4x128xf32>
      %c0_61 = arith.constant 0 : index
      %c0_62 = arith.constant 0 : index
      %85 = vector.load %arg14[%c0_61, %c0_62] : memref<1x128xf32, #tpu.memory_space<vmem>>, vector<1x128xf32>
      %86 = vector.broadcast %85 : vector<1x128xf32> to vector<4x128xf32>
      %87 = arith.addf %84, %86 : vector<4x128xf32>
      %cst_63 = arith.constant 0.000000e+00 : f32
      %88 = vector.broadcast %cst_63 : f32 to vector<4x128xf32>
      %89 = arith.maximumf %87, %88 : vector<4x128xf32>
      %c0_64 = arith.constant 0 : index
      %c0_65 = arith.constant 0 : index
      %90 = vector.load %arg15[%c0_64, %c0_65] : memref<128x4xf32, #tpu.memory_space<vmem>>, vector<128x4xf32>
      %cst_66 = arith.constant dense<0.000000e+00> : vector<4x4xf32>
      %91 = tpu.matmul %89, %90, %cst_66 {dimension_numbers = #tpu.dot_dimension_numbers<[1], [0], [0], [1], [0, 0, 1, 1], [], []>} : vector<4x128xf32>, vector<128x4xf32>, vector<4x4xf32> -> vector<4x4xf32>
      %c0_67 = arith.constant 0 : index
      %c0_68 = arith.constant 0 : index
      %92 = vector.load %arg16[%c0_67, %c0_68] : memref<1x4xf32, #tpu.memory_space<vmem>>, vector<1x4xf32>
      %93 = vector.broadcast %92 : vector<1x4xf32> to vector<4x4xf32>
      %94 = arith.addf %91, %93 : vector<4x4xf32>
      %c0_69 = arith.constant 0 : index
      %c0_70 = arith.constant 0 : index
      %95 = vector.load %arg19[%c0_69, %c0_70] : memref<4x4xf32, #tpu.memory_space<vmem>>, vector<4x4xf32>
      tpu.vector_store %arg19[%c0_69, %c0_70], %94 {strides = array<i32>} : memref<4x4xf32, #tpu.memory_space<vmem>>, vector<4x4xf32>,
    } else {
    }
    return
  }
  func.func @transform_0(%arg0: i32) -> (i32, i32) {
    %c0_i32 = arith.constant 0 : i32
    %c0_i32_0 = arith.constant 0 : i32
    %c0_i32_1 = arith.constant 0 : i32
    return %c0_i32, %c0_i32_0 : i32, i32
  }
  func.func @transform_1(%arg0: i32) -> (i32, i32) {
    %c0_i32 = arith.constant 0 : i32
    %c0_i32_0 = arith.constant 0 : i32
    return %arg0, %c0_i32 : i32, i32
  }
  func.func @transform_2(%arg0: i32) -> (i32, i32) {
    %c0_i32 = arith.constant 0 : i32
    %c0_i32_0 = arith.constant 0 : i32
    return %arg0, %c0_i32 : i32, i32
  }
  func.func @transform_3(%arg0: i32) -> (i32, i32) {
    %c0_i32 = arith.constant 0 : i32
    %c0_i32_0 = arith.constant 0 : i32
    return %c0_i32, %arg0 : i32, i32
  }
  func.func @transform_4(%arg0: i32) -> (i32, i32) {
    %c0_i32 = arith.constant 0 : i32
    %c0_i32_0 = arith.constant 0 : i32
    %c0_i32_1 = arith.constant 0 : i32
    return %c0_i32, %c0_i32_0 : i32, i32
  }
  func.func @transform_5(%arg0: i32) -> (i32, i32) {
    %c0_i32 = arith.constant 0 : i32
    %c0_i32_0 = arith.constant 0 : i32
    %c0_i32_1 = arith.constant 0 : i32
    return %c0_i32, %c0_i32_0 : i32, i32
  }
  func.func @transform_6(%arg0: i32) -> (i32, i32) {
    %c0_i32 = arith.constant 0 : i32
    %c0_i32_0 = arith.constant 0 : i32
    %c0_i32_1 = arith.constant 0 : i32
    return %c0_i32, %c0_i32_0 : i32, i32
  }
  func.func @transform_7(%arg0: i32) -> (i32, i32) {
    %c0_i32 = arith.constant 0 : i32
    %c0_i32_0 = arith.constant 0 : i32
    %c0_i32_1 = arith.constant 0 : i32
    return %c0_i32, %c0_i32_0 : i32, i32
  }
  func.func @transform_8(%arg0: i32) -> (i32, i32) {
    %c0_i32 = arith.constant 0 : i32
    %c0_i32_0 = arith.constant 0 : i32
    %c0_i32_1 = arith.constant 0 : i32
    return %c0_i32, %c0_i32_0 : i32, i32
  }
  func.func @transform_9(%arg0: i32) -> (i32, i32) {
    %c0_i32 = arith.constant 0 : i32
    %c0_i32_0 = arith.constant 0 : i32
    %c0_i32_1 = arith.constant 0 : i32
    return %c0_i32, %c0_i32_0 : i32, i32
  }
  func.func @transform_10(%arg0: i32) -> (i32, i32) {
    %c0_i32 = arith.constant 0 : i32
    %c0_i32_0 = arith.constant 0 : i32
    %c0_i32_1 = arith.constant 0 : i32
    return %c0_i32, %c0_i32_0 : i32, i32
  }
  func.func @transform_11(%arg0: i32) -> (i32, i32) {
    %c0_i32 = arith.constant 0 : i32
    %c0_i32_0 = arith.constant 0 : i32
    %c0_i32_1 = arith.constant 0 : i32
    return %c0_i32, %c0_i32_0 : i32, i32
  }
  func.func @transform_12(%arg0: i32) -> (i32, i32) {
    %c0_i32 = arith.constant 0 : i32
    %c0_i32_0 = arith.constant 0 : i32
    %c0_i32_1 = arith.constant 0 : i32
    return %c0_i32, %c0_i32_0 : i32, i32
  }
  func.func @transform_13(%arg0: i32) -> (i32, i32) {
    %c0_i32 = arith.constant 0 : i32
    %c0_i32_0 = arith.constant 0 : i32
    %c0_i32_1 = arith.constant 0 : i32
    return %c0_i32, %c0_i32_0 : i32, i32
  }
  func.func @transform_14(%arg0: i32) -> (i32, i32) {
    %c0_i32 = arith.constant 0 : i32
    %c0_i32_0 = arith.constant 0 : i32
    %c0_i32_1 = arith.constant 0 : i32
    return %c0_i32, %c0_i32_0 : i32, i32
  }
  func.func @transform_15(%arg0: i32) -> (i32, i32) {
    %c0_i32 = arith.constant 0 : i32
    %c0_i32_0 = arith.constant 0 : i32
    %c0_i32_1 = arith.constant 0 : i32
    return %c0_i32, %c0_i32_0 : i32, i32
  }
  func.func @transform_16(%arg0: i32) -> (i32, i32) {
    %c0_i32 = arith.constant 0 : i32
    %c0_i32_0 = arith.constant 0 : i32
    %c0_i32_1 = arith.constant 0 : i32
    return %c0_i32, %c0_i32_0 : i32, i32
  }
  func.func @transform_17(%arg0: i32) -> (i32, i32) {
    %c0_i32 = arith.constant 0 : i32
    %c0_i32_0 = arith.constant 0 : i32
    %c0_i32_1 = arith.constant 0 : i32
    return %c0_i32, %c0_i32_0 : i32, i32
  }
  func.func @transform_18(%arg0: i32) -> (i32, i32) {
    %c0_i32 = arith.constant 0 : i32
    %c0_i32_0 = arith.constant 0 : i32
    %c0_i32_1 = arith.constant 0 : i32
    return %c0_i32, %c0_i32_0 : i32, i32
  }
}

</mosaic_0001>

<llo_original>
// kernel: tpu_custom_call.1
$region0: #{tpu_custom_call.1}
  #allocation0 [shape = 'u32[]', space=smem, size = 0x4, offset = 0x4, fixed_abs, tag = 'smem constant byte address 0x4 - core index']
  #allocation1 [shape = 'u32[144,128]{1,0:T(1,128)}', space=vmem, size = 0x12000, scoped, tag = 'internal scratch']
  #allocation2 [shape = 'f32[64,128]{1,0:T(8,128)}', space=vmem, size = 0x8000, scoped, tag = 'scratch operand']
  #allocation3 [shape = 'f32[64,128]{1,0:T(8,128)}', space=vmem, size = 0x8000, scoped, tag = 'scratch operand']
  #allocation4 [shape = 'f32[64,1]{1,0:T(8,128)}', space=vmem, size = 0x8000, scoped, tag = 'scratch operand']
  #allocation5 [shape = 'f32[1,1]{1,0:T(1,128)}', space=vmem, size = 0x200, scoped, tag = 'scratch operand']
  %s0 = inlined_call_operand.vmem [shape: f32[64,16], index: 0, kind: input, shape index: {}]
  %s1 = inlined_call_operand.vmem [shape: f32[384,8], index: 1, kind: input, shape index: {}]
  %s2 = inlined_call_operand.vmem [shape: bf16[384,64], index: 2, kind: input, shape index: {}]
  %s3 = inlined_call_operand.vmem [shape: bf16[64,384], index: 3, kind: input, shape index: {}]
  %s4 = inlined_call_operand.vmem [shape: f32[4,64], index: 4, kind: input, shape index: {}]
  %s5 = inlined_call_operand.vmem [shape: f32[16,128], index: 5, kind: input, shape index: {}]
  %s6 = inlined_call_operand.vmem [shape: f32[8,128], index: 6, kind: input, shape index: {}]
  %s7 = inlined_call_operand.vmem [shape: f32[1,128], index: 7, kind: input, shape index: {}]
  %s8 = inlined_call_operand.vmem [shape: f32[128,128], index: 8, kind: input, shape index: {}]
  %s9 = inlined_call_operand.vmem [shape: f32[1,128], index: 9, kind: input, shape index: {}]
  %s10 = inlined_call_operand.vmem [shape: f32[1,128], index: 10, kind: input, shape index: {}]
  %s11 = inlined_call_operand.vmem [shape: f32[16,128], index: 11, kind: input, shape index: {}]
  %s12 = inlined_call_operand.vmem [shape: f32[128,128], index: 12, kind: input, shape index: {}]
  %s13 = inlined_call_operand.vmem [shape: f32[1,128], index: 13, kind: input, shape index: {}]
  %s14 = inlined_call_operand.vmem [shape: f32[128,4], index: 14, kind: input, shape index: {}]
  %s15 = inlined_call_operand.vmem [shape: f32[1,4], index: 15, kind: input, shape index: {}]
  %s16 = inlined_call_operand.hbm [shape: f32[64,128], index: 16, kind: output, shape index: {0}]
  %s17 = inlined_call_operand.hbm [shape: f32[4,128], index: 17, kind: output, shape index: {1}]
  %s18 = inlined_call_operand.hbm [shape: f32[4,4], index: 18, kind: output, shape index: {2}]
  %19 = xla_tuple %s16, %s17, %s18
  %s20 = sld [smem:[#allocation0]]
  $region162: #{tpu_custom_call.1} parent=0
    _
  %s22 = ssub.s32 1, %s20
  %s23 = scalar_select 0, %s22, %s20
  $region1: #{tpu_custom_call.1} parent=0
    #allocation6 [shape = 'u8[32768]{0}', space=vmem, size = 0x8000, scoped, tag = 'input window, operand 3']
    #allocation7 [shape = 'u8[32768]{0}', space=vmem, size = 0x8000, scoped, tag = 'output window, operand 0, single buffered']
    #allocation8 [shape = 's32[2]{0}', space=sflag, size = 0x8, scoped, tag = 'scoped memory for tpu_custom_call.1']
    #allocation9 [shape = 'u8[2048]{0}', space=vmem, size = 0x800, scoped, tag = 'output window, operand 1, single buffered']
    #allocation10 [shape = 's32[1]{0}', space=sflag, size = 0x4, scoped, tag = 'scoped memory for tpu_custom_call.1']
    #allocation11 [shape = 'u8[2048]{0}', space=vmem, size = 0x800, scoped, tag = 'output window, operand 2, single buffered']
    %24 = vsyncpa [#allocation8], 0
    %25 = vsyncpa [#allocation10], 0
    loop: start=0, step=1, limit=5
    $region2: #{tpu_custom_call.1} parent=1 // loop_pre_header
      _
    $region3: #{tpu_custom_call.1} parent=1 // loop_header
      %s27 = sphi 0, %s31
      %p28 = scmp.ge.s32.totalorder %s27, 5
      %s35 = sphi 0, %s35
      %s37 = sphi 0, %s35
      %s38 = sphi 0, %s37
      %s52 = sphi 0, %s38
      %s58 = sphi 0, %s60
      %s61 = sphi 0, %s58
      %s62 = sphi 0, %s61
      %s78 = sphi 0, %s62
      %s84 = sphi 0, %s86
      %s87 = sphi 0, %s84
      %s88 = sphi 0, %s87
      %s104 = sphi 0, %s88
      %s110 = sphi 0, %s112
      %s113 = sphi 0, %s110
      %s114 = sphi 0, %s113
      %s130 = sphi 0, %s114
      %s134 = sphi 0, %s134
      %s136 = sphi 0, %s134
      %s137 = sphi 0, %s136
      %s151 = sphi 0, %s137
      %s155 = sphi 0, %s155
      %s157 = sphi 0, %s155
      %s158 = sphi 0, %s157
      %s172 = sphi 0, %s158
      %s176 = sphi 0, %s176
      %s178 = sphi 0, %s176
      %s179 = sphi 0, %s178
      %s193 = sphi 0, %s179
      %s197 = sphi 0, %s197
      %s199 = sphi 0, %s197
      %s200 = sphi 0, %s199
      %s214 = sphi 0, %s200
      %s218 = sphi 0, %s218
      %s220 = sphi 0, %s218
      %s221 = sphi 0, %s220
      %s235 = sphi 0, %s221
      %s239 = sphi 0, %s239
      %s241 = sphi 0, %s239
      %s242 = sphi 0, %s241
      %s256 = sphi 0, %s242
      %s260 = sphi 0, %s260
      %s262 = sphi 0, %s260
      %s263 = sphi 0, %s262
      %s277 = sphi 0, %s263
      %s281 = sphi 0, %s281
      %s283 = sphi 0, %s281
      %s284 = sphi 0, %s283
      %s298 = sphi 0, %s284
      %s302 = sphi 0, %s302
      %s304 = sphi 0, %s302
      %s305 = sphi 0, %s304
      %s319 = sphi 0, %s305
      %s323 = sphi 0, %s323
      %s325 = sphi 0, %s323
      %s326 = sphi 0, %s325
      %s340 = sphi 0, %s326
      %s344 = sphi 0, %s344
      %s346 = sphi 0, %s344
      %s347 = sphi 0, %s346
      %s361 = sphi 0, %s347
      %s365 = sphi 0, %s365
      %s367 = sphi 0, %s365
      %s368 = sphi 0, %s367
      %s382 = sphi 0, %s368
      %s386 = sphi 0, %s386
      %s388 = sphi 0, %s386
      %s389 = sphi 0, %s388
      %s403 = sphi 0, %s389
      %s407 = sphi 0, %s407
      %s409 = sphi 0, %s407
      %s410 = sphi 0, %s409
      %s424 = sphi 0, %s410
      %s428 = sphi 0, %s428
      %s430 = sphi 0, %s428
      %s431 = sphi 0, %s430
      %s445 = sphi 0, %s431
    $region4: #{tpu_custom_call.1} parent=1 // loop_header_branch
      %30 = sbr.rel (%p28) target = $region8
    $region5: #{tpu_custom_call.1} parent=1 // loop_body
      %s32 = ssub.s32 %s27, 1
      %s33 = ssub.s32 %s27, 2
      %s34 = sadd.s32 %s27, 1
      %s36 = sadd.s32 %s35, 1
      %p39 = scmp.eq.s32.totalorder %s27, 2
      %p40 = scmp.ne.s32.totalorder %s35, %s37
      %p41 = scmp.eq.s32.totalorder %s27, 0
      %p42 = por %p40, %p41
      %p43 = scmp.ne.s32.totalorder %s35, %s37
      %p44 = scmp.eq.s32.totalorder %s32, 2
      %p45 = por %p43, %p44
      %p46 = scmp.ne.s32.totalorder %s37, %s38
      %p47 = scmp.eq.s32.totalorder %s32, 0
      %p48 = por %p46, %p47
      %p49 = scmp.ne.s32.totalorder %s37, %s38
      %p50 = scmp.eq.s32.totalorder %s33, 2
      %p51 = por %p49, %p50
      %p53 = scmp.ne.s32.totalorder %s38, %s52
      %p54 = scmp.eq.s32.totalorder %s33, 0
      %p55 = por %p53, %p54
      %s56 = ssub.s32 %s27, %s34
      %p57 = scmp.eq.s32.totalorder %s56, 0
      %s59 = sadd.s32 %s58, 1
      %s60 = scalar_select %p57, %s58, %s59
      %p63 = pneg %p57
      %p64 = scmp.eq.s32.totalorder %s27, 2
      %p65 = por %p63, %p64
      %p66 = scmp.ne.s32.totalorder %s58, %s61
      %p67 = scmp.eq.s32.totalorder %s27, 0
      %p68 = por %p66, %p67
      %p69 = scmp.ne.s32.totalorder %s58, %s61
      %p70 = scmp.eq.s32.totalorder %s32, 2
      %p71 = por %p69, %p70
      %p72 = scmp.ne.s32.totalorder %s61, %s62
      %p73 = scmp.eq.s32.totalorder %s32, 0
      %p74 = por %p72, %p73
      %p75 = scmp.ne.s32.totalorder %s61, %s62
      %p76 = scmp.eq.s32.totalorder %s33, 2
      %p77 = por %p75, %p76
      %p79 = scmp.ne.s32.totalorder %s62, %s78
      %p80 = scmp.eq.s32.totalorder %s33, 0
      %p81 = por %p79, %p80
      %s82 = ssub.s32 %s27, %s34
      %p83 = scmp.eq.s32.totalorder %s82, 0
      %s85 = sadd.s32 %s84, 1
      %s86 = scalar_select %p83, %s84, %s85
      %p89 = pneg %p83
      %p90 = scmp.eq.s32.totalorder %s27, 2
      %p91 = por %p89, %p90
      %p92 = scmp.ne.s32.totalorder %s84, %s87
      %p93 = scmp.eq.s32.totalorder %s27, 0
      %p94 = por %p92, %p93
      %p95 = scmp.ne.s32.totalorder %s84, %s87
      %p96 = scmp.eq.s32.totalorder %s32, 2
      %p97 = por %p95, %p96
      %p98 = scmp.ne.s32.totalorder %s87, %s88
      %p99 = scmp.eq.s32.totalorder %s32, 0
      %p100 = por %p98, %p99
      %p101 = scmp.ne.s32.totalorder %s87, %s88
      %p102 = scmp.eq.s32.totalorder %s33, 2
      %p103 = por %p101, %p102
      %p105 = scmp.ne.s32.totalorder %s88, %s104
      %p106 = scmp.eq.s32.totalorder %s33, 0
      %p107 = por %p105, %p106
      %s108 = ssub.s32 %s27, %s34
      %p109 = scmp.eq.s32.totalorder %s108, 0
      %s111 = sadd.s32 %s110, 1
      %s112 = scalar_select %p109, %s110, %s111
      %p115 = pneg %p109
      %p116 = scmp.eq.s32.totalorder %s27, 2
      %p117 = por %p115, %p116
      %p118 = scmp.ne.s32.totalorder %s110, %s113
      %p119 = scmp.eq.s32.totalorder %s27, 0
      %p120 = por %p118, %p119
      %p121 = scmp.ne.s32.totalorder %s110, %s113
      %p122 = scmp.eq.s32.totalorder %s32, 2
      %p123 = por %p121, %p122
      %p124 = scmp.ne.s32.totalorder %s113, %s114
      %p125 = scmp.eq.s32.totalorder %s32, 0
      %p126 = por %p124, %p125
      %p127 = scmp.ne.s32.totalorder %s113, %s114
      %p128 = scmp.eq.s32.totalorder %s33, 2
      %p129 = por %p127, %p128
      %p131 = scmp.ne.s32.totalorder %s114, %s130
      %p132 = scmp.eq.s32.totalorder %s33, 0
      %p133 = por %p131, %p132
      %s135 = sadd.s32 %s134, 1
      %p138 = scmp.eq.s32.totalorder %s27, 2
      %p139 = scmp.ne.s32.totalorder %s134, %s136
      %p140 = scmp.eq.s32.totalorder %s27, 0
      %p141 = por %p139, %p140
      %p142 = scmp.ne.s32.totalorder %s134, %s136
      %p143 = scmp.eq.s32.totalorder %s32, 2
      %p144 = por %p142, %p143
      %p145 = scmp.ne.s32.totalorder %s136, %s137
      %p146 = scmp.eq.s32.totalorder %s32, 0
      %p147 = por %p145, %p146
      %p148 = scmp.ne.s32.totalorder %s136, %s137
      %p149 = scmp.eq.s32.totalorder %s33, 2
      %p150 = por %p148, %p149
      %p152 = scmp.ne.s32.totalorder %s137, %s151
      %p153 = scmp.eq.s32.totalorder %s33, 0
      %p154 = por %p152, %p153
      %s156 = sadd.s32 %s155, 1
      %p159 = scmp.eq.s32.totalorder %s27, 2
      %p160 = scmp.ne.s32.totalorder %s155, %s157
      %p161 = scmp.eq.s32.totalorder %s27, 0
      %p162 = por %p160, %p161
      %p163 = scmp.ne.s32.totalorder %s155, %s157
      %p164 = scmp.eq.s32.totalorder %s32, 2
      %p165 = por %p163, %p164
      %p166 = scmp.ne.s32.totalorder %s157, %s158
      %p167 = scmp.eq.s32.totalorder %s32, 0
      %p168 = por %p166, %p167
      %p169 = scmp.ne.s32.totalorder %s157, %s158
      %p170 = scmp.eq.s32.totalorder %s33, 2
      %p171 = por %p169, %p170
      %p173 = scmp.ne.s32.totalorder %s158, %s172
      %p174 = scmp.eq.s32.totalorder %s33, 0
      %p175 = por %p173, %p174
      %s177 = sadd.s32 %s176, 1
      %p180 = scmp.eq.s32.totalorder %s27, 2
      %p181 = scmp.ne.s32.totalorder %s176, %s178
      %p182 = scmp.eq.s32.totalorder %s27, 0
      %p183 = por %p181, %p182
      %p184 = scmp.ne.s32.totalorder %s176, %s178
      %p185 = scmp.eq.s32.totalorder %s32, 2
      %p186 = por %p184, %p185
      %p187 = scmp.ne.s32.totalorder %s178, %s179
      %p188 = scmp.eq.s32.totalorder %s32, 0
      %p189 = por %p187, %p188
      %p190 = scmp.ne.s32.totalorder %s178, %s179
      %p191 = scmp.eq.s32.totalorder %s33, 2
      %p192 = por %p190, %p191
      %p194 = scmp.ne.s32.totalorder %s179, %s193
      %p195 = scmp.eq.s32.totalorder %s33, 0
      %p196 = por %p194, %p195
      %s198 = sadd.s32 %s197, 1
      %p201 = scmp.eq.s32.totalorder %s27, 2
      %p202 = scmp.ne.s32.totalorder %s197, %s199
      %p203 = scmp.eq.s32.totalorder %s27, 0
      %p204 = por %p202, %p203
      %p205 = scmp.ne.s32.totalorder %s197, %s199
      %p206 = scmp.eq.s32.totalorder %s32, 2
      %p207 = por %p205, %p206
      %p208 = scmp.ne.s32.totalorder %s199, %s200
      %p209 = scmp.eq.s32.totalorder %s32, 0
      %p210 = por %p208, %p209
      %p211 = scmp.ne.s32.totalorder %s199, %s200
      %p212 = scmp.eq.s32.totalorder %s33, 2
      %p213 = por %p211, %p212
      %p215 = scmp.ne.s32.totalorder %s200, %s214
      %p216 = scmp.eq.s32.totalorder %s33, 0
      %p217 = por %p215, %p216
      %s219 = sadd.s32 %s218, 1
      %p222 = scmp.eq.s32.totalorder %s27, 2
      %p223 = scmp.ne.s32.totalorder %s218, %s220
      %p224 = scmp.eq.s32.totalorder %s27, 0
      %p225 = por %p223, %p224
      %p226 = scmp.ne.s32.totalorder %s218, %s220
      %p227 = scmp.eq.s32.totalorder %s32, 2
      %p228 = por %p226, %p227
      %p229 = scmp.ne.s32.totalorder %s220, %s221
      %p230 = scmp.eq.s32.totalorder %s32, 0
      %p231 = por %p229, %p230
      %p232 = scmp.ne.s32.totalorder %s220, %s221
      %p233 = scmp.eq.s32.totalorder %s33, 2
      %p234 = por %p232, %p233
      %p236 = scmp.ne.s32.totalorder %s221, %s235
      %p237 = scmp.eq.s32.totalorder %s33, 0
      %p238 = por %p236, %p237
      %s240 = sadd.s32 %s239, 1
      %p243 = scmp.eq.s32.totalorder %s27, 2
      %p244 = scmp.ne.s32.totalorder %s239, %s241
      %p245 = scmp.eq.s32.totalorder %s27, 0
      %p246 = por %p244, %p245
      %p247 = scmp.ne.s32.totalorder %s239, %s241
      %p248 = scmp.eq.s32.totalorder %s32, 2
      %p249 = por %p247, %p248
      %p250 = scmp.ne.s32.totalorder %s241, %s242
      %p251 = scmp.eq.s32.totalorder %s32, 0
      %p252 = por %p250, %p251
      %p253 = scmp.ne.s32.totalorder %s241, %s242
      %p254 = scmp.eq.s32.totalorder %s33, 2
      %p255 = por %p253, %p254
      %p257 = scmp.ne.s32.totalorder %s242, %s256
      %p258 = scmp.eq.s32.totalorder %s33, 0
      %p259 = por %p257, %p258
      %s261 = sadd.s32 %s260, 1
      %p264 = scmp.eq.s32.totalorder %s27, 2
      %p265 = scmp.ne.s32.totalorder %s260, %s262
      %p266 = scmp.eq.s32.totalorder %s27, 0
      %p267 = por %p265, %p266
      %p268 = scmp.ne.s32.totalorder %s260, %s262
      %p269 = scmp.eq.s32.totalorder %s32, 2
      %p270 = por %p268, %p269
      %p271 = scmp.ne.s32.totalorder %s262, %s263
      %p272 = scmp.eq.s32.totalorder %s32, 0
      %p273 = por %p271, %p272
      %p274 = scmp.ne.s32.totalorder %s262, %s263
      %p275 = scmp.eq.s32.totalorder %s33, 2
      %p276 = por %p274, %p275
      %p278 = scmp.ne.s32.totalorder %s263, %s277
      %p279 = scmp.eq.s32.totalorder %s33, 0
      %p280 = por %p278, %p279
      %s282 = sadd.s32 %s281, 1
      %p285 = scmp.eq.s32.totalorder %s27, 2
      %p286 = scmp.ne.s32.totalorder %s281, %s283
      %p287 = scmp.eq.s32.totalorder %s27, 0
      %p288 = por %p286, %p287
      %p289 = scmp.ne.s32.totalorder %s281, %s283
      %p290 = scmp.eq.s32.totalorder %s32, 2
      %p291 = por %p289, %p290
      %p292 = scmp.ne.s32.totalorder %s283, %s284
      %p293 = scmp.eq.s32.totalorder %s32, 0
      %p294 = por %p292, %p293
      %p295 = scmp.ne.s32.totalorder %s283, %s284
      %p296 = scmp.eq.s32.totalorder %s33, 2
      %p297 = por %p295, %p296
      %p299 = scmp.ne.s32.totalorder %s284, %s298
      %p300 = scmp.eq.s32.totalorder %s33, 0
      %p301 = por %p299, %p300
      %s303 = sadd.s32 %s302, 1
      %p306 = scmp.eq.s32.totalorder %s27, 2
      %p307 = scmp.ne.s32.totalorder %s302, %s304
      %p308 = scmp.eq.s32.totalorder %s27, 0
      %p309 = por %p307, %p308
      %p310 = scmp.ne.s32.totalorder %s302, %s304
      %p311 = scmp.eq.s32.totalorder %s32, 2
      %p312 = por %p310, %p311
      %p313 = scmp.ne.s32.totalorder %s304, %s305
      %p314 = scmp.eq.s32.totalorder %s32, 0
      %p315 = por %p313, %p314
      %p316 = scmp.ne.s32.totalorder %s304, %s305
      %p317 = scmp.eq.s32.totalorder %s33, 2
      %p318 = por %p316, %p317
      %p320 = scmp.ne.s32.totalorder %s305, %s319
      %p321 = scmp.eq.s32.totalorder %s33, 0
      %p322 = por %p320, %p321
      %s324 = sadd.s32 %s323, 1
      %p327 = scmp.eq.s32.totalorder %s27, 2
      %p328 = scmp.ne.s32.totalorder %s323, %s325
      %p329 = scmp.eq.s32.totalorder %s27, 0
      %p330 = por %p328, %p329
      %p331 = scmp.ne.s32.totalorder %s323, %s325
      %p332 = scmp.eq.s32.totalorder %s32, 2
      %p333 = por %p331, %p332
      %p334 = scmp.ne.s32.totalorder %s325, %s326
      %p335 = scmp.eq.s32.totalorder %s32, 0
      %p336 = por %p334, %p335
      %p337 = scmp.ne.s32.totalorder %s325, %s326
      %p338 = scmp.eq.s32.totalorder %s33, 2
      %p339 = por %p337, %p338
      %p341 = scmp.ne.s32.totalorder %s326, %s340
      %p342 = scmp.eq.s32.totalorder %s33, 0
      %p343 = por %p341, %p342
      %s345 = sadd.s32 %s344, 1
      %p348 = scmp.eq.s32.totalorder %s27, 2
      %p349 = scmp.ne.s32.totalorder %s344, %s346
      %p350 = scmp.eq.s32.totalorder %s27, 0
      %p351 = por %p349, %p350
      %p352 = scmp.ne.s32.totalorder %s344, %s346
      %p353 = scmp.eq.s32.totalorder %s32, 2
      %p354 = por %p352, %p353
      %p355 = scmp.ne.s32.totalorder %s346, %s347
      %p356 = scmp.eq.s32.totalorder %s32, 0
      %p357 = por %p355, %p356
      %p358 = scmp.ne.s32.totalorder %s346, %s347
      %p359 = scmp.eq.s32.totalorder %s33, 2
      %p360 = por %p358, %p359
      %p362 = scmp.ne.s32.totalorder %s347, %s361
      %p363 = scmp.eq.s32.totalorder %s33, 0
      %p364 = por %p362, %p363
      %s366 = sadd.s32 %s365, 1
      %p369 = scmp.eq.s32.totalorder %s27, 2
      %p370 = scmp.ne.s32.totalorder %s365, %s367
      %p371 = scmp.eq.s32.totalorder %s27, 0
      %p372 = por %p370, %p371
      %p373 = scmp.ne.s32.totalorder %s365, %s367
      %p374 = scmp.eq.s32.totalorder %s32, 2
      %p375 = por %p373, %p374
      %p376 = scmp.ne.s32.totalorder %s367, %s368
      %p377 = scmp.eq.s32.totalorder %s32, 0
      %p378 = por %p376, %p377
      %p379 = scmp.ne.s32.totalorder %s367, %s368
      %p380 = scmp.eq.s32.totalorder %s33, 2
      %p381 = por %p379, %p380
      %p383 = scmp.ne.s32.totalorder %s368, %s382
      %p384 = scmp.eq.s32.totalorder %s33, 0
      %p385 = por %p383, %p384
      %s387 = sadd.s32 %s386, 1
      %p390 = scmp.eq.s32.totalorder %s27, 2
      %p391 = scmp.ne.s32.totalorder %s386, %s388
      %p392 = scmp.eq.s32.totalorder %s27, 0
      %p393 = por %p391, %p392
      %p394 = scmp.ne.s32.totalorder %s386, %s388
      %p395 = scmp.eq.s32.totalorder %s32, 2
      %p396 = por %p394, %p395
      %p397 = scmp.ne.s32.totalorder %s388, %s389
      %p398 = scmp.eq.s32.totalorder %s32, 0
      %p399 = por %p397, %p398
      %p400 = scmp.ne.s32.totalorder %s388, %s389
      %p401 = scmp.eq.s32.totalorder %s33, 2
      %p402 = por %p400, %p401
      %p404 = scmp.ne.s32.totalorder %s389, %s403
      %p405 = scmp.eq.s32.totalorder %s33, 0
      %p406 = por %p404, %p405
      %s408 = sadd.s32 %s407, 1
      %p411 = scmp.eq.s32.totalorder %s27, 2
      %p412 = scmp.ne.s32.totalorder %s407, %s409
      %p413 = scmp.eq.s32.totalorder %s27, 0
      %p414 = por %p412, %p413
      %p415 = scmp.ne.s32.totalorder %s407, %s409
      %p416 = scmp.eq.s32.totalorder %s32, 2
      %p417 = por %p415, %p416
      %p418 = scmp.ne.s32.totalorder %s409, %s410
      %p419 = scmp.eq.s32.totalorder %s32, 0
      %p420 = por %p418, %p419
      %p421 = scmp.ne.s32.totalorder %s409, %s410
      %p422 = scmp.eq.s32.totalorder %s33, 2
      %p423 = por %p421, %p422
      %p425 = scmp.ne.s32.totalorder %s410, %s424
      %p426 = scmp.eq.s32.totalorder %s33, 0
      %p427 = por %p425, %p426
      %s429 = sadd.s32 %s428, 1
      %p432 = scmp.eq.s32.totalorder %s27, 2
      %p433 = scmp.ne.s32.totalorder %s428, %s430
      %p434 = scmp.eq.s32.totalorder %s27, 0
      %p435 = por %p433, %p434
      %p436 = scmp.ne.s32.totalorder %s428, %s430
      %p437 = scmp.eq.s32.totalorder %s32, 2
      %p438 = por %p436, %p437
      %p439 = scmp.ne.s32.totalorder %s430, %s431
      %p440 = scmp.eq.s32.totalorder %s32, 0
      %p441 = por %p439, %p440
      %p442 = scmp.ne.s32.totalorder %s430, %s431
      %p443 = scmp.eq.s32.totalorder %s33, 2
      %p444 = por %p442, %p443
      %p446 = scmp.ne.s32.totalorder %s431, %s445
      %p447 = scmp.eq.s32.totalorder %s33, 0
      %p448 = por %p446, %p447
      %p449 = scmp.le.s32.totalorder 1, %s27
      %p450 = scmp.lt.s32.totalorder %s27, 4
      %p451 = pnand %p449, %p450
      %p452 = pneg %p451
      // Predicated region
      $region9: #{tpu_custom_call.1} parent=5 // pred_check
        _
      $region10: #{tpu_custom_call.1} parent=5 // pred_check_branch
        %454 = sbr.rel (%p451) target = $region12
      $region11: #{tpu_custom_call.1} parent=5 // pred_region
        %s455 = ssub.s32 %s27, 1
        // Predicated region
        $region13: #{tpu_custom_call.1} parent=11 // pred_check
          %p456 = pneg %p48
        $region14: #{tpu_custom_call.1} parent=11 // pred_check_branch
          %458 = sbr.rel (%p456) target = $region16
        $region15: #{tpu_custom_call.1} parent=11 // pred_region
          _
        $region16: #{tpu_custom_call.1} parent=11 // pred_fallthru
          _
        // Predicated region
        $region17: #{tpu_custom_call.1} parent=11 // pred_check
          %p459 = pneg %p147
        $region18: #{tpu_custom_call.1} parent=11 // pred_check_branch
          %461 = sbr.rel (%p459) target = $region20
        $region19: #{tpu_custom_call.1} parent=11 // pred_region
          _
        $region20: #{tpu_custom_call.1} parent=11 // pred_fallthru
          _
        // Predicated region
        $region21: #{tpu_custom_call.1} parent=11 // pred_check
          %p462 = pneg %p168
        $region22: #{tpu_custom_call.1} parent=11 // pred_check_branch
          %464 = sbr.rel (%p462) target = $region24
        $region23: #{tpu_custom_call.1} parent=11 // pred_region
          _
        $region24: #{tpu_custom_call.1} parent=11 // pred_fallthru
          _
        // Predicated region
        $region25: #{tpu_custom_call.1} parent=11 // pred_check
          %p465 = pneg %p189
        $region26: #{tpu_custom_call.1} parent=11 // pred_check_branch
          %467 = sbr.rel (%p465) target = $region28
        $region27: #{tpu_custom_call.1} parent=11 // pred_region
          _
        $region28: #{tpu_custom_call.1} parent=11 // pred_fallthru
          _
        // Predicated region
        $region29: #{tpu_custom_call.1} parent=11 // pred_check
          %p468 = pneg %p210
        $region30: #{tpu_custom_call.1} parent=11 // pred_check_branch
          %470 = sbr.rel (%p468) target = $region32
        $region31: #{tpu_custom_call.1} parent=11 // pred_region
          _
        $region32: #{tpu_custom_call.1} parent=11 // pred_fallthru
          _
        // Predicated region
        $region33: #{tpu_custom_call.1} parent=11 // pred_check
          %p471 = pneg %p231
        $region34: #{tpu_custom_call.1} parent=11 // pred_check_branch
          %473 = sbr.rel (%p471) target = $region36
        $region35: #{tpu_custom_call.1} parent=11 // pred_region
          _
        $region36: #{tpu_custom_call.1} parent=11 // pred_fallthru
          _
        // Predicated region
        $region37: #{tpu_custom_call.1} parent=11 // pred_check
          %p474 = pneg %p252
        $region38: #{tpu_custom_call.1} parent=11 // pred_check_branch
          %476 = sbr.rel (%p474) target = $region40
        $region39: #{tpu_custom_call.1} parent=11 // pred_region
          _
        $region40: #{tpu_custom_call.1} parent=11 // pred_fallthru
          _
        // Predicated region
        $region41: #{tpu_custom_call.1} parent=11 // pred_check
          %p477 = pneg %p273
        $region42: #{tpu_custom_call.1} parent=11 // pred_check_branch
          %479 = sbr.rel (%p477) target = $region44
        $region43: #{tpu_custom_call.1} parent=11 // pred_region
          _
        $region44: #{tpu_custom_call.1} parent=11 // pred_fallthru
          _
        // Predicated region
        $region45: #{tpu_custom_call.1} parent=11 // pred_check
          %p480 = pneg %p294
        $region46: #{tpu_custom_call.1} parent=11 // pred_check_branch
          %482 = sbr.rel (%p480) target = $region48
        $region47: #{tpu_custom_call.1} parent=11 // pred_region
          _
        $region48: #{tpu_custom_call.1} parent=11 // pred_fallthru
          _
        // Predicated region
        $region49: #{tpu_custom_call.1} parent=11 // pred_check
          %p483 = pneg %p315
        $region50: #{tpu_custom_call.1} parent=11 // pred_check_branch
          %485 = sbr.rel (%p483) target = $region52
        $region51: #{tpu_custom_call.1} parent=11 // pred_region
          _
        $region52: #{tpu_custom_call.1} parent=11 // pred_fallthru
          _
        // Predicated region
        $region53: #{tpu_custom_call.1} parent=11 // pred_check
          %p486 = pneg %p336
        $region54: #{tpu_custom_call.1} parent=11 // pred_check_branch
          %488 = sbr.rel (%p486) target = $region56
        $region55: #{tpu_custom_call.1} parent=11 // pred_region
          _
        $region56: #{tpu_custom_call.1} parent=11 // pred_fallthru
          _
        // Predicated region
        $region57: #{tpu_custom_call.1} parent=11 // pred_check
          %p489 = pneg %p357
        $region58: #{tpu_custom_call.1} parent=11 // pred_check_branch
          %491 = sbr.rel (%p489) target = $region60
        $region59: #{tpu_custom_call.1} parent=11 // pred_region
          _
        $region60: #{tpu_custom_call.1} parent=11 // pred_fallthru
          _
        // Predicated region
        $region61: #{tpu_custom_call.1} parent=11 // pred_check
          %p492 = pneg %p378
        $region62: #{tpu_custom_call.1} parent=11 // pred_check_branch
          %494 = sbr.rel (%p492) target = $region64
        $region63: #{tpu_custom_call.1} parent=11 // pred_region
          _
        $region64: #{tpu_custom_call.1} parent=11 // pred_fallthru
          _
      $region12: #{tpu_custom_call.1} parent=5 // pred_fallthru
        _
      %p495 = scmp.lt.s32.totalorder %s27, 3
      // Predicated region
      $region65: #{tpu_custom_call.1} parent=5 // pred_check
        %p496 = pneg %p495
      $region66: #{tpu_custom_call.1} parent=5 // pred_check_branch
        %498 = sbr.rel (%p496) target = $region68
      $region67: #{tpu_custom_call.1} parent=5 // pred_region
        // Predicated region
        $region69: #{tpu_custom_call.1} parent=67 // pred_check
          %p499 = pneg %p68
        $region70: #{tpu_custom_call.1} parent=67 // pred_check_branch
          %501 = sbr.rel (%p499) target = $region72
        $region71: #{tpu_custom_call.1} parent=67 // pred_region
          %s502 = smul.u32 16, %s27
          %p503 = scmp.lt.s32.totalorder %s502, 47
          %s504 = scalar_select %p503, %s502, 47
          %s505 = smul.addr %s504, 8
          %s506 = scalar_lea.vmem %s1, %s505
          %s507 = smul.u32 16, %s27
        $region72: #{tpu_custom_call.1} parent=67 // pred_fallthru
          _
        // Predicated region
        $region73: #{tpu_custom_call.1} parent=67 // pred_check
          %p508 = pneg %p94
        $region74: #{tpu_custom_call.1} parent=67 // pred_check_branch
          %510 = sbr.rel (%p508) target = $region76
        $region75: #{tpu_custom_call.1} parent=67 // pred_region
          %s511 = smul.u32 16, %s27
          %p512 = scmp.lt.s32.totalorder %s511, 47
          %s513 = scalar_select %p512, %s511, 47
          %s514 = smul.addr %s513, 4
          %s515 = scalar_lea.vmem %s2, %s514
          %s516 = smul.u32 16, %s27
        $region76: #{tpu_custom_call.1} parent=67 // pred_fallthru
          _
        // Predicated region
        $region77: #{tpu_custom_call.1} parent=67 // pred_check
          %p517 = pneg %p120
        $region78: #{tpu_custom_call.1} parent=67 // pred_check_branch
          %519 = sbr.rel (%p517) target = $region80
        $region79: #{tpu_custom_call.1} parent=67 // pred_region
          %s520 = sand.u32 %s110, 1
          %s521 = sand.u32 %s110, 1
          %s522 = smul.addr %s521, 32
          %s523 = scalar_lea.vmem [#allocation6], %s522
          %s524 = smul.addr %s27, 4
          %s525 = scalar_lea.vmem %s3, %s524
          // Predicated region
          $region81: #{tpu_custom_call.1} parent=79 // pred_check
            _
          $region82: #{tpu_custom_call.1} parent=79 // pred_check_branch
            %527 = sbr.rel (0) target = $region84
          $region83: #{tpu_custom_call.1} parent=79 // pred_region
            // Predicated region
            $region85: #{tpu_custom_call.1} parent=83 // pred_check
              _
            $region86: #{tpu_custom_call.1} parent=83 // pred_check_branch
              %529 = sbr.rel target = $region88
            $region87: #{tpu_custom_call.1} parent=83 // pred_region
              // Predicated region
              $region100: #{tpu_custom_call.1} parent=87 // pred_check
                _
              $region101: #{tpu_custom_call.1} parent=87 // pred_check_branch
                %558 = sbr.rel (0) target = $region103
              $region102: #{tpu_custom_call.1} parent=87 // pred_region
                loop: start=0, step=1, limit=1
                $region104: #{tpu_custom_call.1} parent=102 // loop_pre_header
                  _
                $region105: #{tpu_custom_call.1} parent=102 // loop_header
                  %s560 = sphi 0, %s564
                  %p561 = scmp.ge.s32.totalorder %s560, 1
                  %s565 = sphi %s525, %s525
                  %s566 = sphi %s523, %s523
                $region106: #{tpu_custom_call.1} parent=102 // loop_header_branch
                  %563 = sbr.rel (%p561) target = $region110
                $region107: #{tpu_custom_call.1} parent=102 // loop_body
                  _
                $region108: #{tpu_custom_call.1} parent=102 // loop_footer
                  %s564 = sadd.s32 1, %s560
                $region109: #{tpu_custom_call.1} parent=102 // loop_footer_branch
                  %559 = sbr.rel target = $region105
                $region110: #{tpu_custom_call.1} parent=102 // loop_exit
                  _
                loop: start=0, step=1, limit=1
                $region111: #{tpu_custom_call.1} parent=102 // loop_pre_header
                  _
                $region112: #{tpu_custom_call.1} parent=102 // loop_header
                  %s569 = sphi 0, %s573
                  %p570 = scmp.ge.s32.totalorder %s569, 1
                  %s574 = sphi %s525, %s525
                  %s575 = sphi %s523, %s523
                $region113: #{tpu_custom_call.1} parent=102 // loop_header_branch
                  %572 = sbr.rel (%p570) target = $region117
                $region114: #{tpu_custom_call.1} parent=102 // loop_body
                  %v576 = vld [vmem:[%s574] sm:$0xf]
                  %577 = vst [vmem:[%s575] sm:$0xf] %v576
                  %v578 = vld [vmem:[%s574 + $0xc] sm:$0xf]
                  %579 = vst [vmem:[%s575 + $0x4] sm:$0xf] %v578
                  %v580 = vld [vmem:[%s574 + $0x18] sm:$0xf]
                  %581 = vst [vmem:[%s575 + $0x8] sm:$0xf] %v580
                  %v582 = vld [vmem:[%s574 + $0x24] sm:$0xf]
                  %583 = vst [vmem:[%s575 + $0xc] sm:$0xf] %v582
                  %v584 = vld [vmem:[%s574 + $0x30] sm:$0xf]
                  %585 = vst [vmem:[%s575 + $0x10] sm:$0xf] %v584
                  %v586 = vld [vmem:[%s574 + $0x3c] sm:$0xf]
                  %587 = vst [vmem:[%s575 + $0x14] sm:$0xf] %v586
                  %v588 = vld [vmem:[%s574 + $0x48] sm:$0xf]
                  %589 = vst [vmem:[%s575 + $0x18] sm:$0xf] %v588
                  %v590 = vld [vmem:[%s574 + $0x54] sm:$0xf]
                  %591 = vst [vmem:[%s575 + $0x1c] sm:$0xf] %v590
                $region115: #{tpu_custom_call.1} parent=102 // loop_footer
                  %s573 = sadd.s32 1, %s569
                $region116: #{tpu_custom_call.1} parent=102 // loop_footer_branch
                  %568 = sbr.rel target = $region112
                $region117: #{tpu_custom_call.1} parent=102 // loop_exit
                  _
              $region103: #{tpu_custom_call.1} parent=87 // pred_fallthru
                _
            $region88: #{tpu_custom_call.1} parent=83 // pred_fallthru
              _
            // Predicated region
            $region89: #{tpu_custom_call.1} parent=83 // pred_check
              _
            $region90: #{tpu_custom_call.1} parent=83 // pred_check_branch
              %531 = sbr.rel (0) target = $region92
            $region91: #{tpu_custom_call.1} parent=83 // pred_region
              loop: start=0, step=1, limit=1
              $region93: #{tpu_custom_call.1} parent=91 // loop_pre_header
                _
              $region94: #{tpu_custom_call.1} parent=91 // loop_header
                %s534 = sphi 0, %s538
                %p535 = scmp.ge.s32.totalorder %s534, 1
                %s539 = sphi %s525, %s525
                %s540 = sphi %s523, %s523
              $region95: #{tpu_custom_call.1} parent=91 // loop_header_branch
                %537 = sbr.rel (%p535) target = $region99
              $region96: #{tpu_custom_call.1} parent=91 // loop_body
                %v541 = vld [vmem:[%s539] sm:$0xf]
                %542 = vst [vmem:[%s540] sm:$0xf] %v541
                %v543 = vld [vmem:[%s539 + $0xc] sm:$0xf]
                %544 = vst [vmem:[%s540 + $0x4] sm:$0xf] %v543
                %v545 = vld [vmem:[%s539 + $0x18] sm:$0xf]
                %546 = vst [vmem:[%s540 + $0x8] sm:$0xf] %v545
                %v547 = vld [vmem:[%s539 + $0x24] sm:$0xf]
                %548 = vst [vmem:[%s540 + $0xc] sm:$0xf] %v547
                %v549 = vld [vmem:[%s539 + $0x30] sm:$0xf]
                %550 = vst [vmem:[%s540 + $0x10] sm:$0xf] %v549
                %v551 = vld [vmem:[%s539 + $0x3c] sm:$0xf]
                %552 = vst [vmem:[%s540 + $0x14] sm:$0xf] %v551
                %v553 = vld [vmem:[%s539 + $0x48] sm:$0xf]
                %554 = vst [vmem:[%s540 + $0x18] sm:$0xf] %v553
                %v555 = vld [vmem:[%s539 + $0x54] sm:$0xf]
                %556 = vst [vmem:[%s540 + $0x1c] sm:$0xf] %v555
              $region97: #{tpu_custom_call.1} parent=91 // loop_footer
                %s538 = sadd.s32 1, %s534
              $region98: #{tpu_custom_call.1} parent=91 // loop_footer_branch
                %533 = sbr.rel target = $region94
              $region99: #{tpu_custom_call.1} parent=91 // loop_exit
                _
            $region92: #{tpu_custom_call.1} parent=83 // pred_fallthru
              _
          $region84: #{tpu_custom_call.1} parent=79 // pred_fallthru
            _
          %592 = vnop
        $region80: #{tpu_custom_call.1} parent=67 // pred_fallthru
          _
      $region68: #{tpu_custom_call.1} parent=5 // pred_fallthru
        _
      %p593 = scmp.le.s32.totalorder 1, %s27
      %p594 = scmp.lt.s32.totalorder %s27, 4
      %p595 = pnand %p593, %p594
      %p596 = pneg %p595
      // Predicated region
      $region118: #{tpu_custom_call.1} parent=5 // pred_check
        _
      $region119: #{tpu_custom_call.1} parent=5 // pred_check_branch
        %598 = sbr.rel (%p595) target = $region121
      $region120: #{tpu_custom_call.1} parent=5 // pred_region
        %s599 = ssub.s32 %s27, 1
        %s600 = sand.u32 %s113, 1
        %s601 = sand.u32 %s113, 1
        %s602 = smul.addr %s601, 32
        %s603 = scalar_lea.vmem [#allocation6], %s602
        // Predicated region
        $region122: #{tpu_custom_call.1} parent=120 // pred_check
          %p604 = pneg %p126
        $region123: #{tpu_custom_call.1} parent=120 // pred_check_branch
          %606 = sbr.rel (%p604) target = $region125
        $region124: #{tpu_custom_call.1} parent=120 // pred_region
          _
        $region125: #{tpu_custom_call.1} parent=120 // pred_fallthru
          _
        %p607 = pneg %p48
        %p608 = pneg %p45
        %s609 = smul.u32 16, %s32
        %p610 = scmp.lt.s32.totalorder %s609, 47
        %s611 = scalar_select %p610, %s609, 47
        %s612 = smul.addr %s611, 8
        %s613 = scalar_lea.vmem %s1, %s612
        %p614 = pneg %p74
        %p615 = pneg %p71
        %s616 = smul.u32 16, %s32
        %p617 = scmp.lt.s32.totalorder %s616, 47
        %s618 = scalar_select %p617, %s616, 47
        %s619 = smul.addr %s618, 4
        %s620 = scalar_lea.vmem %s2, %s619
        %p621 = pneg %p100
        %p622 = pneg %p97
        %s623 = sand.u32 %s113, 1
        %s624 = sand.u32 %s113, 1
        %s625 = smul.addr %s624, 32
        %s626 = scalar_lea.vmem [#allocation6], %s625
        %p627 = pneg %p126
        %p628 = pneg %p123
        %p629 = pneg %p147
        %p630 = pneg %p144
        %p631 = pneg %p168
        %p632 = pneg %p165
        %p633 = pneg %p189
        %p634 = pneg %p186
        %p635 = pneg %p210
        %p636 = pneg %p207
        %p637 = pneg %p231
        %p638 = pneg %p228
        %p639 = pneg %p252
        %p640 = pneg %p249
        %p641 = pneg %p273
        %p642 = pneg %p270
        %p643 = pneg %p294
        %p644 = pneg %p291
        %p645 = pneg %p315
        %p646 = pneg %p312
        %p647 = pneg %p336
        %p648 = pneg %p333
        %p649 = pneg %p357
        %p650 = pneg %p354
        %p651 = pneg %p378
        %p652 = pneg %p375
        %p653 = pneg %p399
        %p654 = pneg %p396
        %p655 = pneg %p420
        %p656 = pneg %p417
        %p657 = pneg %p441
        %p658 = pneg %p438
        %s659 = smul.u32 16, %s32
        %p660 = scmp.lt.s32.totalorder %s659, 47
        %s661 = scalar_select %p660, %s659, 47
        %s662 = smul.addr %s661, 8
        %s663 = scalar_lea.vmem %s1, %s662
        %s664 = smul.u32 16, %s32
        %s665 = smul.u32 16, %s32
        %p666 = scmp.lt.s32.totalorder %s665, 47
        %s667 = scalar_select %p666, %s665, 47
        %s668 = smul.addr %s667, 4
        %s669 = scalar_lea.vmem %s2, %s668
        %s670 = smul.u32 16, %s32
        %p671 = scmp.eq.s32.totalorder %s32, 0
        // Predicated region
        $region126: #{tpu_custom_call.1} parent=120 // pred_check
          %p672 = pneg %p671
        $region127: #{tpu_custom_call.1} parent=120 // pred_check_branch
          %674 = sbr.rel (%p672) target = $region129
        $region128: #{tpu_custom_call.1} parent=120 // pred_region
          %v675 = vld [vmem:[%s0] sm:$0xff]
          %v676 = vld [vmem:[%s0 + $0x8] sm:$0xff]
          %v677 = vld [vmem:[%s0 + $0x10] sm:$0xff]
          %v678 = vld [vmem:[%s0 + $0x18] sm:$0xff]
          %v679 = vld [vmem:[%s0 + $0x20] sm:$0xff]
          %v680 = vld [vmem:[%s0 + $0x28] sm:$0xff]
          %v681 = vld [vmem:[%s0 + $0x30] sm:$0xff]
          %v682 = vld [vmem:[%s0 + $0x38] sm:$0xff]
          %v683 = vld [vmem:[%s5] sm:$0xff]
          %v684 = vld [vmem:[%s5 + $0x8] sm:$0xff]
          %vm685 = vcmask 130048
          %v687 = vsel %vm685, %v675, 0
          %v690 = vsel %vm685, %v676, 0
          %v693 = vsel %vm685, %v677, 0
          %v696 = vsel %vm685, %v678, 0
          %v699 = vsel %vm685, %v679, 0
          %v702 = vsel %vm685, %v680, 0
          %v705 = vsel %vm685, %v681, 0
          %v708 = vsel %vm685, %v682, 0
          %710 = vmatprep.subr.mxu0 0.0
          %711 = vmatpush1.msra.mxu0 %v683
          %712 = vmatprep.subr.mxu0 0.0
          %713 = vmatpush1.msra.mxu0 %v684
          %714 = vmatprep.subr.mxu0 0.0
          %715 = vmatpush1.msra.mxu0 0.0
          %716 = vmatprep.subr.mxu0 0.0
          %717 = vmatpush1.msra.mxu0 0.0
          %718 = vmatprep.subr.mxu0 0.0
          %719 = vmatpush1.msra.mxu0 0.0
          %720 = vmatprep.subr.mxu0 0.0
          %721 = vmatpush1.msra.mxu0 0.0
          %722 = vmatprep.subr.mxu0 0.0
          %723 = vmatpush1.msra.mxu0 0.0
          %724 = vmatprep.subr.mxu0 0.0
          %725 = vmatpush1.msra.mxu0 0.0
          %726 = vmatprep.subr.mxu0 0.0
          %727 = vmatpush1.msra.mxu0 0.0
          %728 = vmatprep.subr.mxu0 0.0
          %729 = vmatpush1.msra.mxu0 0.0
          %730 = vmatprep.subr.mxu0 0.0
          %731 = vmatpush1.msra.mxu0 0.0
          %732 = vmatprep.subr.mxu0 0.0
          %733 = vmatpush1.msra.mxu0 0.0
          %734 = vmatprep.subr.mxu0 0.0
          %735 = vmatpush1.msra.mxu0 0.0
          %736 = vmatprep.subr.mxu0 0.0
          %737 = vmatpush1.msra.mxu0 0.0
          %738 = vmatprep.subr.mxu0 0.0
          %739 = vmatpush1.msra.mxu0 0.0
          %740 = vmatprep.subr.mxu0 0.0
          %741 = vmatpush1.msra.mxu0 0.0
          %742 = vmatprep.subr.mxu0 0.0
          %743 = vmatpush1.msra.mxu0 0.0
          %744 = vmatprep.subr.mxu0 0.0
          %745 = vmatpush1.msra.mxu0 0.0
          %746 = vmatprep.subr.mxu0 0.0
          %747 = vmatpush1.msra.mxu0 0.0
          %748 = vmatprep.subr.mxu0 0.0
          %749 = vmatpush1.msra.mxu0 0.0
          %750 = vmatprep.subr.mxu0 0.0
          %751 = vmatpush1.msra.mxu0 0.0
          %752 = vmatprep.subr.mxu0 0.0
          %753 = vmatpush1.msra.mxu0 0.0
          %754 = vmatprep.subr.mxu0 0.0
          %755 = vmatpush1.msra.mxu0 0.0
          %756 = vmatprep.subr.mxu0 0.0
          %757 = vmatpush1.msra.mxu0 0.0
          %758 = vmatprep.subr.mxu0 0.0
          %759 = vmatpush1.msra.mxu0 0.0
          %760 = vmatprep.subr.mxu0 0.0
          %761 = vmatpush1.msra.mxu0 0.0
          %762 = vmatprep.subr.mxu0 0.0
          %763 = vmatpush1.msra.mxu0 0.0
          %764 = vmatprep.subr.mxu0 0.0
          %765 = vmatpush1.msra.mxu0 0.0
          %766 = vmatprep.subr.mxu0 0.0
          %767 = vmatpush1.msra.mxu0 0.0
          %768 = vmatprep.subr.mxu0 0.0
          %769 = vmatpush1.msra.mxu0 0.0
          %770 = vmatprep.subr.mxu0 0.0
          %771 = vmatpush1.msra.mxu0 0.0
          %772 = vmatprep.subr.mxu0 0.0
          %773 = vmatpush1.msra.mxu0 0.0
          %774 = vmatprep.mubr.f32.mxu0 0.0
          %775 = vmatmul.mubr.f32.gmra.mrb[0].mxu0 %v687
          %v776 = vpop.f32.mrb[0].mxu0
          %v777 = vadd.f32 0.0, %v776
          %v778 = vpop.f32.mrb[0].mxu0
          %779 = vmatprep.mubr.f32.mxu0 0.0
          %780 = vmatmul.mubr.f32.gmra.mrb[0].mxu0 %v690
          %v781 = vpop.f32.mrb[0].mxu0
          %v782 = vadd.f32 0.0, %v781
          %v783 = vpop.f32.mrb[0].mxu0
          %784 = vmatprep.mubr.f32.mxu0 0.0
          %785 = vmatmul.mubr.f32.gmra.mrb[0].mxu0 %v693
          %v786 = vpop.f32.mrb[0].mxu0
          %v787 = vadd.f32 0.0, %v786
          %v788 = vpop.f32.mrb[0].mxu0
          %789 = vmatprep.mubr.f32.mxu0 0.0
          %790 = vmatmul.mubr.f32.gmra.mrb[0].mxu0 %v696
          %v791 = vpop.f32.mrb[0].mxu0
          %v792 = vadd.f32 0.0, %v791
          %v793 = vpop.f32.mrb[0].mxu0
          %794 = vmatprep.mubr.f32.mxu0 0.0
          %795 = vmatmul.mubr.f32.gmra.mrb[0].mxu0 %v699
          %v796 = vpop.f32.mrb[0].mxu0
          %v797 = vadd.f32 0.0, %v796
          %v798 = vpop.f32.mrb[0].mxu0
          %799 = vmatprep.mubr.f32.mxu0 0.0
          %800 = vmatmul.mubr.f32.gmra.mrb[0].mxu0 %v702
          %v801 = vpop.f32.mrb[0].mxu0
          %v802 = vadd.f32 0.0, %v801
          %v803 = vpop.f32.mrb[0].mxu0
          %804 = vmatprep.mubr.f32.mxu0 0.0
          %805 = vmatmul.mubr.f32.gmra.mrb[0].mxu0 %v705
          %v806 = vpop.f32.mrb[0].mxu0
          %v807 = vadd.f32 0.0, %v806
          %v808 = vpop.f32.mrb[0].mxu0
          %809 = vmatprep.mubr.f32.mxu0 0.0
          %810 = vmatmul.mubr.f32.gmra.mrb[0].mxu0 %v708
          %v811 = vpop.f32.mrb[0].mxu0
          %v812 = vadd.f32 0.0, %v811
          %v813 = vpop.f32.mrb[0].mxu0
          %814 = vdwg.mxu0
          %815 = vst [vmem:[#allocation2] sm:$0xff] %v777
          %816 = vst [vmem:[#allocation2 + $0x8] sm:$0xff] %v782
          %817 = vst [vmem:[#allocation2 + $0x10] sm:$0xff] %v787
          %818 = vst [vmem:[#allocation2 + $0x18] sm:$0xff] %v792
          %819 = vst [vmem:[#allocation2 + $0x20] sm:$0xff] %v797
          %820 = vst [vmem:[#allocation2 + $0x28] sm:$0xff] %v802
          %821 = vst [vmem:[#allocation2 + $0x30] sm:$0xff] %v807
          %822 = vst [vmem:[#allocation2 + $0x38] sm:$0xff] %v812
          %823 = vst [vmem:[#allocation3] sm:$0xff] 0.0
          %824 = vst [vmem:[#allocation3 + $0x8] sm:$0xff] 0.0
          %825 = vst [vmem:[#allocation3 + $0x10] sm:$0xff] 0.0
          %826 = vst [vmem:[#allocation3 + $0x18] sm:$0xff] 0.0
          %827 = vst [vmem:[#allocation3 + $0x20] sm:$0xff] 0.0
          %828 = vst [vmem:[#allocation3 + $0x28] sm:$0xff] 0.0
          %829 = vst [vmem:[#allocation3 + $0x30] sm:$0xff] 0.0
          %830 = vst [vmem:[#allocation3 + $0x38] sm:$0xff] 0.0
          %vm831 = vcmask 7168
          %832 = vst.msk [vmem:[#allocation4] sm:$0xff] %vm831, 0.0
          %833 = vst.msk [vmem:[#allocation4 + $0x8] sm:$0xff] %vm831, 0.0
          %834 = vst.msk [vmem:[#allocation4 + $0x10] sm:$0xff] %vm831, 0.0
          %835 = vst.msk [vmem:[#allocation4 + $0x18] sm:$0xff] %vm831, 0.0
          %836 = vst.msk [vmem:[#allocation4 + $0x20] sm:$0xff] %vm831, 0.0
          %837 = vst.msk [vmem:[#allocation4 + $0x28] sm:$0xff] %vm831, 0.0
          %838 = vst.msk [vmem:[#allocation4 + $0x30] sm:$0xff] %vm831, 0.0
          %839 = vst.msk [vmem:[#allocation4 + $0x38] sm:$0xff] %vm831, 0.0
          %vm840 = vcmask 0
          %841 = vst.msk [vmem:[#allocation5] sm:$0x1] %vm840, -1e+30
        $region129: #{tpu_custom_call.1} parent=120 // pred_fallthru
          _
        %v842 = vld [vmem:[%s663] sm:$0xff]
        %v843 = vld [vmem:[%s663 + $0x8] sm:$0xff]
        %v844 = vld [vmem:[%s663 + $0x10] sm:$0xff]
        %v845 = vld [vmem:[%s663 + $0x18] sm:$0xff]
        %v846 = vld [vmem:[%s663 + $0x20] sm:$0xff]
        %v847 = vld [vmem:[%s663 + $0x28] sm:$0xff]
        %v848 = vld [vmem:[%s663 + $0x30] sm:$0xff]
        %v849 = vld [vmem:[%s663 + $0x38] sm:$0xff]
        %v850 = vld [vmem:[%s663 + $0x40] sm:$0xff]
        %v851 = vld [vmem:[%s663 + $0x48] sm:$0xff]
        %v852 = vld [vmem:[%s663 + $0x50] sm:$0xff]
        %v853 = vld [vmem:[%s663 + $0x58] sm:$0xff]
        %v854 = vld [vmem:[%s663 + $0x60] sm:$0xff]
        %v855 = vld [vmem:[%s663 + $0x68] sm:$0xff]
        %v856 = vld [vmem:[%s663 + $0x70] sm:$0xff]
        %v857 = vld [vmem:[%s663 + $0x78] sm:$0xff]
        %v858 = vld [vmem:[%s6] sm:$0xff]
        %v859 = vld [vmem:[%s7] sm:$0x1]
        %v861 = vlaneseq
        %v862 = vshrl.u32 %v861, 7
        %v863 = vsub.s32 0, %v862
        %v864 = vrot.slane %v859, %v863
        %vm866 = vcmask 64512
        %v868 = vsel %vm866, %v842, 0
        %v871 = vsel %vm866, %v843, 0
        %v874 = vsel %vm866, %v844, 0
        %v877 = vsel %vm866, %v845, 0
        %v880 = vsel %vm866, %v846, 0
        %v883 = vsel %vm866, %v847, 0
        %v886 = vsel %vm866, %v848, 0
        %v889 = vsel %vm866, %v849, 0
        %v892 = vsel %vm866, %v850, 0
        %v895 = vsel %vm866, %v851, 0
        %v898 = vsel %vm866, %v852, 0
        %v901 = vsel %vm866, %v853, 0
        %v904 = vsel %vm866, %v854, 0
        %v907 = vsel %vm866, %v855, 0
        %v910 = vsel %vm866, %v856, 0
        %v913 = vsel %vm866, %v857, 0
        %915 = vmatprep.subr.mxu0 0.0
        %916 = vmatpush1.msra.mxu0 %v858
        %917 = vmatprep.subr.mxu0 0.0
        %918 = vmatpush1.msra.mxu0 0.0
        %919 = vmatprep.subr.mxu0 0.0
        %920 = vmatpush1.msra.mxu0 0.0
        %921 = vmatprep.subr.mxu0 0.0
        %922 = vmatpush1.msra.mxu0 0.0
        %923 = vmatprep.subr.mxu0 0.0
        %924 = vmatpush1.msra.mxu0 0.0
        %925 = vmatprep.subr.mxu0 0.0
        %926 = vmatpush1.msra.mxu0 0.0
        %927 = vmatprep.subr.mxu0 0.0
        %928 = vmatpush1.msra.mxu0 0.0
        %929 = vmatprep.subr.mxu0 0.0
        %930 = vmatpush1.msra.mxu0 0.0
        %931 = vmatprep.subr.mxu0 0.0
        %932 = vmatpush1.msra.mxu0 0.0
        %933 = vmatprep.subr.mxu0 0.0
        %934 = vmatpush1.msra.mxu0 0.0
        %935 = vmatprep.subr.mxu0 0.0
        %936 = vmatpush1.msra.mxu0 0.0
        %937 = vmatprep.subr.mxu0 0.0
        %938 = vmatpush1.msra.mxu0 0.0
        %939 = vmatprep.subr.mxu0 0.0
        %940 = vmatpush1.msra.mxu0 0.0
        %941 = vmatprep.subr.mxu0 0.0
        %942 = vmatpush1.msra.mxu0 0.0
        %943 = vmatprep.subr.mxu0 0.0
        %944 = vmatpush1.msra.mxu0 0.0
        %945 = vmatprep.subr.mxu0 0.0
        %946 = vmatpush1.msra.mxu0 0.0
        %947 = vmatprep.subr.mxu0 0.0
        %948 = vmatpush1.msra.mxu0 0.0
        %949 = vmatprep.subr.mxu0 0.0
        %950 = vmatpush1.msra.mxu0 0.0
        %951 = vmatprep.subr.mxu0 0.0
        %952 = vmatpush1.msra.mxu0 0.0
        %953 = vmatprep.subr.mxu0 0.0
        %954 = vmatpush1.msra.mxu0 0.0
        %955 = vmatprep.subr.mxu0 0.0
        %956 = vmatpush1.msra.mxu0 0.0
        %957 = vmatprep.subr.mxu0 0.0
        %958 = vmatpush1.msra.mxu0 0.0
        %959 = vmatprep.subr.mxu0 0.0
        %960 = vmatpush1.msra.mxu0 0.0
        %961 = vmatprep.subr.mxu0 0.0
        %962 = vmatpush1.msra.mxu0 0.0
        %963 = vmatprep.subr.mxu0 0.0
        %964 = vmatpush1.msra.mxu0 0.0
        %965 = vmatprep.subr.mxu0 0.0
        %966 = vmatpush1.msra.mxu0 0.0
        %967 = vmatprep.subr.mxu0 0.0
        %968 = vmatpush1.msra.mxu0 0.0
        %969 = vmatprep.subr.mxu0 0.0
        %970 = vmatpush1.msra.mxu0 0.0
        %971 = vmatprep.subr.mxu0 0.0
        %972 = vmatpush1.msra.mxu0 0.0
        %973 = vmatprep.subr.mxu0 0.0
        %974 = vmatpush1.msra.mxu0 0.0
        %975 = vmatprep.subr.mxu0 0.0
        %976 = vmatpush1.msra.mxu0 0.0
        %977 = vmatprep.subr.mxu0 0.0
        %978 = vmatpush1.msra.mxu0 0.0
        %979 = vmatprep.mubr.f32.mxu0 0.0
        %980 = vmatmul.mubr.f32.gmra.mrb[0].mxu0 %v868
        %v981 = vpop.f32.mrb[0].mxu0
        %v982 = vadd.f32 %v864, %v981
        %v983 = vpop.f32.mrb[0].mxu0
        %984 = vmatprep.mubr.f32.mxu0 0.0
        %985 = vmatmul.mubr.f32.gmra.mrb[0].mxu0 %v871
        %v986 = vpop.f32.mrb[0].mxu0
        %v987 = vadd.f32 %v864, %v986
        %v988 = vpop.f32.mrb[0].mxu0
        %989 = vmatprep.mubr.f32.mxu0 0.0
        %990 = vmatmul.mubr.f32.gmra.mrb[0].mxu0 %v874
        %v991 = vpop.f32.mrb[0].mxu0
        %v992 = vadd.f32 %v864, %v991
        %v993 = vpop.f32.mrb[0].mxu0
        %994 = vmatprep.mubr.f32.mxu0 0.0
        %995 = vmatmul.mubr.f32.gmra.mrb[0].mxu0 %v877
        %v996 = vpop.f32.mrb[0].mxu0
        %v997 = vadd.f32 %v864, %v996
        %v998 = vpop.f32.mrb[0].mxu0
        %999 = vmatprep.mubr.f32.mxu0 0.0
        %1000 = vmatmul.mubr.f32.gmra.mrb[0].mxu0 %v880
        %v1001 = vpop.f32.mrb[0].mxu0
        %v1002 = vadd.f32 %v864, %v1001
        %v1003 = vpop.f32.mrb[0].mxu0
        %1004 = vmatprep.mubr.f32.mxu0 0.0
        %1005 = vmatmul.mubr.f32.gmra.mrb[0].mxu0 %v883
        %v1006 = vpop.f32.mrb[0].mxu0
        %v1007 = vadd.f32 %v864, %v1006
        %v1008 = vpop.f32.mrb[0].mxu0
        %1009 = vmatprep.mubr.f32.mxu0 0.0
        %1010 = vmatmul.mubr.f32.gmra.mrb[0].mxu0 %v886
        %v1011 = vpop.f32.mrb[0].mxu0
        %v1012 = vadd.f32 %v864, %v1011
        %v1013 = vpop.f32.mrb[0].mxu0
        %1014 = vmatprep.mubr.f32.mxu0 0.0
        %1015 = vmatmul.mubr.f32.gmra.mrb[0].mxu0 %v889
        %v1016 = vpop.f32.mrb[0].mxu0
        %v1017 = vadd.f32 %v864, %v1016
        %v1018 = vpop.f32.mrb[0].mxu0
        %1019 = vmatprep.mubr.f32.mxu0 0.0
        %1020 = vmatmul.mubr.f32.gmra.mrb[0].mxu0 %v892
        %v1021 = vpop.f32.mrb[0].mxu0
        %v1022 = vadd.f32 %v864, %v1021
        %v1023 = vpop.f32.mrb[0].mxu0
        %1024 = vmatprep.mubr.f32.mxu0 0.0
        %1025 = vmatmul.mubr.f32.gmra.mrb[0].mxu0 %v895
        %v1026 = vpop.f32.mrb[0].mxu0
        %v1027 = vadd.f32 %v864, %v1026
        %v1028 = vpop.f32.mrb[0].mxu0
        %1029 = vmatprep.mubr.f32.mxu0 0.0
        %1030 = vmatmul.mubr.f32.gmra.mrb[0].mxu0 %v898
        %v1031 = vpop.f32.mrb[0].mxu0
        %v1032 = vadd.f32 %v864, %v1031
        %v1033 = vpop.f32.mrb[0].mxu0
        %1034 = vmatprep.mubr.f32.mxu0 0.0
        %1035 = vmatmul.mubr.f32.gmra.mrb[0].mxu0 %v901
        %v1036 = vpop.f32.mrb[0].mxu0
        %v1037 = vadd.f32 %v864, %v1036
        %v1038 = vpop.f32.mrb[0].mxu0
        %1039 = vmatprep.mubr.f32.mxu0 0.0
        %1040 = vmatmul.mubr.f32.gmra.mrb[0].mxu0 %v904
        %v1041 = vpop.f32.mrb[0].mxu0
        %v1042 = vadd.f32 %v864, %v1041
        %v1043 = vpop.f32.mrb[0].mxu0
        %1044 = vmatprep.mubr.f32.mxu0 0.0
        %1045 = vmatmul.mubr.f32.gmra.mrb[0].mxu0 %v907
        %v1046 = vpop.f32.mrb[0].mxu0
        %v1047 = vadd.f32 %v864, %v1046
        %v1048 = vpop.f32.mrb[0].mxu0
        %1049 = vmatprep.mubr.f32.mxu0 0.0
        %1050 = vmatmul.mubr.f32.gmra.mrb[0].mxu0 %v910
        %v1051 = vpop.f32.mrb[0].mxu0
        %v1052 = vadd.f32 %v864, %v1051
        %v1053 = vpop.f32.mrb[0].mxu0
        %1054 = vmatprep.mubr.f32.mxu0 0.0
        %1055 = vmatmul.mubr.f32.gmra.mrb[0].mxu0 %v913
        %v1056 = vpop.f32.mrb[0].mxu0
        %v1057 = vadd.f32 %v864, %v1056
        %v1058 = vpop.f32.mrb[0].mxu0
        %1059 = vdwg.mxu0
        %v1060 = vmax.f32 %v982, 0.0
        %v1061 = vmax.f32 %v987, 0.0
        %v1062 = vmax.f32 %v992, 0.0
        %v1063 = vmax.f32 %v997, 0.0
        %v1064 = vmax.f32 %v1002, 0.0
        %v1065 = vmax.f32 %v1007, 0.0
        %v1066 = vmax.f32 %v1012, 0.0
        %v1067 = vmax.f32 %v1017, 0.0
        %v1068 = vmax.f32 %v1022, 0.0
        %v1069 = vmax.f32 %v1027, 0.0
        %v1070 = vmax.f32 %v1032, 0.0
        %v1071 = vmax.f32 %v1037, 0.0
        %v1072 = vmax.f32 %v1042, 0.0
        %v1073 = vmax.f32 %v1047, 0.0
        %v1074 = vmax.f32 %v1052, 0.0
        %v1075 = vmax.f32 %v1057, 0.0
        %v1076 = vld [vmem:[%s8] sm:$0xff]
        %v1077 = vld [vmem:[%s8 + $0x8] sm:$0xff]
        %v1078 = vld [vmem:[%s8 + $0x10] sm:$0xff]
        %v1079 = vld [vmem:[%s8 + $0x18] sm:$0xff]
        %v1080 = vld [vmem:[%s8 + $0x20] sm:$0xff]
        %v1081 = vld [vmem:[%s8 + $0x28] sm:$0xff]
        %v1082 = vld [vmem:[%s8 + $0x30] sm:$0xff]
        %v1083 = vld [vmem:[%s8 + $0x38] sm:$0xff]
        %v1084 = vld [vmem:[%s8 + $0x40] sm:$0xff]
        %v1085 = vld [vmem:[%s8 + $0x48] sm:$0xff]
        %v1086 = vld [vmem:[%s8 + $0x50] sm:$0xff]
        %v1087 = vld [vmem:[%s8 + $0x58] sm:$0xff]
        %v1088 = vld [vmem:[%s8 + $0x60] sm:$0xff]
        %v1089 = vld [vmem:[%s8 + $0x68] sm:$0xff]
        %v1090 = vld [vmem:[%s8 + $0x70] sm:$0xff]
        %v1091 = vld [vmem:[%s8 + $0x78] sm:$0xff]
        %v1092 = vld [vmem:[%s9] sm:$0x1]
        %v1094 = vlaneseq
        %v1095 = vshrl.u32 %v1094, 7
        %v1096 = vsub.s32 0, %v1095
        %v1097 = vrot.slane %v1092, %v1096
        %1099 = vmatprep.subr.mxu0 0.0
        %1100 = vmatpush1.msra.mxu0 %v1076
        %1101 = vmatprep.subr.mxu0 0.0
        %1102 = vmatpush1.msra.mxu0 %v1077
        %1103 = vmatprep.subr.mxu0 0.0
        %1104 = vmatpush1.msra.mxu0 %v1078
        %1105 = vmatprep.subr.mxu0 0.0
        %1106 = vmatpush1.msra.mxu0 %v1079
        %1107 = vmatprep.subr.mxu0 0.0
        %1108 = vmatpush1.msra.mxu0 %v1080
        %1109 = vmatprep.subr.mxu0 0.0
        %1110 = vmatpush1.msra.mxu0 %v1081
        %1111 = vmatprep.subr.mxu0 0.0
        %1112 = vmatpush1.msra.mxu0 %v1082
        %1113 = vmatprep.subr.mxu0 0.0
        %1114 = vmatpush1.msra.mxu0 %v1083
        %1115 = vmatprep.subr.mxu0 0.0
        %1116 = vmatpush1.msra.mxu0 %v1084
        %1117 = vmatprep.subr.mxu0 0.0
        %1118 = vmatpush1.msra.mxu0 %v1085
        %1119 = vmatprep.subr.mxu0 0.0
        %1120 = vmatpush1.msra.mxu0 %v1086
        %1121 = vmatprep.subr.mxu0 0.0
        %1122 = vmatpush1.msra.mxu0 %v1087
        %1123 = vmatprep.subr.mxu0 0.0
        %1124 = vmatpush1.msra.mxu0 %v1088
        %1125 = vmatprep.subr.mxu0 0.0
        %1126 = vmatpush1.msra.mxu0 %v1089
        %1127 = vmatprep.subr.mxu0 0.0
        %1128 = vmatpush1.msra.mxu0 %v1090
        %1129 = vmatprep.subr.mxu0 0.0
        %1130 = vmatpush1.msra.mxu0 %v1091
        %1131 = vmatprep.subr.mxu0 0.0
        %1132 = vmatpush1.msra.mxu0 0.0
        %1133 = vmatprep.subr.mxu0 0.0
        %1134 = vmatpush1.msra.mxu0 0.0
        %1135 = vmatprep.subr.mxu0 0.0
        %1136 = vmatpush1.msra.mxu0 0.0
        %1137 = vmatprep.subr.mxu0 0.0
        %1138 = vmatpush1.msra.mxu0 0.0
        %1139 = vmatprep.subr.mxu0 0.0
        %1140 = vmatpush1.msra.mxu0 0.0
        %1141 = vmatprep.subr.mxu0 0.0
        %1142 = vmatpush1.msra.mxu0 0.0
        %1143 = vmatprep.subr.mxu0 0.0
        %1144 = vmatpush1.msra.mxu0 0.0
        %1145 = vmatprep.subr.mxu0 0.0
        %1146 = vmatpush1.msra.mxu0 0.0
        %1147 = vmatprep.subr.mxu0 0.0
        %1148 = vmatpush1.msra.mxu0 0.0
        %1149 = vmatprep.subr.mxu0 0.0
        %1150 = vmatpush1.msra.mxu0 0.0
        %1151 = vmatprep.subr.mxu0 0.0
        %1152 = vmatpush1.msra.mxu0 0.0
        %1153 = vmatprep.subr.mxu0 0.0
        %1154 = vmatpush1.msra.mxu0 0.0
        %1155 = vmatprep.subr.mxu0 0.0
        %1156 = vmatpush1.msra.mxu0 0.0
        %1157 = vmatprep.subr.mxu0 0.0
        %1158 = vmatpush1.msra.mxu0 0.0
        %1159 = vmatprep.subr.mxu0 0.0
        %1160 = vmatpush1.msra.mxu0 0.0
        %1161 = vmatprep.subr.mxu0 0.0
        %1162 = vmatpush1.msra.mxu0 0.0
        %1163 = vmatprep.mubr.f32.mxu0 0.0
        %1164 = vmatmul.mubr.f32.gmra.mrb[0].mxu0 %v1060
        %v1165 = vpop.f32.mrb[0].mxu0
        %v1166 = vadd.f32 %v1097, %v1165
        %v1167 = vpop.f32.mrb[0].mxu0
        %1168 = vmatprep.mubr.f32.mxu0 0.0
        %1169 = vmatmul.mubr.f32.gmra.mrb[0].mxu0 %v1061
        %v1170 = vpop.f32.mrb[0].mxu0
        %v1171 = vadd.f32 %v1097, %v1170
        %v1172 = vpop.f32.mrb[0].mxu0
        %1173 = vmatprep.mubr.f32.mxu0 0.0
        %1174 = vmatmul.mubr.f32.gmra.mrb[0].mxu0 %v1062
        %v1175 = vpop.f32.mrb[0].mxu0
        %v1176 = vadd.f32 %v1097, %v1175
        %v1177 = vpop.f32.mrb[0].mxu0
        %1178 = vmatprep.mubr.f32.mxu0 0.0
        %1179 = vmatmul.mubr.f32.gmra.mrb[0].mxu0 %v1063
        %v1180 = vpop.f32.mrb[0].mxu0
        %v1181 = vadd.f32 %v1097, %v1180
        %v1182 = vpop.f32.mrb[0].mxu0
        %1183 = vmatprep.mubr.f32.mxu0 0.0
        %1184 = vmatmul.mubr.f32.gmra.mrb[0].mxu0 %v1064
        %v1185 = vpop.f32.mrb[0].mxu0
        %v1186 = vadd.f32 %v1097, %v1185
        %v1187 = vpop.f32.mrb[0].mxu0
        %1188 = vmatprep.mubr.f32.mxu0 0.0
        %1189 = vmatmul.mubr.f32.gmra.mrb[0].mxu0 %v1065
        %v1190 = vpop.f32.mrb[0].mxu0
        %v1191 = vadd.f32 %v1097, %v1190
        %v1192 = vpop.f32.mrb[0].mxu0
        %1193 = vmatprep.mubr.f32.mxu0 0.0
        %1194 = vmatmul.mubr.f32.gmra.mrb[0].mxu0 %v1066
        %v1195 = vpop.f32.mrb[0].mxu0
        %v1196 = vadd.f32 %v1097, %v1195
        %v1197 = vpop.f32.mrb[0].mxu0
        %1198 = vmatprep.mubr.f32.mxu0 0.0
        %1199 = vmatmul.mubr.f32.gmra.mrb[0].mxu0 %v1067
        %v1200 = vpop.f32.mrb[0].mxu0
        %v1201 = vadd.f32 %v1097, %v1200
        %v1202 = vpop.f32.mrb[0].mxu0
        %1203 = vmatprep.mubr.f32.mxu0 0.0
        %1204 = vmatmul.mubr.f32.gmra.mrb[0].mxu0 %v1068
        %v1205 = vpop.f32.mrb[0].mxu0
        %v1206 = vadd.f32 %v1097, %v1205
        %v1207 = vpop.f32.mrb[0].mxu0
        %1208 = vmatprep.mubr.f32.mxu0 0.0
        %1209 = vmatmul.mubr.f32.gmra.mrb[0].mxu0 %v1069
        %v1210 = vpop.f32.mrb[0].mxu0
        %v1211 = vadd.f32 %v1097, %v1210
        %v1212 = vpop.f32.mrb[0].mxu0
        %1213 = vmatprep.mubr.f32.mxu0 0.0
        %1214 = vmatmul.mubr.f32.gmra.mrb[0].mxu0 %v1070
        %v1215 = vpop.f32.mrb[0].mxu0
        %v1216 = vadd.f32 %v1097, %v1215
        %v1217 = vpop.f32.mrb[0].mxu0
        %1218 = vmatprep.mubr.f32.mxu0 0.0
        %1219 = vmatmul.mubr.f32.gmra.mrb[0].mxu0 %v1071
        %v1220 = vpop.f32.mrb[0].mxu0
        %v1221 = vadd.f32 %v1097, %v1220
        %v1222 = vpop.f32.mrb[0].mxu0
        %1223 = vmatprep.mubr.f32.mxu0 0.0
        %1224 = vmatmul.mubr.f32.gmra.mrb[0].mxu0 %v1072
        %v1225 = vpop.f32.mrb[0].mxu0
        %v1226 = vadd.f32 %v1097, %v1225
        %v1227 = vpop.f32.mrb[0].mxu0
        %1228 = vmatprep.mubr.f32.mxu0 0.0
        %1229 = vmatmul.mubr.f32.gmra.mrb[0].mxu0 %v1073
        %v1230 = vpop.f32.mrb[0].mxu0
        %v1231 = vadd.f32 %v1097, %v1230
        %v1232 = vpop.f32.mrb[0].mxu0
        %1233 = vmatprep.mubr.f32.mxu0 0.0
        %1234 = vmatmul.mubr.f32.gmra.mrb[0].mxu0 %v1074
        %v1235 = vpop.f32.mrb[0].mxu0
        %v1236 = vadd.f32 %v1097, %v1235
        %v1237 = vpop.f32.mrb[0].mxu0
        %1238 = vmatprep.mubr.f32.mxu0 0.0
        %1239 = vmatmul.mubr.f32.gmra.mrb[0].mxu0 %v1075
        %v1240 = vpop.f32.mrb[0].mxu0
        %v1241 = vadd.f32 %v1097, %v1240
        %v1242 = vpop.f32.mrb[0].mxu0
        %1243 = vdwg.mxu0
        %v1244 = vld [vmem:[%s669] sm:$0xf]
        %v1245 = vld [vmem:[%s669 + $0x4] sm:$0xf]
        %v1246 = vld [vmem:[%s669 + $0x8] sm:$0xf]
        %v1247 = vld [vmem:[%s669 + $0xc] sm:$0xf]
        %v1248 = vld [vmem:[%s669 + $0x10] sm:$0xf]
        %v1249 = vld [vmem:[%s669 + $0x14] sm:$0xf]
        %v1250 = vld [vmem:[%s669 + $0x18] sm:$0xf]
        %v1251 = vld [vmem:[%s669 + $0x1c] sm:$0xf]
        %v1252 = vld [vmem:[%s669 + $0x20] sm:$0xf]
        %v1253 = vld [vmem:[%s669 + $0x24] sm:$0xf]
        %v1254 = vld [vmem:[%s669 + $0x28] sm:$0xf]
        %v1255 = vld [vmem:[%s669 + $0x2c] sm:$0xf]
        %v1256 = vld [vmem:[%s669 + $0x30] sm:$0xf]
        %v1257 = vld [vmem:[%s669 + $0x34] sm:$0xf]
        %v1258 = vld [vmem:[%s669 + $0x38] sm:$0xf]
        %v1259 = vld [vmem:[%s669 + $0x3c] sm:$0xf]
        %v1260 = vunpack.c.l.bf16 %v1244
        %v1261 = vunpack.c.l.bf16 %v1245
        %v1262 = vunpack.c.l.bf16 %v1246
        %v1263 = vunpack.c.l.bf16 %v1247
        %v1264 = vunpack.c.l.bf16 %v1248
        %v1265 = vunpack.c.l.bf16 %v1249
        %v1266 = vunpack.c.l.bf16 %v1250
        %v1267 = vunpack.c.l.bf16 %v1251
        %v1268 = vunpack.c.l.bf16 %v1252
        %v1269 = vunpack.c.l.bf16 %v1253
        %v1270 = vunpack.c.l.bf16 %v1254
        %v1271 = vunpack.c.l.bf16 %v1255
        %v1272 = vunpack.c.l.bf16 %v1256
        %v1273 = vunpack.c.l.bf16 %v1257
        %v1274 = vunpack.c.l.bf16 %v1258
        %v1275 = vunpack.c.l.bf16 %v1259
        %v1276 = vld [vmem:[#allocation2] sm:$0xff]
        %v1277 = vld [vmem:[#allocation2 + $0x8] sm:$0xff]
        %v1278 = vld [vmem:[#allocation2 + $0x10] sm:$0xff]
        %v1279 = vld [vmem:[#allocation2 + $0x18] sm:$0xff]
        %v1280 = vld [vmem:[#allocation2 + $0x20] sm:$0xff]
        %v1281 = vld [vmem:[#allocation2 + $0x28] sm:$0xff]
        %v1282 = vld [vmem:[#allocation2 + $0x30] sm:$0xff]
        %v1283 = vld [vmem:[#allocation2 + $0x38] sm:$0xff]
        %vm1284 = vcmask 523264
        %v1286 = vsel %vm1284, %v1260, 0
        %v1289 = vsel %vm1284, %v1261, 0
        %v1292 = vsel %vm1284, %v1262, 0
        %v1295 = vsel %vm1284, %v1263, 0
        %v1298 = vsel %vm1284, %v1264, 0
        %v1301 = vsel %vm1284, %v1265, 0
        %v1304 = vsel %vm1284, %v1266, 0
        %v1307 = vsel %vm1284, %v1267, 0
        %v1310 = vsel %vm1284, %v1268, 0
        %v1313 = vsel %vm1284, %v1269, 0
        %v1316 = vsel %vm1284, %v1270, 0
        %v1319 = vsel %vm1284, %v1271, 0
        %v1322 = vsel %vm1284, %v1272, 0
        %v1325 = vsel %vm1284, %v1273, 0
        %v1328 = vsel %vm1284, %v1274, 0
        %v1331 = vsel %vm1284, %v1275, 0
        %1333 = vmatprep.subr.mxu0 0.0
        %1334 = vmatpush1.msra.mxu0 %v1276
        %1335 = vmatprep.subr.mxu0 0.0
        %1336 = vmatpush1.msra.mxu0 %v1277
        %1337 = vmatprep.subr.mxu0 0.0
        %1338 = vmatpush1.msra.mxu0 %v1278
        %1339 = vmatprep.subr.mxu0 0.0
        %1340 = vmatpush1.msra.mxu0 %v1279
        %1341 = vmatprep.subr.mxu0 0.0
        %1342 = vmatpush1.msra.mxu0 %v1280
        %1343 = vmatprep.subr.mxu0 0.0
        %1344 = vmatpush1.msra.mxu0 %v1281
        %1345 = vmatprep.subr.mxu0 0.0
        %1346 = vmatpush1.msra.mxu0 %v1282
        %1347 = vmatprep.subr.mxu0 0.0
        %1348 = vmatpush1.msra.mxu0 %v1283
        %1349 = vmatprep.subr.mxu0 0.0
        %1350 = vmatpush1.msra.mxu0 0.0
        %1351 = vmatprep.subr.mxu0 0.0
        %1352 = vmatpush1.msra.mxu0 0.0
        %1353 = vmatprep.subr.mxu0 0.0
        %1354 = vmatpush1.msra.mxu0 0.0
        %1355 = vmatprep.subr.mxu0 0.0
        %1356 = vmatpush1.msra.mxu0 0.0
        %1357 = vmatprep.subr.mxu0 0.0
        %1358 = vmatpush1.msra.mxu0 0.0
        %1359 = vmatprep.subr.mxu0 0.0
        %1360 = vmatpush1.msra.mxu0 0.0
        %1361 = vmatprep.subr.mxu0 0.0
        %1362 = vmatpush1.msra.mxu0 0.0
        %1363 = vmatprep.subr.mxu0 0.0
        %1364 = vmatpush1.msra.mxu0 0.0
        %1365 = vmatprep.subr.mxu0 0.0
        %1366 = vmatpush1.msra.mxu0 0.0
        %1367 = vmatprep.subr.mxu0 0.0
        %1368 = vmatpush1.msra.mxu0 0.0
        %1369 = vmatprep.subr.mxu0 0.0
        %1370 = vmatpush1.msra.mxu0 0.0
        %1371 = vmatprep.subr.mxu0 0.0
        %1372 = vmatpush1.msra.mxu0 0.0
        %1373 = vmatprep.subr.mxu0 0.0
        %1374 = vmatpush1.msra.mxu0 0.0
        %1375 = vmatprep.subr.mxu0 0.0
        %1376 = vmatpush1.msra.mxu0 0.0
        %1377 = vmatprep.subr.mxu0 0.0
        %1378 = vmatpush1.msra.mxu0 0.0
        %1379 = vmatprep.subr.mxu0 0.0
        %1380 = vmatpush1.msra.mxu0 0.0
        %1381 = vmatprep.subr.mxu0 0.0
        %1382 = vmatpush1.msra.mxu0 0.0
        %1383 = vmatprep.subr.mxu0 0.0
        %1384 = vmatpush1.msra.mxu0 0.0
        %1385 = vmatprep.subr.mxu0 0.0
        %1386 = vmatpush1.msra.mxu0 0.0
        %1387 = vmatprep.subr.mxu0 0.0
        %1388 = vmatpush1.msra.mxu0 0.0
        %1389 = vmatprep.subr.mxu0 0.0
        %1390 = vmatpush1.msra.mxu0 0.0
        %1391 = vmatprep.subr.mxu0 0.0
        %1392 = vmatpush1.msra.mxu0 0.0
        %1393 = vmatprep.subr.mxu0 0.0
        %1394 = vmatpush1.msra.mxu0 0.0
        %1395 = vmatprep.subr.mxu0 0.0
        %1396 = vmatpush1.msra.mxu0 0.0
        %1397 = vmatprep.mubr.f32.mxu0 0.0
        %1398 = vmatmul.mubr.f32.gmra.mrb[0].mxu0 %v1286
        %v1399 = vpop.f32.mrb[0].mxu0
        %v1400 = vadd.f32 %v1166, %v1399
        %v1401 = vpop.f32.mrb[0].mxu0
        %1402 = vmatprep.mubr.f32.mxu0 0.0
        %1403 = vmatmul.mubr.f32.gmra.mrb[0].mxu0 %v1289
        %v1404 = vpop.f32.mrb[0].mxu0
        %v1405 = vadd.f32 %v1171, %v1404
        %v1406 = vpop.f32.mrb[0].mxu0
        %1407 = vmatprep.mubr.f32.mxu0 0.0
        %1408 = vmatmul.mubr.f32.gmra.mrb[0].mxu0 %v1292
        %v1409 = vpop.f32.mrb[0].mxu0
        %v1410 = vadd.f32 %v1176, %v1409
        %v1411 = vpop.f32.mrb[0].mxu0
        %1412 = vmatprep.mubr.f32.mxu0 0.0
        %1413 = vmatmul.mubr.f32.gmra.mrb[0].mxu0 %v1295
        %v1414 = vpop.f32.mrb[0].mxu0
        %v1415 = vadd.f32 %v1181, %v1414
        %v1416 = vpop.f32.mrb[0].mxu0
        %1417 = vmatprep.mubr.f32.mxu0 0.0
        %1418 = vmatmul.mubr.f32.gmra.mrb[0].mxu0 %v1298
        %v1419 = vpop.f32.mrb[0].mxu0
        %v1420 = vadd.f32 %v1186, %v1419
        %v1421 = vpop.f32.mrb[0].mxu0
        %1422 = vmatprep.mubr.f32.mxu0 0.0
        %1423 = vmatmul.mubr.f32.gmra.mrb[0].mxu0 %v1301
        %v1424 = vpop.f32.mrb[0].mxu0
        %v1425 = vadd.f32 %v1191, %v1424
        %v1426 = vpop.f32.mrb[0].mxu0
        %1427 = vmatprep.mubr.f32.mxu0 0.0
        %1428 = vmatmul.mubr.f32.gmra.mrb[0].mxu0 %v1304
        %v1429 = vpop.f32.mrb[0].mxu0
        %v1430 = vadd.f32 %v1196, %v1429
        %v1431 = vpop.f32.mrb[0].mxu0
        %1432 = vmatprep.mubr.f32.mxu0 0.0
        %1433 = vmatmul.mubr.f32.gmra.mrb[0].mxu0 %v1307
        %v1434 = vpop.f32.mrb[0].mxu0
        %v1435 = vadd.f32 %v1201, %v1434
        %v1436 = vpop.f32.mrb[0].mxu0
        %1437 = vmatprep.mubr.f32.mxu0 0.0
        %1438 = vmatmul.mubr.f32.gmra.mrb[0].mxu0 %v1310
        %v1439 = vpop.f32.mrb[0].mxu0
        %v1440 = vadd.f32 %v1206, %v1439
        %v1441 = vpop.f32.mrb[0].mxu0
        %1442 = vmatprep.mubr.f32.mxu0 0.0
        %1443 = vmatmul.mubr.f32.gmra.mrb[0].mxu0 %v1313
        %v1444 = vpop.f32.mrb[0].mxu0
        %v1445 = vadd.f32 %v1211, %v1444
        %v1446 = vpop.f32.mrb[0].mxu0
        %1447 = vmatprep.mubr.f32.mxu0 0.0
        %1448 = vmatmul.mubr.f32.gmra.mrb[0].mxu0 %v1316
        %v1449 = vpop.f32.mrb[0].mxu0
        %v1450 = vadd.f32 %v1216, %v1449
        %v1451 = vpop.f32.mrb[0].mxu0
        %1452 = vmatprep.mubr.f32.mxu0 0.0
        %1453 = vmatmul.mubr.f32.gmra.mrb[0].mxu0 %v1319
        %v1454 = vpop.f32.mrb[0].mxu0
        %v1455 = vadd.f32 %v1221, %v1454
        %v1456 = vpop.f32.mrb[0].mxu0
        %1457 = vmatprep.mubr.f32.mxu0 0.0
        %1458 = vmatmul.mubr.f32.gmra.mrb[0].mxu0 %v1322
        %v1459 = vpop.f32.mrb[0].mxu0
        %v1460 = vadd.f32 %v1226, %v1459
        %v1461 = vpop.f32.mrb[0].mxu0
        %1462 = vmatprep.mubr.f32.mxu0 0.0
        %1463 = vmatmul.mubr.f32.gmra.mrb[0].mxu0 %v1325
        %v1464 = vpop.f32.mrb[0].mxu0
        %v1465 = vadd.f32 %v1231, %v1464
        %v1466 = vpop.f32.mrb[0].mxu0
        %1467 = vmatprep.mubr.f32.mxu0 0.0
        %1468 = vmatmul.mubr.f32.gmra.mrb[0].mxu0 %v1328
        %v1469 = vpop.f32.mrb[0].mxu0
        %v1470 = vadd.f32 %v1236, %v1469
        %v1471 = vpop.f32.mrb[0].mxu0
        %1472 = vmatprep.mubr.f32.mxu0 0.0
        %1473 = vmatmul.mubr.f32.gmra.mrb[0].mxu0 %v1331
        %v1474 = vpop.f32.mrb[0].mxu0
        %v1475 = vadd.f32 %v1241, %v1474
        %v1476 = vpop.f32.mrb[0].mxu0
        %1477 = vdwg.mxu0
        %v1478 = vld [vmem:[%s10] sm:$0x1]
        %v1480 = vlaneseq
        %v1481 = vshrl.u32 %v1480, 7
        %v1482 = vsub.s32 0, %v1481
        %v1483 = vrot.slane %v1478, %v1482
        %v1485 = vmul.f32 %v1400, %v1483
        %v1486 = vmul.f32 %v1405, %v1483
        %v1487 = vmul.f32 %v1410, %v1483
        %v1488 = vmul.f32 %v1415, %v1483
        %v1489 = vmul.f32 %v1420, %v1483
        %v1490 = vmul.f32 %v1425, %v1483
        %v1491 = vmul.f32 %v1430, %v1483
        %v1492 = vmul.f32 %v1435, %v1483
        %v1493 = vmul.f32 %v1440, %v1483
        %v1494 = vmul.f32 %v1445, %v1483
        %v1495 = vmul.f32 %v1450, %v1483
        %v1496 = vmul.f32 %v1455, %v1483
        %v1497 = vmul.f32 %v1460, %v1483
        %v1498 = vmul.f32 %v1465, %v1483
        %v1499 = vmul.f32 %v1470, %v1483
        %v1500 = vmul.f32 %v1475, %v1483
        %1501 = vadd.xlane.f32.xlu0 %v1485
        %v1502 = vpop.xlane.xlu0 %1501
        %1503 = vadd.xlane.f32.xlu0 %v1486
        %v1504 = vpop.xlane.xlu0 %1503
        %1505 = vadd.xlane.f32.xlu0 %v1487
        %v1506 = vpop.xlane.xlu0 %1505
        %1507 = vadd.xlane.f32.xlu0 %v1488
        %v1508 = vpop.xlane.xlu0 %1507
        %1509 = vadd.xlane.f32.xlu0 %v1489
        %v1510 = vpop.xlane.xlu0 %1509
        %1511 = vadd.xlane.f32.xlu0 %v1490
        %v1512 = vpop.xlane.xlu0 %1511
        %1513 = vadd.xlane.f32.xlu0 %v1491
        %v1514 = vpop.xlane.xlu0 %1513
        %1515 = vadd.xlane.f32.xlu0 %v1492
        %v1516 = vpop.xlane.xlu0 %1515
        %1517 = vadd.xlane.f32.xlu0 %v1493
        %v1518 = vpop.xlane.xlu0 %1517
        %1519 = vadd.xlane.f32.xlu0 %v1494
        %v1520 = vpop.xlane.xlu0 %1519
        %1521 = vadd.xlane.f32.xlu0 %v1495
        %v1522 = vpop.xlane.xlu0 %1521
        %1523 = vadd.xlane.f32.xlu0 %v1496
        %v1524 = vpop.xlane.xlu0 %1523
        %1525 = vadd.xlane.f32.xlu0 %v1497
        %v1526 = vpop.xlane.xlu0 %1525
        %1527 = vadd.xlane.f32.xlu0 %v1498
        %v1528 = vpop.xlane.xlu0 %1527
        %1529 = vadd.xlane.f32.xlu0 %v1499
        %v1530 = vpop.xlane.xlu0 %1529
        %1531 = vadd.xlane.f32.xlu0 %v1500
        %v1532 = vpop.xlane.xlu0 %1531
        %vm1533 = vcmp.ge.f32.partialorder %v1502, 0.0
        %vm1534 = vcmp.ge.f32.partialorder %v1504, 0.0
        %vm1535 = vcmp.ge.f32.partialorder %v1506, 0.0
        %vm1536 = vcmp.ge.f32.partialorder %v1508, 0.0
        %vm1537 = vcmp.ge.f32.partialorder %v1510, 0.0
        %vm1538 = vcmp.ge.f32.partialorder %v1512, 0.0
        %vm1539 = vcmp.ge.f32.partialorder %v1514, 0.0
        %vm1540 = vcmp.ge.f32.partialorder %v1516, 0.0
        %vm1541 = vcmp.ge.f32.partialorder %v1518, 0.0
        %vm1542 = vcmp.ge.f32.partialorder %v1520, 0.0
        %vm1543 = vcmp.ge.f32.partialorder %v1522, 0.0
        %vm1544 = vcmp.ge.f32.partialorder %v1524, 0.0
        %vm1545 = vcmp.ge.f32.partialorder %v1526, 0.0
        %vm1546 = vcmp.ge.f32.partialorder %v1528, 0.0
        %vm1547 = vcmp.ge.f32.partialorder %v1530, 0.0
        %vm1548 = vcmp.ge.f32.partialorder %v1532, 0.0
        %v1549 = vmul.f32 %v1502, 0.2
        %v1550 = vmul.f32 %v1504, 0.2
        %v1551 = vmul.f32 %v1506, 0.2
        %v1552 = vmul.f32 %v1508, 0.2
        %v1553 = vmul.f32 %v1510, 0.2
        %v1554 = vmul.f32 %v1512, 0.2
        %v1555 = vmul.f32 %v1514, 0.2
        %v1556 = vmul.f32 %v1516, 0.2
        %v1557 = vmul.f32 %v1518, 0.2
        %v1558 = vmul.f32 %v1520, 0.2
        %v1559 = vmul.f32 %v1522, 0.2
        %v1560 = vmul.f32 %v1524, 0.2
        %v1561 = vmul.f32 %v1526, 0.2
        %v1562 = vmul.f32 %v1528, 0.2
        %v1563 = vmul.f32 %v1530, 0.2
        %v1564 = vmul.f32 %v1532, 0.2
        %v1565 = vsel %vm1533, %v1502, %v1549
        %v1566 = vsel %vm1534, %v1504, %v1550
        %v1567 = vsel %vm1535, %v1506, %v1551
        %v1568 = vsel %vm1536, %v1508, %v1552
        %v1569 = vsel %vm1537, %v1510, %v1553
        %v1570 = vsel %vm1538, %v1512, %v1554
        %v1571 = vsel %vm1539, %v1514, %v1555
        %v1572 = vsel %vm1540, %v1516, %v1556
        %v1573 = vsel %vm1541, %v1518, %v1557
        %v1574 = vsel %vm1542, %v1520, %v1558
        %v1575 = vsel %vm1543, %v1522, %v1559
        %v1576 = vsel %vm1544, %v1524, %v1560
        %v1577 = vsel %vm1545, %v1526, %v1561
        %v1578 = vsel %vm1546, %v1528, %v1562
        %v1579 = vsel %vm1547, %v1530, %v1563
        %v1580 = vsel %vm1548, %v1532, %v1564
        %v1581 = vlaneseq
        %v1582 = vshrl.u32 %v1581, 7
        %v1583 = vadd.s32 %v1582, 8
        %v1584 = vadd.s32 %v1582, 16
        %v1585 = vadd.s32 %v1582, 24
        %v1586 = vadd.s32 %v1582, 32
        %v1587 = vadd.s32 %v1582, 40
        %v1588 = vadd.s32 %v1582, 48
        %v1589 = vadd.s32 %v1582, 56
        %v1590 = vadd.s32 %v1582, 64
        %v1591 = vadd.s32 %v1582, 72
        %v1592 = vadd.s32 %v1582, 80
        %v1593 = vadd.s32 %v1582, 88
        %v1594 = vadd.s32 %v1582, 96
        %v1595 = vadd.s32 %v1582, 104
        %v1596 = vadd.s32 %v1582, 112
        %v1597 = vadd.s32 %v1582, 120
        %s1598 = smul.u32 %s32, 128
        %v1599 = vstv %s1598
        %v1600 = vadd.s32 %v1582, %v1599
        %v1601 = vadd.s32 %v1583, %v1599
        %v1602 = vadd.s32 %v1584, %v1599
        %v1603 = vadd.s32 %v1585, %v1599
        %v1604 = vadd.s32 %v1586, %v1599
        %v1605 = vadd.s32 %v1587, %v1599
        %v1606 = vadd.s32 %v1588, %v1599
        %v1607 = vadd.s32 %v1589, %v1599
        %v1608 = vadd.s32 %v1590, %v1599
        %v1609 = vadd.s32 %v1591, %v1599
        %v1610 = vadd.s32 %v1592, %v1599
        %v1611 = vadd.s32 %v1593, %v1599
        %v1612 = vadd.s32 %v1594, %v1599
        %v1613 = vadd.s32 %v1595, %v1599
        %v1614 = vadd.s32 %v1596, %v1599
        %v1615 = vadd.s32 %v1597, %v1599
        %vm1616 = vcmp.lt.s32.totalorder %v1600, 303
        %vm1617 = vcmp.lt.s32.totalorder %v1601, 303
        %vm1618 = vcmp.lt.s32.totalorder %v1602, 303
        %vm1619 = vcmp.lt.s32.totalorder %v1603, 303
        %vm1620 = vcmp.lt.s32.totalorder %v1604, 303
        %vm1621 = vcmp.lt.s32.totalorder %v1605, 303
        %vm1622 = vcmp.lt.s32.totalorder %v1606, 303
        %vm1623 = vcmp.lt.s32.totalorder %v1607, 303
        %vm1624 = vcmp.lt.s32.totalorder %v1608, 303
        %vm1625 = vcmp.lt.s32.totalorder %v1609, 303
        %vm1626 = vcmp.lt.s32.totalorder %v1610, 303
        %vm1627 = vcmp.lt.s32.totalorder %v1611, 303
        %vm1628 = vcmp.lt.s32.totalorder %v1612, 303
        %vm1629 = vcmp.lt.s32.totalorder %v1613, 303
        %vm1630 = vcmp.lt.s32.totalorder %v1614, 303
        %vm1631 = vcmp.lt.s32.totalorder %v1615, 303
        %v1632 = vsel %vm1616, %v1565, -1e+30
        %v1633 = vsel %vm1617, %v1566, -1e+30
        %v1634 = vsel %vm1618, %v1567, -1e+30
        %v1635 = vsel %vm1619, %v1568, -1e+30
        %v1636 = vsel %vm1620, %v1569, -1e+30
        %v1637 = vsel %vm1621, %v1570, -1e+30
        %v1638 = vsel %vm1622, %v1571, -1e+30
        %v1639 = vsel %vm1623, %v1572, -1e+30
        %v1640 = vsel %vm1624, %v1573, -1e+30
        %v1641 = vsel %vm1625, %v1574, -1e+30
        %v1642 = vsel %vm1626, %v1575, -1e+30
        %v1643 = vsel %vm1627, %v1576, -1e+30
        %v1644 = vsel %vm1628, %v1577, -1e+30
        %v1645 = vsel %vm1629, %v1578, -1e+30
        %v1646 = vsel %vm1630, %v1579, -1e+30
        %v1647 = vsel %vm1631, %v1580, -1e+30
        %v1648 = vld [vmem:[#allocation5] sm:$0x1]
        %v1649 = vmax.f32 %v1632, %v1636
        %v1650 = vmax.f32 %v1633, %v1637
        %v1651 = vmax.f32 %v1634, %v1638
        %v1652 = vmax.f32 %v1635, %v1639
        %v1653 = vmax.f32 %v1649, %v1640
        %v1654 = vmax.f32 %v1650, %v1641
        %v1655 = vmax.f32 %v1651, %v1642
        %v1656 = vmax.f32 %v1652, %v1643
        %v1657 = vmax.f32 %v1653, %v1644
        %v1658 = vmax.f32 %v1654, %v1645
        %v1659 = vmax.f32 %v1655, %v1646
        %v1660 = vmax.f32 %v1656, %v1647
        %v1661 = vmax.f32 %v1657, %v1658
        %v1662 = vmax.f32 %v1659, %v1660
        %v1663 = vmax.f32 %v1661, %v1662
        %v1664 = vrot.slane %v1663, 4
        %v1665 = vmax.f32 %v1663, %v1664
        %v1666 = vrot.slane %v1665, 2
        %v1667 = vmax.f32 %v1665, %v1666
        %v1668 = vrot.slane %v1667, 1
        %v1669 = vmax.f32 %v1667, %v1668
        %v1670 = vmax.f32 %v1648, %v1669
        %v1671 = vsub.f32 %v1648, %v1670
        %v1672 = vmul.f32 %v1671, 1.442695
        %v1673 = vpow.pop %v1672
        %v1675 = vlaneseq
        %v1676 = vshrl.u32 %v1675, 7
        %v1677 = vsub.s32 0, %v1676
        %v1678 = vrot.slane %v1670, %v1677
        %v1680 = vsub.f32 %v1632, %v1678
        %v1681 = vsub.f32 %v1633, %v1678
        %v1682 = vsub.f32 %v1634, %v1678
        %v1683 = vsub.f32 %v1635, %v1678
        %v1684 = vsub.f32 %v1636, %v1678
        %v1685 = vsub.f32 %v1637, %v1678
        %v1686 = vsub.f32 %v1638, %v1678
        %v1687 = vsub.f32 %v1639, %v1678
        %v1688 = vsub.f32 %v1640, %v1678
        %v1689 = vsub.f32 %v1641, %v1678
        %v1690 = vsub.f32 %v1642, %v1678
        %v1691 = vsub.f32 %v1643, %v1678
        %v1692 = vsub.f32 %v1644, %v1678
        %v1693 = vsub.f32 %v1645, %v1678
        %v1694 = vsub.f32 %v1646, %v1678
        %v1695 = vsub.f32 %v1647, %v1678
        %v1696 = vmul.f32 %v1680, 1.442695
        %v1697 = vpow.pop %v1696
        %v1698 = vmul.f32 %v1681, 1.442695
        %v1699 = vpow.pop %v1698
        %v1700 = vmul.f32 %v1682, 1.442695
        %v1701 = vpow.pop %v1700
        %v1702 = vmul.f32 %v1683, 1.442695
        %v1703 = vpow.pop %v1702
        %v1704 = vmul.f32 %v1684, 1.442695
        %v1705 = vpow.pop %v1704
        %v1706 = vmul.f32 %v1685, 1.442695
        %v1707 = vpow.pop %v1706
        %v1708 = vmul.f32 %v1686, 1.442695
        %v1709 = vpow.pop %v1708
        %v1710 = vmul.f32 %v1687, 1.442695
        %v1711 = vpow.pop %v1710
        %v1712 = vmul.f32 %v1688, 1.442695
        %v1713 = vpow.pop %v1712
        %v1714 = vmul.f32 %v1689, 1.442695
        %v1715 = vpow.pop %v1714
        %v1716 = vmul.f32 %v1690, 1.442695
        %v1717 = vpow.pop %v1716
        %v1718 = vmul.f32 %v1691, 1.442695
        %v1719 = vpow.pop %v1718
        %v1720 = vmul.f32 %v1692, 1.442695
        %v1721 = vpow.pop %v1720
        %v1722 = vmul.f32 %v1693, 1.442695
        %v1723 = vpow.pop %v1722
        %v1724 = vmul.f32 %v1694, 1.442695
        %v1725 = vpow.pop %v1724
        %v1726 = vmul.f32 %v1695, 1.442695
        %v1727 = vpow.pop %v1726
        %v1728 = vld [vmem:[%s603] sm:$0xf]
        %v1729 = vld [vmem:[%s603 + $0x4] sm:$0xf]
        %v1730 = vld [vmem:[%s603 + $0x8] sm:$0xf]
        %v1731 = vld [vmem:[%s603 + $0xc] sm:$0xf]
        %v1732 = vld [vmem:[%s603 + $0x10] sm:$0xf]
        %v1733 = vld [vmem:[%s603 + $0x14] sm:$0xf]
        %v1734 = vld [vmem:[%s603 + $0x18] sm:$0xf]
        %v1735 = vld [vmem:[%s603 + $0x1c] sm:$0xf]
        %v1736 = vunpack.c.l.bf16 %v1728
        %v1737 = vunpack.c.l.bf16 %v1729
        %v1738 = vunpack.c.l.bf16 %v1730
        %v1739 = vunpack.c.l.bf16 %v1731
        %v1740 = vunpack.c.l.bf16 %v1732
        %v1741 = vunpack.c.l.bf16 %v1733
        %v1742 = vunpack.c.l.bf16 %v1734
        %v1743 = vunpack.c.l.bf16 %v1735
        %v1744 = vld [vmem:[#allocation4] sm:$0xff]
        %v1745 = vld [vmem:[#allocation4 + $0x8] sm:$0xff]
        %v1746 = vld [vmem:[#allocation4 + $0x10] sm:$0xff]
        %v1747 = vld [vmem:[#allocation4 + $0x18] sm:$0xff]
        %v1748 = vld [vmem:[#allocation4 + $0x20] sm:$0xff]
        %v1749 = vld [vmem:[#allocation4 + $0x28] sm:$0xff]
        %v1750 = vld [vmem:[#allocation4 + $0x30] sm:$0xff]
        %v1751 = vld [vmem:[#allocation4 + $0x38] sm:$0xff]
        %v1753 = vlaneseq
        %v1754 = vshrl.u32 %v1753, 7
        %v1755 = vsub.s32 0, %v1754
        %v1756 = vrot.slane %v1673, %v1755
        %v1758 = vmul.f32 %v1756, %v1744
        %v1759 = vmul.f32 %v1756, %v1745
        %v1760 = vmul.f32 %v1756, %v1746
        %v1761 = vmul.f32 %v1756, %v1747
        %v1762 = vmul.f32 %v1756, %v1748
        %v1763 = vmul.f32 %v1756, %v1749
        %v1764 = vmul.f32 %v1756, %v1750
        %v1765 = vmul.f32 %v1756, %v1751
        %1766 = vmatprep.subr.mxu0 0.0
        %1767 = vmatpush1.msra.mxu0 %v1697
        %1768 = vmatprep.subr.mxu0 0.0
        %1769 = vmatpush1.msra.mxu0 %v1699
        %1770 = vmatprep.subr.mxu0 0.0
        %1771 = vmatpush1.msra.mxu0 %v1701
        %1772 = vmatprep.subr.mxu0 0.0
        %1773 = vmatpush1.msra.mxu0 %v1703
        %1774 = vmatprep.subr.mxu0 0.0
        %1775 = vmatpush1.msra.mxu0 %v1705
        %1776 = vmatprep.subr.mxu0 0.0
        %1777 = vmatpush1.msra.mxu0 %v1707
        %1778 = vmatprep.subr.mxu0 0.0
        %1779 = vmatpush1.msra.mxu0 %v1709
        %1780 = vmatprep.subr.mxu0 0.0
        %1781 = vmatpush1.msra.mxu0 %v1711
        %1782 = vmatprep.subr.mxu0 0.0
        %1783 = vmatpush1.msra.mxu0 %v1713
        %1784 = vmatprep.subr.mxu0 0.0
        %1785 = vmatpush1.msra.mxu0 %v1715
        %1786 = vmatprep.subr.mxu0 0.0
        %1787 = vmatpush1.msra.mxu0 %v1717
        %1788 = vmatprep.subr.mxu0 0.0
        %1789 = vmatpush1.msra.mxu0 %v1719
        %1790 = vmatprep.subr.mxu0 0.0
        %1791 = vmatpush1.msra.mxu0 %v1721
        %1792 = vmatprep.subr.mxu0 0.0
        %1793 = vmatpush1.msra.mxu0 %v1723
        %1794 = vmatprep.subr.mxu0 0.0
        %1795 = vmatpush1.msra.mxu0 %v1725
        %1796 = vmatprep.subr.mxu0 0.0
        %1797 = vmatpush1.msra.mxu0 %v1727
        %1798 = vmatprep.subr.mxu0 0.0
        %1799 = vmatpush1.msra.mxu0 0.0
        %1800 = vmatprep.subr.mxu0 0.0
        %1801 = vmatpush1.msra.mxu0 0.0
        %1802 = vmatprep.subr.mxu0 0.0
        %1803 = vmatpush1.msra.mxu0 0.0
        %1804 = vmatprep.subr.mxu0 0.0
        %1805 = vmatpush1.msra.mxu0 0.0
        %1806 = vmatprep.subr.mxu0 0.0
        %1807 = vmatpush1.msra.mxu0 0.0
        %1808 = vmatprep.subr.mxu0 0.0
        %1809 = vmatpush1.msra.mxu0 0.0
        %1810 = vmatprep.subr.mxu0 0.0
        %1811 = vmatpush1.msra.mxu0 0.0
        %1812 = vmatprep.subr.mxu0 0.0
        %1813 = vmatpush1.msra.mxu0 0.0
        %1814 = vmatprep.subr.mxu0 0.0
        %1815 = vmatpush1.msra.mxu0 0.0
        %1816 = vmatprep.subr.mxu0 0.0
        %1817 = vmatpush1.msra.mxu0 0.0
        %1818 = vmatprep.subr.mxu0 0.0
        %1819 = vmatpush1.msra.mxu0 0.0
        %1820 = vmatprep.subr.mxu0 0.0
        %1821 = vmatpush1.msra.mxu0 0.0
        %1822 = vmatprep.subr.mxu0 0.0
        %1823 = vmatpush1.msra.mxu0 0.0
        %1824 = vmatprep.subr.mxu0 0.0
        %1825 = vmatpush1.msra.mxu0 0.0
        %1826 = vmatprep.subr.mxu0 0.0
        %1827 = vmatpush1.msra.mxu0 0.0
        %1828 = vmatprep.subr.mxu0 0.0
        %1829 = vmatpush1.msra.mxu0 0.0
        %1830 = vmatprep.mubr.f32.mxu0 0.0
        %1831 = vmatmul.mubr.f32.gmra.mrb[0].mxu0 %v1736
        %v1832 = vpop.f32.mrb[0].mxu0
        %v1833 = vadd.f32 0.0, %v1832
        %v1834 = vpop.f32.mrb[0].mxu0
        %1835 = vmatprep.mubr.f32.mxu0 0.0
        %1836 = vmatmul.mubr.f32.gmra.mrb[0].mxu0 %v1737
        %v1837 = vpop.f32.mrb[0].mxu0
        %v1838 = vadd.f32 0.0, %v1837
        %v1839 = vpop.f32.mrb[0].mxu0
        %1840 = vmatprep.mubr.f32.mxu0 0.0
        %1841 = vmatmul.mubr.f32.gmra.mrb[0].mxu0 %v1738
        %v1842 = vpop.f32.mrb[0].mxu0
        %v1843 = vadd.f32 0.0, %v1842
        %v1844 = vpop.f32.mrb[0].mxu0
        %1845 = vmatprep.mubr.f32.mxu0 0.0
        %1846 = vmatmul.mubr.f32.gmra.mrb[0].mxu0 %v1739
        %v1847 = vpop.f32.mrb[0].mxu0
        %v1848 = vadd.f32 0.0, %v1847
        %v1849 = vpop.f32.mrb[0].mxu0
        %1850 = vmatprep.mubr.f32.mxu0 0.0
        %1851 = vmatmul.mubr.f32.gmra.mrb[0].mxu0 %v1740
        %v1852 = vpop.f32.mrb[0].mxu0
        %v1853 = vadd.f32 0.0, %v1852
        %v1854 = vpop.f32.mrb[0].mxu0
        %1855 = vmatprep.mubr.f32.mxu0 0.0
        %1856 = vmatmul.mubr.f32.gmra.mrb[0].mxu0 %v1741
        %v1857 = vpop.f32.mrb[0].mxu0
        %v1858 = vadd.f32 0.0, %v1857
        %v1859 = vpop.f32.mrb[0].mxu0
        %1860 = vmatprep.mubr.f32.mxu0 0.0
        %1861 = vmatmul.mubr.f32.gmra.mrb[0].mxu0 %v1742
        %v1862 = vpop.f32.mrb[0].mxu0
        %v1863 = vadd.f32 0.0, %v1862
        %v1864 = vpop.f32.mrb[0].mxu0
        %1865 = vmatprep.mubr.f32.mxu0 0.0
        %1866 = vmatmul.mubr.f32.gmra.mrb[0].mxu0 %v1743
        %v1867 = vpop.f32.mrb[0].mxu0
        %v1868 = vadd.f32 0.0, %v1867
        %v1869 = vpop.f32.mrb[0].mxu0
        %1870 = vdwg.mxu0
        %v1871 = vadd.f32 %v1758, %v1833
        %v1872 = vadd.f32 %v1759, %v1838
        %v1873 = vadd.f32 %v1760, %v1843
        %v1874 = vadd.f32 %v1761, %v1848
        %v1875 = vadd.f32 %v1762, %v1853
        %v1876 = vadd.f32 %v1763, %v1858
        %v1877 = vadd.f32 %v1764, %v1863
        %v1878 = vadd.f32 %v1765, %v1868
        %vm1879 = vcmask 7168
        %1880 = vst.msk [vmem:[#allocation4] sm:$0xff] %vm1879, %v1871
        %1881 = vst.msk [vmem:[#allocation4 + $0x8] sm:$0xff] %vm1879, %v1872
        %1882 = vst.msk [vmem:[#allocation4 + $0x10] sm:$0xff] %vm1879, %v1873
        %1883 = vst.msk [vmem:[#allocation4 + $0x18] sm:$0xff] %vm1879, %v1874
        %1884 = vst.msk [vmem:[#allocation4 + $0x20] sm:$0xff] %vm1879, %v1875
        %1885 = vst.msk [vmem:[#allocation4 + $0x28] sm:$0xff] %vm1879, %v1876
        %1886 = vst.msk [vmem:[#allocation4 + $0x30] sm:$0xff] %vm1879, %v1877
        %1887 = vst.msk [vmem:[#allocation4 + $0x38] sm:$0xff] %vm1879, %v1878
        %v1888 = vld [vmem:[#allocation3] sm:$0xff]
        %v1889 = vld [vmem:[#allocation3 + $0x8] sm:$0xff]
        %v1890 = vld [vmem:[#allocation3 + $0x10] sm:$0xff]
        %v1891 = vld [vmem:[#allocation3 + $0x18] sm:$0xff]
        %v1892 = vld [vmem:[#allocation3 + $0x20] sm:$0xff]
        %v1893 = vld [vmem:[#allocation3 + $0x28] sm:$0xff]
        %v1894 = vld [vmem:[#allocation3 + $0x30] sm:$0xff]
        %v1895 = vld [vmem:[#allocation3 + $0x38] sm:$0xff]
        %1896 = vset.pattern.permute.xlu0 0
        %1897 = vperm.xlu0 %1896, %v1756
        %v1898 = vpop.permute.xlu0 %1897
        %v1900 = vmul.f32 %v1898, %v1888
        %v1901 = vmul.f32 %v1898, %v1889
        %v1902 = vmul.f32 %v1898, %v1890
        %v1903 = vmul.f32 %v1898, %v1891
        %v1904 = vmul.f32 %v1898, %v1892
        %v1905 = vmul.f32 %v1898, %v1893
        %v1906 = vmul.f32 %v1898, %v1894
        %v1907 = vmul.f32 %v1898, %v1895
        %1909 = vset.pattern.permute.xlu0 0
        %1910 = vperm.xlu0 %1909, %v1697
        %v1911 = vpop.permute.xlu0 %1910
        %1914 = vset.pattern.permute.xlu0 0
        %1915 = vperm.xlu0 %1914, %v1699
        %v1916 = vpop.permute.xlu0 %1915
        %1919 = vset.pattern.permute.xlu0 0
        %1920 = vperm.xlu0 %1919, %v1701
        %v1921 = vpop.permute.xlu0 %1920
        %1924 = vset.pattern.permute.xlu0 0
        %1925 = vperm.xlu0 %1924, %v1703
        %v1926 = vpop.permute.xlu0 %1925
        %1929 = vset.pattern.permute.xlu0 0
        %1930 = vperm.xlu0 %1929, %v1705
        %v1931 = vpop.permute.xlu0 %1930
        %1934 = vset.pattern.permute.xlu0 0
        %1935 = vperm.xlu0 %1934, %v1707
        %v1936 = vpop.permute.xlu0 %1935
        %1939 = vset.pattern.permute.xlu0 0
        %1940 = vperm.xlu0 %1939, %v1709
        %v1941 = vpop.permute.xlu0 %1940
        %1944 = vset.pattern.permute.xlu0 0
        %1945 = vperm.xlu0 %1944, %v1711
        %v1946 = vpop.permute.xlu0 %1945
        %1949 = vset.pattern.permute.xlu0 0
        %1950 = vperm.xlu0 %1949, %v1713
        %v1951 = vpop.permute.xlu0 %1950
        %1954 = vset.pattern.permute.xlu0 0
        %1955 = vperm.xlu0 %1954, %v1715
        %v1956 = vpop.permute.xlu0 %1955
        %1959 = vset.pattern.permute.xlu0 0
        %1960 = vperm.xlu0 %1959, %v1717
        %v1961 = vpop.permute.xlu0 %1960
        %1964 = vset.pattern.permute.xlu0 0
        %1965 = vperm.xlu0 %1964, %v1719
        %v1966 = vpop.permute.xlu0 %1965
        %1969 = vset.pattern.permute.xlu0 0
        %1970 = vperm.xlu0 %1969, %v1721
        %v1971 = vpop.permute.xlu0 %1970
        %1974 = vset.pattern.permute.xlu0 0
        %1975 = vperm.xlu0 %1974, %v1723
        %v1976 = vpop.permute.xlu0 %1975
        %1979 = vset.pattern.permute.xlu0 0
        %1980 = vperm.xlu0 %1979, %v1725
        %v1981 = vpop.permute.xlu0 %1980
        %1984 = vset.pattern.permute.xlu0 0
        %1985 = vperm.xlu0 %1984, %v1727
        %v1986 = vpop.permute.xlu0 %1985
        %v1988 = vmul.f32 %v1400, %v1911
        %v1989 = vmul.f32 %v1405, %v1916
        %v1990 = vmul.f32 %v1410, %v1921
        %v1991 = vmul.f32 %v1415, %v1926
        %v1992 = vmul.f32 %v1420, %v1931
        %v1993 = vmul.f32 %v1425, %v1936
        %v1994 = vmul.f32 %v1430, %v1941
        %v1995 = vmul.f32 %v1435, %v1946
        %v1996 = vmul.f32 %v1440, %v1951
        %v1997 = vmul.f32 %v1445, %v1956
        %v1998 = vmul.f32 %v1450, %v1961
        %v1999 = vmul.f32 %v1455, %v1966
        %v2000 = vmul.f32 %v1460, %v1971
        %v2001 = vmul.f32 %v1465, %v1976
        %v2002 = vmul.f32 %v1470, %v1981
        %v2003 = vmul.f32 %v1475, %v1986
        %2004 = vmatprep.subr.mxu0 0.0
        %2005 = vmatpush1.msra.mxu0 %v1988
        %2006 = vmatprep.subr.mxu0 0.0
        %2007 = vmatpush1.msra.mxu0 %v1989
        %2008 = vmatprep.subr.mxu0 0.0
        %2009 = vmatpush1.msra.mxu0 %v1990
        %2010 = vmatprep.subr.mxu0 0.0
        %2011 = vmatpush1.msra.mxu0 %v1991
        %2012 = vmatprep.subr.mxu0 0.0
        %2013 = vmatpush1.msra.mxu0 %v1992
        %2014 = vmatprep.subr.mxu0 0.0
        %2015 = vmatpush1.msra.mxu0 %v1993
        %2016 = vmatprep.subr.mxu0 0.0
        %2017 = vmatpush1.msra.mxu0 %v1994
        %2018 = vmatprep.subr.mxu0 0.0
        %2019 = vmatpush1.msra.mxu0 %v1995
        %2020 = vmatprep.subr.mxu0 0.0
        %2021 = vmatpush1.msra.mxu0 %v1996
        %2022 = vmatprep.subr.mxu0 0.0
        %2023 = vmatpush1.msra.mxu0 %v1997
        %2024 = vmatprep.subr.mxu0 0.0
        %2025 = vmatpush1.msra.mxu0 %v1998
        %2026 = vmatprep.subr.mxu0 0.0
        %2027 = vmatpush1.msra.mxu0 %v1999
        %2028 = vmatprep.subr.mxu0 0.0
        %2029 = vmatpush1.msra.mxu0 %v2000
        %2030 = vmatprep.subr.mxu0 0.0
        %2031 = vmatpush1.msra.mxu0 %v2001
        %2032 = vmatprep.subr.mxu0 0.0
        %2033 = vmatpush1.msra.mxu0 %v2002
        %2034 = vmatprep.subr.mxu0 0.0
        %2035 = vmatpush1.msra.mxu0 %v2003
        %2036 = vmatprep.subr.mxu0 0.0
        %2037 = vmatpush1.msra.mxu0 0.0
        %2038 = vmatprep.subr.mxu0 0.0
        %2039 = vmatpush1.msra.mxu0 0.0
        %2040 = vmatprep.subr.mxu0 0.0
        %2041 = vmatpush1.msra.mxu0 0.0
        %2042 = vmatprep.subr.mxu0 0.0
        %2043 = vmatpush1.msra.mxu0 0.0
        %2044 = vmatprep.subr.mxu0 0.0
        %2045 = vmatpush1.msra.mxu0 0.0
        %2046 = vmatprep.subr.mxu0 0.0
        %2047 = vmatpush1.msra.mxu0 0.0
        %2048 = vmatprep.subr.mxu0 0.0
        %2049 = vmatpush1.msra.mxu0 0.0
        %2050 = vmatprep.subr.mxu0 0.0
        %2051 = vmatpush1.msra.mxu0 0.0
        %2052 = vmatprep.subr.mxu0 0.0
        %2053 = vmatpush1.msra.mxu0 0.0
        %2054 = vmatprep.subr.mxu0 0.0
        %2055 = vmatpush1.msra.mxu0 0.0
        %2056 = vmatprep.subr.mxu0 0.0
        %2057 = vmatpush1.msra.mxu0 0.0
        %2058 = vmatprep.subr.mxu0 0.0
        %2059 = vmatpush1.msra.mxu0 0.0
        %2060 = vmatprep.subr.mxu0 0.0
        %2061 = vmatpush1.msra.mxu0 0.0
        %2062 = vmatprep.subr.mxu0 0.0
        %2063 = vmatpush1.msra.mxu0 0.0
        %2064 = vmatprep.subr.mxu0 0.0
        %2065 = vmatpush1.msra.mxu0 0.0
        %2066 = vmatprep.subr.mxu0 0.0
        %2067 = vmatpush1.msra.mxu0 0.0
        %2068 = vmatprep.mubr.f32.mxu0 0.0
        %2069 = vmatmul.mubr.f32.gmra.mrb[0].mxu0 %v1736
        %v2070 = vpop.f32.mrb[0].mxu0
        %v2071 = vadd.f32 0.0, %v2070
        %v2072 = vpop.f32.mrb[0].mxu0
        %2073 = vmatprep.mubr.f32.mxu0 0.0
        %2074 = vmatmul.mubr.f32.gmra.mrb[0].mxu0 %v1737
        %v2075 = vpop.f32.mrb[0].mxu0
        %v2076 = vadd.f32 0.0, %v2075
        %v2077 = vpop.f32.mrb[0].mxu0
        %2078 = vmatprep.mubr.f32.mxu0 0.0
        %2079 = vmatmul.mubr.f32.gmra.mrb[0].mxu0 %v1738
        %v2080 = vpop.f32.mrb[0].mxu0
        %v2081 = vadd.f32 0.0, %v2080
        %v2082 = vpop.f32.mrb[0].mxu0
        %2083 = vmatprep.mubr.f32.mxu0 0.0
        %2084 = vmatmul.mubr.f32.gmra.mrb[0].mxu0 %v1739
        %v2085 = vpop.f32.mrb[0].mxu0
        %v2086 = vadd.f32 0.0, %v2085
        %v2087 = vpop.f32.mrb[0].mxu0
        %2088 = vmatprep.mubr.f32.mxu0 0.0
        %2089 = vmatmul.mubr.f32.gmra.mrb[0].mxu0 %v1740
        %v2090 = vpop.f32.mrb[0].mxu0
        %v2091 = vadd.f32 0.0, %v2090
        %v2092 = vpop.f32.mrb[0].mxu0
        %2093 = vmatprep.mubr.f32.mxu0 0.0
        %2094 = vmatmul.mubr.f32.gmra.mrb[0].mxu0 %v1741
        %v2095 = vpop.f32.mrb[0].mxu0
        %v2096 = vadd.f32 0.0, %v2095
        %v2097 = vpop.f32.mrb[0].mxu0
        %2098 = vmatprep.mubr.f32.mxu0 0.0
        %2099 = vmatmul.mubr.f32.gmra.mrb[0].mxu0 %v1742
        %v2100 = vpop.f32.mrb[0].mxu0
        %v2101 = vadd.f32 0.0, %v2100
        %v2102 = vpop.f32.mrb[0].mxu0
        %2103 = vmatprep.mubr.f32.mxu0 0.0
        %2104 = vmatmul.mubr.f32.gmra.mrb[0].mxu0 %v1743
        %v2105 = vpop.f32.mrb[0].mxu0
        %v2106 = vadd.f32 0.0, %v2105
        %v2107 = vpop.f32.mrb[0].mxu0
        %2108 = vdwg.mxu0
        %v2109 = vadd.f32 %v1900, %v2071
        %v2110 = vadd.f32 %v1901, %v2076
        %v2111 = vadd.f32 %v1902, %v2081
        %v2112 = vadd.f32 %v1903, %v2086
        %v2113 = vadd.f32 %v1904, %v2091
        %v2114 = vadd.f32 %v1905, %v2096
        %v2115 = vadd.f32 %v1906, %v2101
        %v2116 = vadd.f32 %v1907, %v2106
        %2117 = vst [vmem:[#allocation3] sm:$0xff] %v2109
        %2118 = vst [vmem:[#allocation3 + $0x8] sm:$0xff] %v2110
        %2119 = vst [vmem:[#allocation3 + $0x10] sm:$0xff] %v2111
        %2120 = vst [vmem:[#allocation3 + $0x18] sm:$0xff] %v2112
        %2121 = vst [vmem:[#allocation3 + $0x20] sm:$0xff] %v2113
        %2122 = vst [vmem:[#allocation3 + $0x28] sm:$0xff] %v2114
        %2123 = vst [vmem:[#allocation3 + $0x30] sm:$0xff] %v2115
        %2124 = vst [vmem:[#allocation3 + $0x38] sm:$0xff] %v2116
        %vm2125 = vcmask 0
        %2126 = vst.msk [vmem:[#allocation5] sm:$0x1] %vm2125, %v1670
        %p2127 = scmp.eq.s32.totalorder %s32, 2
        // Predicated region
        $region130: #{tpu_custom_call.1} parent=120 // pred_check
          %p2128 = pneg %p2127
        $region131: #{tpu_custom_call.1} parent=120 // pred_check_branch
          %2130 = sbr.rel (%p2128) target = $region133
        $region132: #{tpu_custom_call.1} parent=120 // pred_region
          %v2131 = vld [vmem:[#allocation4] sm:$0xff]
          %v2132 = vld [vmem:[#allocation4 + $0x8] sm:$0xff]
          %v2133 = vld [vmem:[#allocation4 + $0x10] sm:$0xff]
          %v2134 = vld [vmem:[#allocation4 + $0x18] sm:$0xff]
          %v2135 = vld [vmem:[#allocation4 + $0x20] sm:$0xff]
          %v2136 = vld [vmem:[#allocation4 + $0x28] sm:$0xff]
          %v2137 = vld [vmem:[#allocation4 + $0x30] sm:$0xff]
          %v2138 = vld [vmem:[#allocation4 + $0x38] sm:$0xff]
          %v2139 = vadd.f32 %v2131, 1e-16
          %v2140 = vadd.f32 %v2132, 1e-16
          %v2141 = vadd.f32 %v2133, 1e-16
          %v2142 = vadd.f32 %v2134, 1e-16
          %v2143 = vadd.f32 %v2135, 1e-16
          %v2144 = vadd.f32 %v2136, 1e-16
          %v2145 = vadd.f32 %v2137, 1e-16
          %v2146 = vadd.f32 %v2138, 1e-16
          %v2147 = vrcp.pop %v2139
          %v2148 = vrcp.pop %v2140
          %v2149 = vrcp.pop %v2141
          %v2150 = vrcp.pop %v2142
          %v2151 = vrcp.pop %v2143
          %v2152 = vrcp.pop %v2144
          %v2153 = vrcp.pop %v2145
          %v2154 = vrcp.pop %v2146
          %v2155 = vld [vmem:[%s0] sm:$0xff]
          %v2156 = vld [vmem:[%s0 + $0x8] sm:$0xff]
          %v2157 = vld [vmem:[%s0 + $0x10] sm:$0xff]
          %v2158 = vld [vmem:[%s0 + $0x18] sm:$0xff]
          %v2159 = vld [vmem:[%s0 + $0x20] sm:$0xff]
          %v2160 = vld [vmem:[%s0 + $0x28] sm:$0xff]
          %v2161 = vld [vmem:[%s0 + $0x30] sm:$0xff]
          %v2162 = vld [vmem:[%s0 + $0x38] sm:$0xff]
          %v2163 = vld [vmem:[%s11] sm:$0xff]
          %v2164 = vld [vmem:[%s11 + $0x8] sm:$0xff]
          %vm2165 = vcmask 130048
          %v2167 = vsel %vm2165, %v2155, 0
          %v2170 = vsel %vm2165, %v2156, 0
          %v2173 = vsel %vm2165, %v2157, 0
          %v2176 = vsel %vm2165, %v2158, 0
          %v2179 = vsel %vm2165, %v2159, 0
          %v2182 = vsel %vm2165, %v2160, 0
          %v2185 = vsel %vm2165, %v2161, 0
          %v2188 = vsel %vm2165, %v2162, 0
          %2190 = vmatprep.subr.mxu0 0.0
          %2191 = vmatpush1.msra.mxu0 %v2163
          %2192 = vmatprep.subr.mxu0 0.0
          %2193 = vmatpush1.msra.mxu0 %v2164
          %2194 = vmatprep.subr.mxu0 0.0
          %2195 = vmatpush1.msra.mxu0 0.0
          %2196 = vmatprep.subr.mxu0 0.0
          %2197 = vmatpush1.msra.mxu0 0.0
          %2198 = vmatprep.subr.mxu0 0.0
          %2199 = vmatpush1.msra.mxu0 0.0
          %2200 = vmatprep.subr.mxu0 0.0
          %2201 = vmatpush1.msra.mxu0 0.0
          %2202 = vmatprep.subr.mxu0 0.0
          %2203 = vmatpush1.msra.mxu0 0.0
          %2204 = vmatprep.subr.mxu0 0.0
          %2205 = vmatpush1.msra.mxu0 0.0
          %2206 = vmatprep.subr.mxu0 0.0
          %2207 = vmatpush1.msra.mxu0 0.0
          %2208 = vmatprep.subr.mxu0 0.0
          %2209 = vmatpush1.msra.mxu0 0.0
          %2210 = vmatprep.subr.mxu0 0.0
          %2211 = vmatpush1.msra.mxu0 0.0
          %2212 = vmatprep.subr.mxu0 0.0
          %2213 = vmatpush1.msra.mxu0 0.0
          %2214 = vmatprep.subr.mxu0 0.0
          %2215 = vmatpush1.msra.mxu0 0.0
          %2216 = vmatprep.subr.mxu0 0.0
          %2217 = vmatpush1.msra.mxu0 0.0
          %2218 = vmatprep.subr.mxu0 0.0
          %2219 = vmatpush1.msra.mxu0 0.0
          %2220 = vmatprep.subr.mxu0 0.0
          %2221 = vmatpush1.msra.mxu0 0.0
          %2222 = vmatprep.subr.mxu0 0.0
          %2223 = vmatpush1.msra.mxu0 0.0
          %2224 = vmatprep.subr.mxu0 0.0
          %2225 = vmatpush1.msra.mxu0 0.0
          %2226 = vmatprep.subr.mxu0 0.0
          %2227 = vmatpush1.msra.mxu0 0.0
          %2228 = vmatprep.subr.mxu0 0.0
          %2229 = vmatpush1.msra.mxu0 0.0
          %2230 = vmatprep.subr.mxu0 0.0
          %2231 = vmatpush1.msra.mxu0 0.0
          %2232 = vmatprep.subr.mxu0 0.0
          %2233 = vmatpush1.msra.mxu0 0.0
          %2234 = vmatprep.subr.mxu0 0.0
          %2235 = vmatpush1.msra.mxu0 0.0
          %2236 = vmatprep.subr.mxu0 0.0
          %2237 = vmatpush1.msra.mxu0 0.0
          %2238 = vmatprep.subr.mxu0 0.0
          %2239 = vmatpush1.msra.mxu0 0.0
          %2240 = vmatprep.subr.mxu0 0.0
          %2241 = vmatpush1.msra.mxu0 0.0
          %2242 = vmatprep.subr.mxu0 0.0
          %2243 = vmatpush1.msra.mxu0 0.0
          %2244 = vmatprep.subr.mxu0 0.0
          %2245 = vmatpush1.msra.mxu0 0.0
          %2246 = vmatprep.subr.mxu0 0.0
          %2247 = vmatpush1.msra.mxu0 0.0
          %2248 = vmatprep.subr.mxu0 0.0
          %2249 = vmatpush1.msra.mxu0 0.0
          %2250 = vmatprep.subr.mxu0 0.0
          %2251 = vmatpush1.msra.mxu0 0.0
          %2252 = vmatprep.subr.mxu0 0.0
          %2253 = vmatpush1.msra.mxu0 0.0
          %2254 = vmatprep.mubr.f32.mxu0 0.0
          %2255 = vmatmul.mubr.f32.gmra.mrb[0].mxu0 %v2167
          %v2256 = vpop.f32.mrb[0].mxu0
          %v2257 = vadd.f32 0.0, %v2256
          %v2258 = vpop.f32.mrb[0].mxu0
          %2259 = vmatprep.mubr.f32.mxu0 0.0
          %2260 = vmatmul.mubr.f32.gmra.mrb[0].mxu0 %v2170
          %v2261 = vpop.f32.mrb[0].mxu0
          %v2262 = vadd.f32 0.0, %v2261
          %v2263 = vpop.f32.mrb[0].mxu0
          %2264 = vmatprep.mubr.f32.mxu0 0.0
          %2265 = vmatmul.mubr.f32.gmra.mrb[0].mxu0 %v2173
          %v2266 = vpop.f32.mrb[0].mxu0
          %v2267 = vadd.f32 0.0, %v2266
          %v2268 = vpop.f32.mrb[0].mxu0
          %2269 = vmatprep.mubr.f32.mxu0 0.0
          %2270 = vmatmul.mubr.f32.gmra.mrb[0].mxu0 %v2176
          %v2271 = vpop.f32.mrb[0].mxu0
          %v2272 = vadd.f32 0.0, %v2271
          %v2273 = vpop.f32.mrb[0].mxu0
          %2274 = vmatprep.mubr.f32.mxu0 0.0
          %2275 = vmatmul.mubr.f32.gmra.mrb[0].mxu0 %v2179
          %v2276 = vpop.f32.mrb[0].mxu0
          %v2277 = vadd.f32 0.0, %v2276
          %v2278 = vpop.f32.mrb[0].mxu0
          %2279 = vmatprep.mubr.f32.mxu0 0.0
          %2280 = vmatmul.mubr.f32.gmra.mrb[0].mxu0 %v2182
          %v2281 = vpop.f32.mrb[0].mxu0
          %v2282 = vadd.f32 0.0, %v2281
          %v2283 = vpop.f32.mrb[0].mxu0
          %2284 = vmatprep.mubr.f32.mxu0 0.0
          %2285 = vmatmul.mubr.f32.gmra.mrb[0].mxu0 %v2185
          %v2286 = vpop.f32.mrb[0].mxu0
          %v2287 = vadd.f32 0.0, %v2286
          %v2288 = vpop.f32.mrb[0].mxu0
          %2289 = vmatprep.mubr.f32.mxu0 0.0
          %2290 = vmatmul.mubr.f32.gmra.mrb[0].mxu0 %v2188
          %v2291 = vpop.f32.mrb[0].mxu0
          %v2292 = vadd.f32 0.0, %v2291
          %v2293 = vpop.f32.mrb[0].mxu0
          %2294 = vdwg.mxu0
          %v2295 = vld [vmem:[#allocation3] sm:$0xff]
          %v2296 = vld [vmem:[#allocation3 + $0x8] sm:$0xff]
          %v2297 = vld [vmem:[#allocation3 + $0x10] sm:$0xff]
          %v2298 = vld [vmem:[#allocation3 + $0x18] sm:$0xff]
          %v2299 = vld [vmem:[#allocation3 + $0x20] sm:$0xff]
          %v2300 = vld [vmem:[#allocation3 + $0x28] sm:$0xff]
          %v2301 = vld [vmem:[#allocation3 + $0x30] sm:$0xff]
          %v2302 = vld [vmem:[#allocation3 + $0x38] sm:$0xff]
          %2304 = vset.pattern.permute.xlu0 0
          %2305 = vperm.xlu0 %2304, %v2147
          %v2306 = vpop.permute.xlu0 %2305
          %2309 = vset.pattern.permute.xlu0 0
          %2310 = vperm.xlu0 %2309, %v2148
          %v2311 = vpop.permute.xlu0 %2310
          %2314 = vset.pattern.permute.xlu0 0
          %2315 = vperm.xlu0 %2314, %v2149
          %v2316 = vpop.permute.xlu0 %2315
          %2319 = vset.pattern.permute.xlu0 0
          %2320 = vperm.xlu0 %2319, %v2150
          %v2321 = vpop.permute.xlu0 %2320
          %2324 = vset.pattern.permute.xlu0 0
          %2325 = vperm.xlu0 %2324, %v2151
          %v2326 = vpop.permute.xlu0 %2325
          %2329 = vset.pattern.permute.xlu0 0
          %2330 = vperm.xlu0 %2329, %v2152
          %v2331 = vpop.permute.xlu0 %2330
          %2334 = vset.pattern.permute.xlu0 0
          %2335 = vperm.xlu0 %2334, %v2153
          %v2336 = vpop.permute.xlu0 %2335
          %2339 = vset.pattern.permute.xlu0 0
          %2340 = vperm.xlu0 %2339, %v2154
          %v2341 = vpop.permute.xlu0 %2340
          %v2343 = vmul.f32 %v2295, %v2306
          %v2344 = vmul.f32 %v2296, %v2311
          %v2345 = vmul.f32 %v2297, %v2316
          %v2346 = vmul.f32 %v2298, %v2321
          %v2347 = vmul.f32 %v2299, %v2326
          %v2348 = vmul.f32 %v2300, %v2331
          %v2349 = vmul.f32 %v2301, %v2336
          %v2350 = vmul.f32 %v2302, %v2341
          %v2351 = vadd.f32 %v2343, %v2257
          %v2352 = vadd.f32 %v2344, %v2262
          %v2353 = vadd.f32 %v2345, %v2267
          %v2354 = vadd.f32 %v2346, %v2272
          %v2355 = vadd.f32 %v2347, %v2277
          %v2356 = vadd.f32 %v2348, %v2282
          %v2357 = vadd.f32 %v2349, %v2287
          %v2358 = vadd.f32 %v2350, %v2292
          %2359 = vst [vmem:[#allocation7] sm:$0xff] %v2351
          %2360 = vst [vmem:[#allocation7 + $0x8] sm:$0xff] %v2352
          %2361 = vst [vmem:[#allocation7 + $0x10] sm:$0xff] %v2353
          %2362 = vst [vmem:[#allocation7 + $0x18] sm:$0xff] %v2354
          %2363 = vst [vmem:[#allocation7 + $0x20] sm:$0xff] %v2355
          %2364 = vst [vmem:[#allocation7 + $0x28] sm:$0xff] %v2356
          %2365 = vst [vmem:[#allocation7 + $0x30] sm:$0xff] %v2357
          %2366 = vst [vmem:[#allocation7 + $0x38] sm:$0xff] %v2358
          %v2367 = vld [vmem:[%s4] sm:$0xf]
          %v2369 = vsel %vm1284, %v2367, 0
          %2371 = vmatprep.subr.mxu0 0.0
          %2372 = vmatpush1.msra.mxu0 %v2351
          %2373 = vmatprep.subr.mxu0 0.0
          %2374 = vmatpush1.msra.mxu0 %v2352
          %2375 = vmatprep.subr.mxu0 0.0
          %2376 = vmatpush1.msra.mxu0 %v2353
          %2377 = vmatprep.subr.mxu0 0.0
          %2378 = vmatpush1.msra.mxu0 %v2354
          %2379 = vmatprep.subr.mxu0 0.0
          %2380 = vmatpush1.msra.mxu0 %v2355
          %2381 = vmatprep.subr.mxu0 0.0
          %2382 = vmatpush1.msra.mxu0 %v2356
          %2383 = vmatprep.subr.mxu0 0.0
          %2384 = vmatpush1.msra.mxu0 %v2357
          %2385 = vmatprep.subr.mxu0 0.0
          %2386 = vmatpush1.msra.mxu0 %v2358
          %2387 = vmatprep.subr.mxu0 0.0
          %2388 = vmatpush1.msra.mxu0 0.0
          %2389 = vmatprep.subr.mxu0 0.0
          %2390 = vmatpush1.msra.mxu0 0.0
          %2391 = vmatprep.subr.mxu0 0.0
          %2392 = vmatpush1.msra.mxu0 0.0
          %2393 = vmatprep.subr.mxu0 0.0
          %2394 = vmatpush1.msra.mxu0 0.0
          %2395 = vmatprep.subr.mxu0 0.0
          %2396 = vmatpush1.msra.mxu0 0.0
          %2397 = vmatprep.subr.mxu0 0.0
          %2398 = vmatpush1.msra.mxu0 0.0
          %2399 = vmatprep.subr.mxu0 0.0
          %2400 = vmatpush1.msra.mxu0 0.0
          %2401 = vmatprep.subr.mxu0 0.0
          %2402 = vmatpush1.msra.mxu0 0.0
          %2403 = vmatprep.subr.mxu0 0.0
          %2404 = vmatpush1.msra.mxu0 0.0
          %2405 = vmatprep.subr.mxu0 0.0
          %2406 = vmatpush1.msra.mxu0 0.0
          %2407 = vmatprep.subr.mxu0 0.0
          %2408 = vmatpush1.msra.mxu0 0.0
          %2409 = vmatprep.subr.mxu0 0.0
          %2410 = vmatpush1.msra.mxu0 0.0
          %2411 = vmatprep.subr.mxu0 0.0
          %2412 = vmatpush1.msra.mxu0 0.0
          %2413 = vmatprep.subr.mxu0 0.0
          %2414 = vmatpush1.msra.mxu0 0.0
          %2415 = vmatprep.subr.mxu0 0.0
          %2416 = vmatpush1.msra.mxu0 0.0
          %2417 = vmatprep.subr.mxu0 0.0
          %2418 = vmatpush1.msra.mxu0 0.0
          %2419 = vmatprep.subr.mxu0 0.0
          %2420 = vmatpush1.msra.mxu0 0.0
          %2421 = vmatprep.subr.mxu0 0.0
          %2422 = vmatpush1.msra.mxu0 0.0
          %2423 = vmatprep.subr.mxu0 0.0
          %2424 = vmatpush1.msra.mxu0 0.0
          %2425 = vmatprep.subr.mxu0 0.0
          %2426 = vmatpush1.msra.mxu0 0.0
          %2427 = vmatprep.subr.mxu0 0.0
          %2428 = vmatpush1.msra.mxu0 0.0
          %2429 = vmatprep.subr.mxu0 0.0
          %2430 = vmatpush1.msra.mxu0 0.0
          %2431 = vmatprep.subr.mxu0 0.0
          %2432 = vmatpush1.msra.mxu0 0.0
          %2433 = vmatprep.subr.mxu0 0.0
          %2434 = vmatpush1.msra.mxu0 0.0
          %2435 = vmatprep.mubr.f32.mxu0 0.0
          %2436 = vmatmul.mubr.f32.gmra.mrb[0].mxu0 %v2369
          %v2437 = vpop.f32.mrb[0].mxu0
          %v2438 = vadd.f32 0.0, %v2437
          %v2439 = vpop.f32.mrb[0].mxu0
          %2440 = vdwg.mxu0
          %2441 = vst [vmem:[#allocation9] sm:$0xf] %v2438
          %v2442 = vld [vmem:[%s12] sm:$0xff]
          %v2443 = vld [vmem:[%s12 + $0x8] sm:$0xff]
          %v2444 = vld [vmem:[%s12 + $0x10] sm:$0xff]
          %v2445 = vld [vmem:[%s12 + $0x18] sm:$0xff]
          %v2446 = vld [vmem:[%s12 + $0x20] sm:$0xff]
          %v2447 = vld [vmem:[%s12 + $0x28] sm:$0xff]
          %v2448 = vld [vmem:[%s12 + $0x30] sm:$0xff]
          %v2449 = vld [vmem:[%s12 + $0x38] sm:$0xff]
          %v2450 = vld [vmem:[%s12 + $0x40] sm:$0xff]
          %v2451 = vld [vmem:[%s12 + $0x48] sm:$0xff]
          %v2452 = vld [vmem:[%s12 + $0x50] sm:$0xff]
          %v2453 = vld [vmem:[%s12 + $0x58] sm:$0xff]
          %v2454 = vld [vmem:[%s12 + $0x60] sm:$0xff]
          %v2455 = vld [vmem:[%s12 + $0x68] sm:$0xff]
          %v2456 = vld [vmem:[%s12 + $0x70] sm:$0xff]
          %v2457 = vld [vmem:[%s12 + $0x78] sm:$0xff]
          %v2458 = vld [vmem:[%s13] sm:$0x1]
          %v2460 = vlaneseq
          %v2461 = vshrl.u32 %v2460, 7
          %v2462 = vsub.s32 0, %v2461
          %v2463 = vrot.slane %v2458, %v2462
          %2465 = vmatprep.subr.mxu0 0.0
          %2466 = vmatpush1.msra.mxu0 %v2442
          %2467 = vmatprep.subr.mxu0 0.0
          %2468 = vmatpush1.msra.mxu0 %v2443
          %2469 = vmatprep.subr.mxu0 0.0
          %2470 = vmatpush1.msra.mxu0 %v2444
          %2471 = vmatprep.subr.mxu0 0.0
          %2472 = vmatpush1.msra.mxu0 %v2445
          %2473 = vmatprep.subr.mxu0 0.0
          %2474 = vmatpush1.msra.mxu0 %v2446
          %2475 = vmatprep.subr.mxu0 0.0
          %2476 = vmatpush1.msra.mxu0 %v2447
          %2477 = vmatprep.subr.mxu0 0.0
          %2478 = vmatpush1.msra.mxu0 %v2448
          %2479 = vmatprep.subr.mxu0 0.0
          %2480 = vmatpush1.msra.mxu0 %v2449
          %2481 = vmatprep.subr.mxu0 0.0
          %2482 = vmatpush1.msra.mxu0 %v2450
          %2483 = vmatprep.subr.mxu0 0.0
          %2484 = vmatpush1.msra.mxu0 %v2451
          %2485 = vmatprep.subr.mxu0 0.0
          %2486 = vmatpush1.msra.mxu0 %v2452
          %2487 = vmatprep.subr.mxu0 0.0
          %2488 = vmatpush1.msra.mxu0 %v2453
          %2489 = vmatprep.subr.mxu0 0.0
          %2490 = vmatpush1.msra.mxu0 %v2454
          %2491 = vmatprep.subr.mxu0 0.0
          %2492 = vmatpush1.msra.mxu0 %v2455
          %2493 = vmatprep.subr.mxu0 0.0
          %2494 = vmatpush1.msra.mxu0 %v2456
          %2495 = vmatprep.subr.mxu0 0.0
          %2496 = vmatpush1.msra.mxu0 %v2457
          %2497 = vmatprep.subr.mxu0 0.0
          %2498 = vmatpush1.msra.mxu0 0.0
          %2499 = vmatprep.subr.mxu0 0.0
          %2500 = vmatpush1.msra.mxu0 0.0
          %2501 = vmatprep.subr.mxu0 0.0
          %2502 = vmatpush1.msra.mxu0 0.0
          %2503 = vmatprep.subr.mxu0 0.0
          %2504 = vmatpush1.msra.mxu0 0.0
          %2505 = vmatprep.subr.mxu0 0.0
          %2506 = vmatpush1.msra.mxu0 0.0
          %2507 = vmatprep.subr.mxu0 0.0
          %2508 = vmatpush1.msra.mxu0 0.0
          %2509 = vmatprep.subr.mxu0 0.0
          %2510 = vmatpush1.msra.mxu0 0.0
          %2511 = vmatprep.subr.mxu0 0.0
          %2512 = vmatpush1.msra.mxu0 0.0
          %2513 = vmatprep.subr.mxu0 0.0
          %2514 = vmatpush1.msra.mxu0 0.0
          %2515 = vmatprep.subr.mxu0 0.0
          %2516 = vmatpush1.msra.mxu0 0.0
          %2517 = vmatprep.subr.mxu0 0.0
          %2518 = vmatpush1.msra.mxu0 0.0
          %2519 = vmatprep.subr.mxu0 0.0
          %2520 = vmatpush1.msra.mxu0 0.0
          %2521 = vmatprep.subr.mxu0 0.0
          %2522 = vmatpush1.msra.mxu0 0.0
          %2523 = vmatprep.subr.mxu0 0.0
          %2524 = vmatpush1.msra.mxu0 0.0
          %2525 = vmatprep.subr.mxu0 0.0
          %2526 = vmatpush1.msra.mxu0 0.0
          %2527 = vmatprep.subr.mxu0 0.0
          %2528 = vmatpush1.msra.mxu0 0.0
          %2529 = vmatprep.mubr.f32.mxu0 0.0
          %2530 = vmatmul.mubr.f32.gmra.mrb[0].mxu0 %v2438
          %v2531 = vpop.f32.mrb[0].mxu0
          %v2532 = vadd.f32 %v2463, %v2531
          %v2533 = vpop.f32.mrb[0].mxu0
          %2534 = vdwg.mxu0
          %v2535 = vmax.f32 %v2532, 0.0
          %v2536 = vld [vmem:[%s14] sm:$0xff]
          %v2537 = vld [vmem:[%s14 + $0x8] sm:$0xff]
          %v2538 = vld [vmem:[%s14 + $0x10] sm:$0xff]
          %v2539 = vld [vmem:[%s14 + $0x18] sm:$0xff]
          %v2540 = vld [vmem:[%s14 + $0x20] sm:$0xff]
          %v2541 = vld [vmem:[%s14 + $0x28] sm:$0xff]
          %v2542 = vld [vmem:[%s14 + $0x30] sm:$0xff]
          %v2543 = vld [vmem:[%s14 + $0x38] sm:$0xff]
          %v2544 = vld [vmem:[%s14 + $0x40] sm:$0xff]
          %v2545 = vld [vmem:[%s14 + $0x48] sm:$0xff]
          %v2546 = vld [vmem:[%s14 + $0x50] sm:$0xff]
          %v2547 = vld [vmem:[%s14 + $0x58] sm:$0xff]
          %v2548 = vld [vmem:[%s14 + $0x60] sm:$0xff]
          %v2549 = vld [vmem:[%s14 + $0x68] sm:$0xff]
          %v2550 = vld [vmem:[%s14 + $0x70] sm:$0xff]
          %v2551 = vld [vmem:[%s14 + $0x78] sm:$0xff]
          %v2552 = vld [vmem:[%s15] sm:$0x1]
          %v2554 = vlaneseq
          %v2555 = vshrl.u32 %v2554, 7
          %v2556 = vsub.s32 0, %v2555
          %v2557 = vrot.slane %v2552, %v2556
          %2559 = vmatprep.subr.mxu0 0.0
          %2560 = vmatpush1.msra.mxu0 %v2536
          %2561 = vmatprep.subr.mxu0 0.0
          %2562 = vmatpush1.msra.mxu0 %v2537
          %2563 = vmatprep.subr.mxu0 0.0
          %2564 = vmatpush1.msra.mxu0 %v2538
          %2565 = vmatprep.subr.mxu0 0.0
          %2566 = vmatpush1.msra.mxu0 %v2539
          %2567 = vmatprep.subr.mxu0 0.0
          %2568 = vmatpush1.msra.mxu0 %v2540
          %2569 = vmatprep.subr.mxu0 0.0
          %2570 = vmatpush1.msra.mxu0 %v2541
          %2571 = vmatprep.subr.mxu0 0.0
          %2572 = vmatpush1.msra.mxu0 %v2542
          %2573 = vmatprep.subr.mxu0 0.0
          %2574 = vmatpush1.msra.mxu0 %v2543
          %2575 = vmatprep.subr.mxu0 0.0
          %2576 = vmatpush1.msra.mxu0 %v2544
          %2577 = vmatprep.subr.mxu0 0.0
          %2578 = vmatpush1.msra.mxu0 %v2545
          %2579 = vmatprep.subr.mxu0 0.0
          %2580 = vmatpush1.msra.mxu0 %v2546
          %2581 = vmatprep.subr.mxu0 0.0
          %2582 = vmatpush1.msra.mxu0 %v2547
          %2583 = vmatprep.subr.mxu0 0.0
          %2584 = vmatpush1.msra.mxu0 %v2548
          %2585 = vmatprep.subr.mxu0 0.0
          %2586 = vmatpush1.msra.mxu0 %v2549
          %2587 = vmatprep.subr.mxu0 0.0
          %2588 = vmatpush1.msra.mxu0 %v2550
          %2589 = vmatprep.subr.mxu0 0.0
          %2590 = vmatpush1.msra.mxu0 %v2551
          %2591 = vmatprep.subr.mxu0 0.0
          %2592 = vmatpush1.msra.mxu0 0.0
          %2593 = vmatprep.subr.mxu0 0.0
          %2594 = vmatpush1.msra.mxu0 0.0
          %2595 = vmatprep.subr.mxu0 0.0
          %2596 = vmatpush1.msra.mxu0 0.0
          %2597 = vmatprep.subr.mxu0 0.0
          %2598 = vmatpush1.msra.mxu0 0.0
          %2599 = vmatprep.subr.mxu0 0.0
          %2600 = vmatpush1.msra.mxu0 0.0
          %2601 = vmatprep.subr.mxu0 0.0
          %2602 = vmatpush1.msra.mxu0 0.0
          %2603 = vmatprep.subr.mxu0 0.0
          %2604 = vmatpush1.msra.mxu0 0.0
          %2605 = vmatprep.subr.mxu0 0.0
          %2606 = vmatpush1.msra.mxu0 0.0
          %2607 = vmatprep.subr.mxu0 0.0
          %2608 = vmatpush1.msra.mxu0 0.0
          %2609 = vmatprep.subr.mxu0 0.0
          %2610 = vmatpush1.msra.mxu0 0.0
          %2611 = vmatprep.subr.mxu0 0.0
          %2612 = vmatpush1.msra.mxu0 0.0
          %2613 = vmatprep.subr.mxu0 0.0
          %2614 = vmatpush1.msra.mxu0 0.0
          %2615 = vmatprep.subr.mxu0 0.0
          %2616 = vmatpush1.msra.mxu0 0.0
          %2617 = vmatprep.subr.mxu0 0.0
          %2618 = vmatpush1.msra.mxu0 0.0
          %2619 = vmatprep.subr.mxu0 0.0
          %2620 = vmatpush1.msra.mxu0 0.0
          %2621 = vmatprep.subr.mxu0 0.0
          %2622 = vmatpush1.msra.mxu0 0.0
          %2623 = vmatprep.mubr.f32.mxu0 0.0
          %2624 = vmatmul.mubr.f32.gmra.mrb[0].mxu0 %v2535
          %v2625 = vpop.f32.mrb[0].mxu0
          %v2626 = vadd.f32 %v2557, %v2625
          %v2627 = vpop.f32.mrb[0].mxu0
          %2628 = vdwg.mxu0
          %vm2629 = vcmask 27648
          %2630 = vst.msk [vmem:[#allocation11] sm:$0xf] %vm2629, %v2626
        $region133: #{tpu_custom_call.1} parent=120 // pred_fallthru
          _
        // Predicated region
        $region134: #{tpu_custom_call.1} parent=120 // pred_check
          %p2631 = pneg %p396
        $region135: #{tpu_custom_call.1} parent=120 // pred_check_branch
          %2633 = sbr.rel (%p2631) target = $region137
        $region136: #{tpu_custom_call.1} parent=120 // pred_region
          %s2635 = ssub.s32 1024, 1024
          %2636 = vsyncadd [#allocation8], %s2635
          %s2637 = sshll.u32 [#allocation7], 4
          %s2638 = int_to_ptr.vmem [resolvable:$true] %s2637
          %2643 = dma.vmem_to_hbm [thread:$0]  %s2638, 1024, %s16, [#allocation8], 128, 128, 8
        $region137: #{tpu_custom_call.1} parent=120 // pred_fallthru
          _
        // Predicated region
        $region138: #{tpu_custom_call.1} parent=120 // pred_check
          %p2644 = pneg %p417
        $region139: #{tpu_custom_call.1} parent=120 // pred_check_branch
          %2646 = sbr.rel (%p2644) target = $region141
        $region140: #{tpu_custom_call.1} parent=120 // pred_region
          %s2648 = ssub.s32 64, 64
          %2649 = vsyncadd [#allocation10], %s2648
          %s2651 = sshll.u32 [#allocation9], 4
          %s2652 = int_to_ptr.vmem [resolvable:$true] %s2651
          %2654 = dma.vmem_to_hbm [thread:$0]  %s2652, 64, %s17, [#allocation10]
        $region141: #{tpu_custom_call.1} parent=120 // pred_fallthru
          _
        // Predicated region
        $region142: #{tpu_custom_call.1} parent=120 // pred_check
          %p2655 = pneg %p438
        $region143: #{tpu_custom_call.1} parent=120 // pred_check_branch
          %2657 = sbr.rel (%p2655) target = $region145
        $region144: #{tpu_custom_call.1} parent=120 // pred_region
          %s2659 = ssub.s32 64, 64
          %2660 = vsyncadd [#allocation10], %s2659
          %s2662 = sshll.u32 [#allocation11], 4
          %s2663 = int_to_ptr.vmem [resolvable:$true] %s2662
          %2665 = dma.vmem_to_hbm [thread:$0]  %s2663, 64, %s18, [#allocation10]
        $region145: #{tpu_custom_call.1} parent=120 // pred_fallthru
          _
        // Predicated region
        $region146: #{tpu_custom_call.1} parent=120 // pred_check
          %p2666 = pneg %p396
        $region147: #{tpu_custom_call.1} parent=120 // pred_check_branch
          %2668 = sbr.rel (%p2666) target = $region149
        $region148: #{tpu_custom_call.1} parent=120 // pred_region
          %2669 = dma.done [#allocation8], 1024
        $region149: #{tpu_custom_call.1} parent=120 // pred_fallthru
          _
        // Predicated region
        $region150: #{tpu_custom_call.1} parent=120 // pred_check
          %p2670 = pneg %p417
        $region151: #{tpu_custom_call.1} parent=120 // pred_check_branch
          %2672 = sbr.rel (%p2670) target = $region153
        $region152: #{tpu_custom_call.1} parent=120 // pred_region
          %2673 = dma.done [#allocation10], 64
        $region153: #{tpu_custom_call.1} parent=120 // pred_fallthru
          _
        // Predicated region
        $region154: #{tpu_custom_call.1} parent=120 // pred_check
          %p2674 = pneg %p438
        $region155: #{tpu_custom_call.1} parent=120 // pred_check_branch
          %2676 = sbr.rel (%p2674) target = $region157
        $region156: #{tpu_custom_call.1} parent=120 // pred_region
          %2677 = dma.done [#allocation10], 64
        $region157: #{tpu_custom_call.1} parent=120 // pred_fallthru
          _
      $region121: #{tpu_custom_call.1} parent=5 // pred_fallthru
        _
      %p2678 = scmp.le.s32.totalorder 2, %s27
      // Predicated region
      $region158: #{tpu_custom_call.1} parent=5 // pred_check
        %p2679 = pneg %p2678
      $region159: #{tpu_custom_call.1} parent=5 // pred_check_branch
        %2681 = sbr.rel (%p2679) target = $region161
      $region160: #{tpu_custom_call.1} parent=5 // pred_region
        %s2682 = ssub.s32 %s27, 2
      $region161: #{tpu_custom_call.1} parent=5 // pred_fallthru
        _
    $region6: #{tpu_custom_call.1} parent=1 // loop_footer
      %s31 = sadd.s32 1, %s27
    $region7: #{tpu_custom_call.1} parent=1 // loop_footer_branch
      %26 = sbr.rel target = $region3
    $region8: #{tpu_custom_call.1} parent=1 // loop_exit
      _
    %2683 = vsyncpa [#allocation8], 1
    %s2684 = scalar_lea.sflag [#allocation8], 1
    %2685 = vsyncpa %s2684, 1
    %2686 = vsyncpa [#allocation10], 1

</llo_original>
